<compile_context>
chip_gen: v7x
topology: tpu7x:2x2x1
jax: 0.10.0
libtpu: 0.0.40
codegen_flags: <defaults>
</compile_context>

<pallas_src>
import functools

import jax
import jax.numpy as jnp
from jax.experimental import pallas as pl
from jax.experimental.pallas import tpu as pltpu

BN_EPS = 1e-5
CPAD = 128                      # lane-padded channel width for all GEMM outputs
TM_TARGET = 1024                # target rows per M tile (conv layers)
TM_HEAD = 256                   # target rows per M tile (head GEMM)
VMEM_LIMIT = 32 * 1024 * 1024   # safe on v5e/v6e/v7x; tiles use far less


def _round_up(x, m):
    return (x + m - 1) // m * m


def _ceil_div(a, b):
    return -(-a // b)


# ----------------------------- Pallas kernels ------------------------------

def conv_fused_kernel(p_ref, w_ref, g_ref, b_ref, o_ref,
                      s_ref, sq_ref, scale_ref, shift_ref, *, inv_m, eps):
    """Fused conv-GEMM + training-mode double-BatchNorm + ReLU.

    grid = (phase, m_tile); phase 0 accumulates per-channel stats, phase 1
    recomputes the GEMM tile and applies the folded bn(bn(.)) + ReLU epilogue.
    """
    phase = pl.program_id(0)
    tile = pl.program_id(1)

    # bf16 operands, f32 MXU accumulation.  Identical in both phases, so the
    # statistics and their application are exactly consistent.
    y = jnp.dot(p_ref[...], w_ref[...], preferred_element_type=jnp.float32)

    @pl.when(jnp.logical_and(phase == 0, tile == 0))
    def _():
        s_ref[...] = jnp.zeros_like(s_ref)
        sq_ref[...] = jnp.zeros_like(sq_ref)

    @pl.when(phase == 0)
    def _():
        s_ref[...] += jnp.sum(y, axis=0, keepdims=True)
        sq_ref[...] += jnp.sum(y * y, axis=0, keepdims=True)

    # Fold the two training-mode BatchNorms into one affine, once per layer:
    #   bn(bn(y)) = (y - mu) * g^2 * r1 * r2 + beta
    #   r1 = rsqrt(var + eps), r2 = rsqrt(g^2 * var * r1^2 + eps)
    # NOTE: one-pass variance E[y^2] - E[y]^2 in f32 from bf16-rounded GEMM
    # outputs; clamped at 0 to avoid NaN (see correctness notes).
    @pl.when(jnp.logical_and(phase == 1, tile == 0))
    def _():
        mu = s_ref[...] * inv_m
        var = jnp.maximum(sq_ref[...] * inv_m - mu * mu, 0.0)
        g = g_ref[...]
        r1 = jax.lax.rsqrt(var + eps)
        r2 = jax.lax.rsqrt(g * g * var * (r1 * r1) + eps)
        scale = g * g * r1 * r2
        scale_ref[...] = scale
        shift_ref[...] = b_ref[...] - mu * scale

    @pl.when(phase == 1)
    def _():
        o_ref[...] = jnp.maximum(
            y * scale_ref[...] + shift_ref[...], 0.0).astype(o_ref.dtype)


def head_kernel(x_ref, w_ref, b_ref, o_ref):
    o_ref[...] = (
        jnp.dot(x_ref[...], w_ref[...], preferred_element_type=jnp.float32)
        + b_ref[...]
    )


# --------------------------- pallas_call wrappers ---------------------------

def conv_bn_relu(patches, wmat, gamma, beta, m_true, tm, eps=BN_EPS):
    """One fused pallas_call: GEMM + stats (phase 0), double-BN + ReLU (phase 1)."""
    m_pad, k = patches.shape
    cpad = wmat.shape[1]
    n_tiles = m_pad // tm
    kern = functools.partial(conv_fused_kernel, inv_m=1.0 / float(m_true), eps=eps)
    return pl.pallas_call(
        kern,
        out_shape=jax.ShapeDtypeStruct((m_pad, cpad), jnp.bfloat16),
        grid_spec=pltpu.PrefetchScalarGridSpec(
            num_scalar_prefetch=0,
            grid=(2, n_tiles),                        # (phase, M tile)
            in_specs=[pl.BlockSpec((tm, k), lambda p, m: (m, 0)),
                      pl.BlockSpec((k, cpad), lambda p, m: (0, 0)),
                      pl.BlockSpec((1, cpad), lambda p, m: (0, 0)),
                      pl.BlockSpec((1, cpad), lambda p, m: (0, 0))],
            # Phase 0 parks the (never-written) output buffer on block 0 so no
            # garbage is written back; phase 1 writes every block exactly once.
            out_specs=pl.BlockSpec((tm, cpad), lambda p, m: (m * p, 0)),
            scratch_shapes=[pltpu.VMEM((1, cpad), jnp.float32)] * 4),
        compiler_params=pltpu.CompilerParams(
            dimension_semantics=("arbitrary", "arbitrary"),
            vmem_limit_bytes=VMEM_LIMIT),
    )(patches, wmat, gamma, beta)


def head_linear(flat, wmat, bias):
    """M-tiled, pipelined Linear head.  Output stays lane-padded (opad=128)."""
    n, k = flat.shape
    opad = wmat.shape[1]
    n_tiles = max(1, _ceil_div(n, TM_HEAD))
    tm = _round_up(_ceil_div(n, n_tiles), 8)
    m_pad = n_tiles * tm
    if m_pad > n:
        flat = jnp.pad(flat, ((0, m_pad - n), (0, 0)))
    out = pl.pallas_call(
        head_kernel,
        out_shape=jax.ShapeDtypeStruct((m_pad, opad), jnp.float32),
        grid_spec=pltpu.PrefetchScalarGridSpec(
            num_scalar_prefetch=0,
            grid=(n_tiles,),
            in_specs=[pl.BlockSpec((tm, k), lambda m: (m, 0)),
                      pl.BlockSpec((k, opad), lambda m: (0, 0)),
                      pl.BlockSpec((1, opad), lambda m: (0, 0))],
            out_specs=pl.BlockSpec((tm, opad), lambda m: (m, 0))),
        compiler_params=pltpu.CompilerParams(
            dimension_semantics=("parallel",),
            vmem_limit_bytes=VMEM_LIMIT),
    )(flat, wmat, bias)
    return out[:n]


# ------------------------------- JAX glue ----------------------------------

def im2col_nhwc(x, k, stride):
    """x: (N, H, W, C) -> (N*OH*OW, k*k*C), (kh, kw, cin) minor order."""
    n, h, w, c = x.shape
    oh = (h - k) // stride + 1
    ow = (w - k) // stride + 1
    cols = []
    for i in range(k):
        for j in range(k):
            cols.append(x[:, i:i + stride * oh:stride, j:j + stride * ow:stride, :])
    p = jnp.stack(cols, axis=3)                  # (N, OH, OW, k*k, C)
    return p.reshape(n * oh * ow, k * k * c), oh, ow


def conv_block(x_nhwc, wmat, gamma, beta, k, stride):
    """conv (im2col GEMM) + fused double-BN + ReLU. Output has CPAD channels."""
    n = x_nhwc.shape[0]
    patches, oh, ow = im2col_nhwc(x_nhwc, k, stride)        # bf16
    m_true = n * oh * ow

    # M tiling: ~TM_TARGET rows per tile, padded with zero rows (zero rows add
    # nothing to sum/sum_sq, and mean/var divide by the true M).
    n_tiles = max(1, _ceil_div(m_true, TM_TARGET))
    tm = _round_up(_ceil_div(m_true, n_tiles), 16)
    m_pad = n_tiles * tm
    if m_pad > m_true:
        patches = jnp.pad(patches, ((0, m_pad - m_true), (0, 0)))

    # NOTE: conv bias is intentionally NOT applied — training-mode BN's mean
    # subtraction cancels any per-channel constant exactly.
    out = conv_bn_relu(patches, wmat, gamma, beta, m_true, tm)
    return out[:m_true].reshape(n, oh, ow, CPAD)


def _conv_out(s, k, st=2):
    return (s - k) // st + 1


def prepare_params(params, h, w):
    """One-time weight preprocessing (hoisted out of the forward pass)."""
    layer_defs = [("conv1_w", "bn1_g", "bn1_b", 3, 2),
                  ("conv2_w", "bn2_g", "bn2_b", 5, 2),
                  ("conv3_w", "bn3_g", "bn3_b", 3, 2)]
    convs, cfg = [], []
    for wk, gk, bk, k, st in layer_defs:
        w_oihw = params[wk]
        cout, cin = int(w_oihw.shape[0]), int(w_oihw.shape[1])
        # (Cout, Cin, kh, kw) -> (kh*kw*Cin, Cout), zero-padded to CPAD lanes.
        wmat = jnp.transpose(w_oihw, (2, 3, 1, 0)).reshape(k * k * cin, cout)
        wmat = jnp.pad(wmat, ((0, 0), (0, CPAD - cout))).astype(jnp.bfloat16)
        g = jnp.pad(params[gk].reshape(1, cout), ((0, 0), (0, CPAD - cout)),
                    constant_values=1.0).astype(jnp.float32)
        b = jnp.pad(params[bk].reshape(1, cout),
                    ((0, 0), (0, CPAD - cout))).astype(jnp.float32)
        convs.append((wmat, g, b))
        cfg.append((k, st, cin))

    h1, w1 = _conv_out(h, 3), _conv_out(w, 3)
    h2, w2 = _conv_out(h1, 5), _conv_out(w1, 5)
    h3, w3 = _conv_out(h2, 3), _conv_out(w2, 3)
    c3 = int(params["conv3_w"].shape[0])

    # Head weight columns permuted from PyTorch's NCHW-flatten order to the
    # NHWC order of the (channel-padded) layer-3 activation, zero-padded so the
    # layer-3 output feeds the head directly (no activation transpose/slice).
    hw = params["head_w"]                                    # (outputs, c3*h3*w3)
    outputs = int(hw.shape[0])
    opad = _round_up(outputs, 128)
    w4 = jnp.transpose(hw.reshape(outputs, c3, h3, w3), (2, 3, 1, 0))
    w4 = jnp.pad(w4, ((0, 0), (0, 0), (0, CPAD - c3), (0, 0)))
    head_w = jnp.pad(w4.reshape(h3 * w3 * CPAD, outputs),
                     ((0, 0), (0, opad - outputs))).astype(jnp.bfloat16)
    head_b = jnp.pad(params["head_b"].reshape(1, outputs),
                     ((0, 0), (0, opad - outputs))).astype(jnp.float32)

    prep = {"convs": convs, "head_w": head_w, "head_b": head_b}
    return prep, tuple(cfg)


def dqn_forward(prep, x_nchw, *, conv_cfg, n_outputs):
    x = jnp.transpose(x_nchw, (0, 2, 3, 1)).astype(jnp.bfloat16)  # NCHW -> NHWC
    for (wmat, g, b), (k, stride, cin) in zip(prep["convs"], conv_cfg):
        x = conv_block(x[..., :cin], wmat, g, b, k, stride)

    # Flatten the channel-padded NHWC activation directly (head weight is
    # already permuted/padded to match), then slice valid output columns.
    n, h3, w3, _ = x.shape
    flat = x.reshape(n, h3 * w3 * CPAD)                          # bf16
    out = head_linear(flat, prep["head_w"], prep["head_b"])
    return out[:, :n_outputs]


def init_params(h, w, outputs, key):
    h1, w1 = _conv_out(h, 3), _conv_out(w, 3)
    h2, w2 = _conv_out(h1, 5), _conv_out(w1, 5)
    h3, w3 = _conv_out(h2, 3), _conv_out(w2, 3)
    feat = h3 * w3 * 32

    ks = jax.random.split(key, 8)
    f32 = jnp.float32
    # conv biases are kept for module fidelity but never used by the kernels:
    # a bias followed by training-mode BatchNorm is mathematically a no-op.
    return {
        "conv1_w": 0.1 * jax.random.normal(ks[0], (16, 3, 3, 3), f32),
        "conv1_b": 0.1 * jax.random.normal(ks[1], (16,), f32),
        "bn1_g": jnp.ones((16,), f32), "bn1_b": jnp.zeros((16,), f32),
        "conv2_w": 0.05 * jax.random.normal(ks[2], (32, 16, 5, 5), f32),
        "conv2_b": 0.1 * jax.random.normal(ks[3], (32,), f32),
        "bn2_g": jnp.ones((32,), f32), "bn2_b": jnp.zeros((32,), f32),
        "conv3_w": 0.05 * jax.random.normal(ks[4], (32, 32, 3, 3), f32),
        "conv3_b": 0.1 * jax.random.normal(ks[5], (32,), f32),
        "bn3_g": jnp.ones((32,), f32), "bn3_b": jnp.zeros((32,), f32),
        "head_w": 0.05 * jax.random.normal(ks[6], (outputs, feat), f32),
        "head_b": 0.1 * jax.random.normal(ks[7], (outputs,), f32),
    }


if __name__ == "__main__":
    H = W = 32          # smallest spatial size that survives the 3/5/3 conv chain
    OUTPUTS = 4
    N = 2

    key = jax.random.PRNGKey(0)
    kx, kp = jax.random.split(key)
    x = jax.random.normal(kx, (N, 3, H, W), dtype=jnp.float32)   # NCHW input
    params = init_params(H, W, OUTPUTS, kp)

    prep, conv_cfg = prepare_params(params, H, W)    # one-time weight prep
    fwd = jax.jit(functools.partial(dqn_forward, conv_cfg=conv_cfg,
                                    n_outputs=OUTPUTS))
    y = fwd(prep, x)
    y = jax.block_until_ready(y)
    assert y.shape == (N, OUTPUTS), y.shape
    assert bool(jnp.all(jnp.isfinite(y)))
    print("KERNEL_OK")
</pallas_src>

<mosaic_0001>
module attributes {stable_mosaic.version = 11 : i64} {
  func.func @conv_fused_kernel(%arg0: i32, %arg1: i32, %arg2: memref<464x27xbf16, #tpu.memory_space<vmem>>, %arg3: memref<27x128xbf16, #tpu.memory_space<vmem>>, %arg4: memref<1x128xf32, #tpu.memory_space<vmem>>, %arg5: memref<1x128xf32, #tpu.memory_space<vmem>>, %arg6: memref<464x128xbf16, #tpu.memory_space<vmem>>, %arg7: memref<1x128xf32, #tpu.memory_space<vmem>>, %arg8: memref<1x128xf32, #tpu.memory_space<vmem>>, %arg9: memref<1x128xf32, #tpu.memory_space<vmem>>, %arg10: memref<1x128xf32, #tpu.memory_space<vmem>>) attributes {dimension_semantics = [#tpu.dimension_semantics<arbitrary>, #tpu.dimension_semantics<arbitrary>], iteration_bounds = array<i64: 2, 1>, scalar_prefetch = 0 : i64, scratch_operands = 4 : i64, tpu.core_type = #tpu.core_type<tc>, window_params = [{transform_indices = @transform_0, window_bounds = array<i64: 464, 27>}, {pipeline_mode = #tpu.pipeline_mode<synchronous>, transform_indices = @transform_1, window_bounds = array<i64: 27, 128>}, {pipeline_mode = #tpu.pipeline_mode<synchronous>, transform_indices = @transform_2, window_bounds = array<i64: 1, 128>}, {pipeline_mode = #tpu.pipeline_mode<synchronous>, transform_indices = @transform_3, window_bounds = array<i64: 1, 128>}, {transform_indices = @transform_4, window_bounds = array<i64: 464, 128>}]} {
    %c0 = arith.constant 0 : index
    %c0_0 = arith.constant 0 : index
    %0 = vector.load %arg2[%c0, %c0_0] : memref<464x27xbf16, #tpu.memory_space<vmem>>, vector<464x27xbf16>
    %c0_1 = arith.constant 0 : index
    %c0_2 = arith.constant 0 : index
    %1 = vector.load %arg3[%c0_1, %c0_2] : memref<27x128xbf16, #tpu.memory_space<vmem>>, vector<27x128xbf16>
    %cst = arith.constant dense<0.000000e+00> : vector<464x128xf32>
    %2 = tpu.matmul %0, %1, %cst {dimension_numbers = #tpu.dot_dimension_numbers<[1], [0], [0], [1], [0, 0, 1, 1], [], []>} : vector<464x27xbf16>, vector<27x128xbf16>, vector<464x128xf32> -> vector<464x128xf32>
    %c0_i32 = arith.constant 0 : i32
    %3 = arith.cmpi eq, %arg0, %c0_i32 : i32
    %c0_i32_3 = arith.constant 0 : i32
    %4 = arith.cmpi eq, %arg1, %c0_i32_3 : i32
    %5 = arith.andi %3, %4 : i1
    %6 = arith.extui %5 : i1 to i32
    %c0_i32_4 = arith.constant 0 : i32
    %7 = arith.cmpi ne, %6, %c0_i32_4 : i32
    scf.if %7 {
      %cst_11 = arith.constant 0.000000e+00 : f32
      %19 = vector.broadcast %cst_11 : f32 to vector<1x128xf32>
      %c0_12 = arith.constant 0 : index
      %c0_13 = arith.constant 0 : index
      %20 = vector.load %arg7[%c0_12, %c0_13] : memref<1x128xf32, #tpu.memory_space<vmem>>, vector<1x128xf32>
      tpu.vector_store %arg7[%c0_12, %c0_13], %19 {strides = array<i32>} : memref<1x128xf32, #tpu.memory_space<vmem>>, vector<1x128xf32>,
      %cst_14 = arith.constant 0.000000e+00 : f32
      %21 = vector.broadcast %cst_14 : f32 to vector<1x128xf32>
      %c0_15 = arith.constant 0 : index
      %c0_16 = arith.constant 0 : index
      %22 = vector.load %arg8[%c0_15, %c0_16] : memref<1x128xf32, #tpu.memory_space<vmem>>, vector<1x128xf32>
      tpu.vector_store %arg8[%c0_15, %c0_16], %21 {strides = array<i32>} : memref<1x128xf32, #tpu.memory_space<vmem>>, vector<1x128xf32>,
    } else {
    }
    %c0_i32_5 = arith.constant 0 : i32
    %8 = arith.cmpi eq, %arg0, %c0_i32_5 : i32
    %9 = arith.extui %8 : i1 to i32
    %c0_i32_6 = arith.constant 0 : i32
    %10 = arith.cmpi ne, %9, %c0_i32_6 : i32
    scf.if %10 {
      %c0_11 = arith.constant 0 : index
      %c0_12 = arith.constant 0 : index
      %19 = vector.load %arg7[%c0_11, %c0_12] : memref<1x128xf32, #tpu.memory_space<vmem>>, vector<1x128xf32>
      %cst_13 = arith.constant dense<0.000000e+00> : vector<128xf32>
      %20 = vector.multi_reduction <add>, %2, %cst_13 [0] : vector<464x128xf32> to vector<128xf32>
      %21 = vector.shape_cast %20 : vector<128xf32> to vector<1x128xf32>
      %22 = arith.addf %19, %21 : vector<1x128xf32>
      %c0_14 = arith.constant 0 : index
      %c0_15 = arith.constant 0 : index
      %23 = vector.load %arg7[%c0_14, %c0_15] : memref<1x128xf32, #tpu.memory_space<vmem>>, vector<1x128xf32>
      tpu.vector_store %arg7[%c0_14, %c0_15], %22 {strides = array<i32>} : memref<1x128xf32, #tpu.memory_space<vmem>>, vector<1x128xf32>,
      %c0_16 = arith.constant 0 : index
      %c0_17 = arith.constant 0 : index
      %24 = vector.load %arg8[%c0_16, %c0_17] : memref<1x128xf32, #tpu.memory_space<vmem>>, vector<1x128xf32>
      %25 = arith.mulf %2, %2 : vector<464x128xf32>
      %cst_18 = arith.constant dense<0.000000e+00> : vector<128xf32>
      %26 = vector.multi_reduction <add>, %25, %cst_18 [0] : vector<464x128xf32> to vector<128xf32>
      %27 = vector.shape_cast %26 : vector<128xf32> to vector<1x128xf32>
      %28 = arith.addf %24, %27 : vector<1x128xf32>
      %c0_19 = arith.constant 0 : index
      %c0_20 = arith.constant 0 : index
      %29 = vector.load %arg8[%c0_19, %c0_20] : memref<1x128xf32, #tpu.memory_space<vmem>>, vector<1x128xf32>
      tpu.vector_store %arg8[%c0_19, %c0_20], %28 {strides = array<i32>} : memref<1x128xf32, #tpu.memory_space<vmem>>, vector<1x128xf32>,
    } else {
    }
    %c1_i32 = arith.constant 1 : i32
    %11 = arith.cmpi eq, %arg0, %c1_i32 : i32
    %c0_i32_7 = arith.constant 0 : i32
    %12 = arith.cmpi eq, %arg1, %c0_i32_7 : i32
    %13 = arith.andi %11, %12 : i1
    %14 = arith.extui %13 : i1 to i32
    %c0_i32_8 = arith.constant 0 : i32
    %15 = arith.cmpi ne, %14, %c0_i32_8 : i32
    scf.if %15 {
      %c0_11 = arith.constant 0 : index
      %c0_12 = arith.constant 0 : index
      %19 = vector.load %arg7[%c0_11, %c0_12] : memref<1x128xf32, #tpu.memory_space<vmem>>, vector<1x128xf32>
      %cst_13 = arith.constant 0.00222222228 : f32
      %20 = vector.broadcast %cst_13 : f32 to vector<1x128xf32>
      %21 = arith.mulf %19, %20 : vector<1x128xf32>
      %c0_14 = arith.constant 0 : index
      %c0_15 = arith.constant 0 : index
      %22 = vector.load %arg8[%c0_14, %c0_15] : memref<1x128xf32, #tpu.memory_space<vmem>>, vector<1x128xf32>
      %cst_16 = arith.constant 0.00222222228 : f32
      %23 = vector.broadcast %cst_16 : f32 to vector<1x128xf32>
      %24 = arith.mulf %22, %23 : vector<1x128xf32>
      %25 = arith.mulf %21, %21 : vector<1x128xf32>
      %26 = arith.subf %24, %25 : vector<1x128xf32>
      %cst_17 = arith.constant 0.000000e+00 : f32
      %27 = vector.broadcast %cst_17 : f32 to vector<1x128xf32>
      %28 = arith.maximumf %26, %27 : vector<1x128xf32>
      %c0_18 = arith.constant 0 : index
      %c0_19 = arith.constant 0 : index
      %29 = vector.load %arg4[%c0_18, %c0_19] : memref<1x128xf32, #tpu.memory_space<vmem>>, vector<1x128xf32>
      %cst_20 = arith.constant 9.99999974E-6 : f32
      %30 = vector.broadcast %cst_20 : f32 to vector<1x128xf32>
      %31 = arith.addf %28, %30 : vector<1x128xf32>
      %32 = math.rsqrt %31 : vector<1x128xf32>
      %33 = arith.mulf %29, %29 : vector<1x128xf32>
      %34 = arith.mulf %33, %28 : vector<1x128xf32>
      %35 = arith.mulf %32, %32 : vector<1x128xf32>
      %36 = arith.mulf %34, %35 : vector<1x128xf32>
      %cst_21 = arith.constant 9.99999974E-6 : f32
      %37 = vector.broadcast %cst_21 : f32 to vector<1x128xf32>
      %38 = arith.addf %36, %37 : vector<1x128xf32>
      %39 = math.rsqrt %38 : vector<1x128xf32>
      %40 = arith.mulf %29, %29 : vector<1x128xf32>
      %41 = arith.mulf %40, %32 : vector<1x128xf32>
      %42 = arith.mulf %41, %39 : vector<1x128xf32>
      %c0_22 = arith.constant 0 : index
      %c0_23 = arith.constant 0 : index
      %43 = vector.load %arg9[%c0_22, %c0_23] : memref<1x128xf32, #tpu.memory_space<vmem>>, vector<1x128xf32>
      tpu.vector_store %arg9[%c0_22, %c0_23], %42 {strides = array<i32>} : memref<1x128xf32, #tpu.memory_space<vmem>>, vector<1x128xf32>,
      %c0_24 = arith.constant 0 : index
      %c0_25 = arith.constant 0 : index
      %44 = vector.load %arg5[%c0_24, %c0_25] : memref<1x128xf32, #tpu.memory_space<vmem>>, vector<1x128xf32>
      %45 = arith.mulf %21, %42 : vector<1x128xf32>
      %46 = arith.subf %44, %45 : vector<1x128xf32>
      %c0_26 = arith.constant 0 : index
      %c0_27 = arith.constant 0 : index
      %47 = vector.load %arg10[%c0_26, %c0_27] : memref<1x128xf32, #tpu.memory_space<vmem>>, vector<1x128xf32>
      tpu.vector_store %arg10[%c0_26, %c0_27], %46 {strides = array<i32>} : memref<1x128xf32, #tpu.memory_space<vmem>>, vector<1x128xf32>,
    } else {
    }
    %c1_i32_9 = arith.constant 1 : i32
    %16 = arith.cmpi eq, %arg0, %c1_i32_9 : i32
    %17 = arith.extui %16 : i1 to i32
    %c0_i32_10 = arith.constant 0 : i32
    %18 = arith.cmpi ne, %17, %c0_i32_10 : i32
    scf.if %18 {
      %c0_11 = arith.constant 0 : index
      %c0_12 = arith.constant 0 : index
      %19 = vector.load %arg9[%c0_11, %c0_12] : memref<1x128xf32, #tpu.memory_space<vmem>>, vector<1x128xf32>
      %20 = vector.broadcast %19 : vector<1x128xf32> to vector<464x128xf32>
      %21 = arith.mulf %2, %20 : vector<464x128xf32>
      %c0_13 = arith.constant 0 : index
      %c0_14 = arith.constant 0 : index
      %22 = vector.load %arg10[%c0_13, %c0_14] : memref<1x128xf32, #tpu.memory_space<vmem>>, vector<1x128xf32>
      %23 = vector.broadcast %22 : vector<1x128xf32> to vector<464x128xf32>
      %24 = arith.addf %21, %23 : vector<464x128xf32>
      %cst_15 = arith.constant 0.000000e+00 : f32
      %25 = vector.broadcast %cst_15 : f32 to vector<464x128xf32>
      %26 = arith.maximumf %24, %25 : vector<464x128xf32>
      %27 = arith.truncf %26 : vector<464x128xf32> to vector<464x128xbf16>
      %c0_16 = arith.constant 0 : index
      %c0_17 = arith.constant 0 : index
      %28 = vector.load %arg6[%c0_16, %c0_17] : memref<464x128xbf16, #tpu.memory_space<vmem>>, vector<464x128xbf16>
      tpu.vector_store %arg6[%c0_16, %c0_17], %27 {strides = array<i32>} : memref<464x128xbf16, #tpu.memory_space<vmem>>, vector<464x128xbf16>,
    } else {
    }
    return
  }
  func.func @transform_0(%arg0: i32, %arg1: i32) -> (i32, i32) {
    %c0_i32 = arith.constant 0 : i32
    %c0_i32_0 = arith.constant 0 : i32
    return %arg1, %c0_i32 : i32, i32
  }
  func.func @transform_1(%arg0: i32, %arg1: i32) -> (i32, i32) {
    %c0_i32 = arith.constant 0 : i32
    %c0_i32_0 = arith.constant 0 : i32
    %c0_i32_1 = arith.constant 0 : i32
    return %c0_i32, %c0_i32_0 : i32, i32
  }
  func.func @transform_2(%arg0: i32, %arg1: i32) -> (i32, i32) {
    %c0_i32 = arith.constant 0 : i32
    %c0_i32_0 = arith.constant 0 : i32
    %c0_i32_1 = arith.constant 0 : i32
    return %c0_i32, %c0_i32_0 : i32, i32
  }
  func.func @transform_3(%arg0: i32, %arg1: i32) -> (i32, i32) {
    %c0_i32 = arith.constant 0 : i32
    %c0_i32_0 = arith.constant 0 : i32
    %c0_i32_1 = arith.constant 0 : i32
    return %c0_i32, %c0_i32_0 : i32, i32
  }
  func.func @transform_4(%arg0: i32, %arg1: i32) -> (i32, i32) {
    %0 = arith.muli %arg1, %arg0 : i32
    %c0_i32 = arith.constant 0 : i32
    %c0_i32_0 = arith.constant 0 : i32
    return %0, %c0_i32 : i32, i32
  }
}

module attributes {stable_mosaic.version = 11 : i64} {
  func.func @conv_fused_kernel(%arg0: i32, %arg1: i32, %arg2: memref<80x400xbf16, #tpu.memory_space<vmem>>, %arg3: memref<400x128xbf16, #tpu.memory_space<vmem>>, %arg4: memref<1x128xf32, #tpu.memory_space<vmem>>, %arg5: memref<1x128xf32, #tpu.memory_space<vmem>>, %arg6: memref<80x128xbf16, #tpu.memory_space<vmem>>, %arg7: memref<1x128xf32, #tpu.memory_space<vmem>>, %arg8: memref<1x128xf32, #tpu.memory_space<vmem>>, %arg9: memref<1x128xf32, #tpu.memory_space<vmem>>, %arg10: memref<1x128xf32, #tpu.memory_space<vmem>>) attributes {dimension_semantics = [#tpu.dimension_semantics<arbitrary>, #tpu.dimension_semantics<arbitrary>], iteration_bounds = array<i64: 2, 1>, scalar_prefetch = 0 : i64, scratch_operands = 4 : i64, tpu.core_type = #tpu.core_type<tc>, window_params = [{transform_indices = @transform_0, window_bounds = array<i64: 80, 400>}, {pipeline_mode = #tpu.pipeline_mode<synchronous>, transform_indices = @transform_1, window_bounds = array<i64: 400, 128>}, {pipeline_mode = #tpu.pipeline_mode<synchronous>, transform_indices = @transform_2, window_bounds = array<i64: 1, 128>}, {pipeline_mode = #tpu.pipeline_mode<synchronous>, transform_indices = @transform_3, window_bounds = array<i64: 1, 128>}, {transform_indices = @transform_4, window_bounds = array<i64: 80, 128>}]} {
    %c0 = arith.constant 0 : index
    %c0_0 = arith.constant 0 : index
    %0 = vector.load %arg2[%c0, %c0_0] : memref<80x400xbf16, #tpu.memory_space<vmem>>, vector<80x400xbf16>
    %c0_1 = arith.constant 0 : index
    %c0_2 = arith.constant 0 : index
    %1 = vector.load %arg3[%c0_1, %c0_2] : memref<400x128xbf16, #tpu.memory_space<vmem>>, vector<400x128xbf16>
    %cst = arith.constant dense<0.000000e+00> : vector<80x128xf32>
    %2 = tpu.matmul %0, %1, %cst {dimension_numbers = #tpu.dot_dimension_numbers<[1], [0], [0], [1], [0, 0, 1, 1], [], []>} : vector<80x400xbf16>, vector<400x128xbf16>, vector<80x128xf32> -> vector<80x128xf32>
    %c0_i32 = arith.constant 0 : i32
    %3 = arith.cmpi eq, %arg0, %c0_i32 : i32
    %c0_i32_3 = arith.constant 0 : i32
    %4 = arith.cmpi eq, %arg1, %c0_i32_3 : i32
    %5 = arith.andi %3, %4 : i1
    %6 = arith.extui %5 : i1 to i32
    %c0_i32_4 = arith.constant 0 : i32
    %7 = arith.cmpi ne, %6, %c0_i32_4 : i32
    scf.if %7 {
      %cst_11 = arith.constant 0.000000e+00 : f32
      %19 = vector.broadcast %cst_11 : f32 to vector<1x128xf32>
      %c0_12 = arith.constant 0 : index
      %c0_13 = arith.constant 0 : index
      %20 = vector.load %arg7[%c0_12, %c0_13] : memref<1x128xf32, #tpu.memory_space<vmem>>, vector<1x128xf32>
      tpu.vector_store %arg7[%c0_12, %c0_13], %19 {strides = array<i32>} : memref<1x128xf32, #tpu.memory_space<vmem>>, vector<1x128xf32>,
      %cst_14 = arith.constant 0.000000e+00 : f32
      %21 = vector.broadcast %cst_14 : f32 to vector<1x128xf32>
      %c0_15 = arith.constant 0 : index
      %c0_16 = arith.constant 0 : index
      %22 = vector.load %arg8[%c0_15, %c0_16] : memref<1x128xf32, #tpu.memory_space<vmem>>, vector<1x128xf32>
      tpu.vector_store %arg8[%c0_15, %c0_16], %21 {strides = array<i32>} : memref<1x128xf32, #tpu.memory_space<vmem>>, vector<1x128xf32>,
    } else {
    }
    %c0_i32_5 = arith.constant 0 : i32
    %8 = arith.cmpi eq, %arg0, %c0_i32_5 : i32
    %9 = arith.extui %8 : i1 to i32
    %c0_i32_6 = arith.constant 0 : i32
    %10 = arith.cmpi ne, %9, %c0_i32_6 : i32
    scf.if %10 {
      %c0_11 = arith.constant 0 : index
      %c0_12 = arith.constant 0 : index
      %19 = vector.load %arg7[%c0_11, %c0_12] : memref<1x128xf32, #tpu.memory_space<vmem>>, vector<1x128xf32>
      %cst_13 = arith.constant dense<0.000000e+00> : vector<128xf32>
      %20 = vector.multi_reduction <add>, %2, %cst_13 [0] : vector<80x128xf32> to vector<128xf32>
      %21 = vector.shape_cast %20 : vector<128xf32> to vector<1x128xf32>
      %22 = arith.addf %19, %21 : vector<1x128xf32>
      %c0_14 = arith.constant 0 : index
      %c0_15 = arith.constant 0 : index
      %23 = vector.load %arg7[%c0_14, %c0_15] : memref<1x128xf32, #tpu.memory_space<vmem>>, vector<1x128xf32>
      tpu.vector_store %arg7[%c0_14, %c0_15], %22 {strides = array<i32>} : memref<1x128xf32, #tpu.memory_space<vmem>>, vector<1x128xf32>,
      %c0_16 = arith.constant 0 : index
      %c0_17 = arith.constant 0 : index
      %24 = vector.load %arg8[%c0_16, %c0_17] : memref<1x128xf32, #tpu.memory_space<vmem>>, vector<1x128xf32>
      %25 = arith.mulf %2, %2 : vector<80x128xf32>
      %cst_18 = arith.constant dense<0.000000e+00> : vector<128xf32>
      %26 = vector.multi_reduction <add>, %25, %cst_18 [0] : vector<80x128xf32> to vector<128xf32>
      %27 = vector.shape_cast %26 : vector<128xf32> to vector<1x128xf32>
      %28 = arith.addf %24, %27 : vector<1x128xf32>
      %c0_19 = arith.constant 0 : index
      %c0_20 = arith.constant 0 : index
      %29 = vector.load %arg8[%c0_19, %c0_20] : memref<1x128xf32, #tpu.memory_space<vmem>>, vector<1x128xf32>
      tpu.vector_store %arg8[%c0_19, %c0_20], %28 {strides = array<i32>} : memref<1x128xf32, #tpu.memory_space<vmem>>, vector<1x128xf32>,
    } else {
    }
    %c1_i32 = arith.constant 1 : i32
    %11 = arith.cmpi eq, %arg0, %c1_i32 : i32
    %c0_i32_7 = arith.constant 0 : i32
    %12 = arith.cmpi eq, %arg1, %c0_i32_7 : i32
    %13 = arith.andi %11, %12 : i1
    %14 = arith.extui %13 : i1 to i32
    %c0_i32_8 = arith.constant 0 : i32
    %15 = arith.cmpi ne, %14, %c0_i32_8 : i32
    scf.if %15 {
      %c0_11 = arith.constant 0 : index
      %c0_12 = arith.constant 0 : index
      %19 = vector.load %arg7[%c0_11, %c0_12] : memref<1x128xf32, #tpu.memory_space<vmem>>, vector<1x128xf32>
      %cst_13 = arith.constant 0.013888889 : f32
      %20 = vector.broadcast %cst_13 : f32 to vector<1x128xf32>
      %21 = arith.mulf %19, %20 : vector<1x128xf32>
      %c0_14 = arith.constant 0 : index
      %c0_15 = arith.constant 0 : index
      %22 = vector.load %arg8[%c0_14, %c0_15] : memref<1x128xf32, #tpu.memory_space<vmem>>, vector<1x128xf32>
      %cst_16 = arith.constant 0.013888889 : f32
      %23 = vector.broadcast %cst_16 : f32 to vector<1x128xf32>
      %24 = arith.mulf %22, %23 : vector<1x128xf32>
      %25 = arith.mulf %21, %21 : vector<1x128xf32>
      %26 = arith.subf %24, %25 : vector<1x128xf32>
      %cst_17 = arith.constant 0.000000e+00 : f32
      %27 = vector.broadcast %cst_17 : f32 to vector<1x128xf32>
      %28 = arith.maximumf %26, %27 : vector<1x128xf32>
      %c0_18 = arith.constant 0 : index
      %c0_19 = arith.constant 0 : index
      %29 = vector.load %arg4[%c0_18, %c0_19] : memref<1x128xf32, #tpu.memory_space<vmem>>, vector<1x128xf32>
      %cst_20 = arith.constant 9.99999974E-6 : f32
      %30 = vector.broadcast %cst_20 : f32 to vector<1x128xf32>
      %31 = arith.addf %28, %30 : vector<1x128xf32>
      %32 = math.rsqrt %31 : vector<1x128xf32>
      %33 = arith.mulf %29, %29 : vector<1x128xf32>
      %34 = arith.mulf %33, %28 : vector<1x128xf32>
      %35 = arith.mulf %32, %32 : vector<1x128xf32>
      %36 = arith.mulf %34, %35 : vector<1x128xf32>
      %cst_21 = arith.constant 9.99999974E-6 : f32
      %37 = vector.broadcast %cst_21 : f32 to vector<1x128xf32>
      %38 = arith.addf %36, %37 : vector<1x128xf32>
      %39 = math.rsqrt %38 : vector<1x128xf32>
      %40 = arith.mulf %29, %29 : vector<1x128xf32>
      %41 = arith.mulf %40, %32 : vector<1x128xf32>
      %42 = arith.mulf %41, %39 : vector<1x128xf32>
      %c0_22 = arith.constant 0 : index
      %c0_23 = arith.constant 0 : index
      %43 = vector.load %arg9[%c0_22, %c0_23] : memref<1x128xf32, #tpu.memory_space<vmem>>, vector<1x128xf32>
      tpu.vector_store %arg9[%c0_22, %c0_23], %42 {strides = array<i32>} : memref<1x128xf32, #tpu.memory_space<vmem>>, vector<1x128xf32>,
      %c0_24 = arith.constant 0 : index
      %c0_25 = arith.constant 0 : index
      %44 = vector.load %arg5[%c0_24, %c0_25] : memref<1x128xf32, #tpu.memory_space<vmem>>, vector<1x128xf32>
      %45 = arith.mulf %21, %42 : vector<1x128xf32>
      %46 = arith.subf %44, %45 : vector<1x128xf32>
      %c0_26 = arith.constant 0 : index
      %c0_27 = arith.constant 0 : index
      %47 = vector.load %arg10[%c0_26, %c0_27] : memref<1x128xf32, #tpu.memory_space<vmem>>, vector<1x128xf32>
      tpu.vector_store %arg10[%c0_26, %c0_27], %46 {strides = array<i32>} : memref<1x128xf32, #tpu.memory_space<vmem>>, vector<1x128xf32>,
    } else {
    }
    %c1_i32_9 = arith.constant 1 : i32
    %16 = arith.cmpi eq, %arg0, %c1_i32_9 : i32
    %17 = arith.extui %16 : i1 to i32
    %c0_i32_10 = arith.constant 0 : i32
    %18 = arith.cmpi ne, %17, %c0_i32_10 : i32
    scf.if %18 {
      %c0_11 = arith.constant 0 : index
      %c0_12 = arith.constant 0 : index
      %19 = vector.load %arg9[%c0_11, %c0_12] : memref<1x128xf32, #tpu.memory_space<vmem>>, vector<1x128xf32>
      %20 = vector.broadcast %19 : vector<1x128xf32> to vector<80x128xf32>
      %21 = arith.mulf %2, %20 : vector<80x128xf32>
      %c0_13 = arith.constant 0 : index
      %c0_14 = arith.constant 0 : index
      %22 = vector.load %arg10[%c0_13, %c0_14] : memref<1x128xf32, #tpu.memory_space<vmem>>, vector<1x128xf32>
      %23 = vector.broadcast %22 : vector<1x128xf32> to vector<80x128xf32>
      %24 = arith.addf %21, %23 : vector<80x128xf32>
      %cst_15 = arith.constant 0.000000e+00 : f32
      %25 = vector.broadcast %cst_15 : f32 to vector<80x128xf32>
      %26 = arith.maximumf %24, %25 : vector<80x128xf32>
      %27 = arith.truncf %26 : vector<80x128xf32> to vector<80x128xbf16>
      %c0_16 = arith.constant 0 : index
      %c0_17 = arith.constant 0 : index
      %28 = vector.load %arg6[%c0_16, %c0_17] : memref<80x128xbf16, #tpu.memory_space<vmem>>, vector<80x128xbf16>
      tpu.vector_store %arg6[%c0_16, %c0_17], %27 {strides = array<i32>} : memref<80x128xbf16, #tpu.memory_space<vmem>>, vector<80x128xbf16>,
    } else {
    }
    return
  }
  func.func @transform_0(%arg0: i32, %arg1: i32) -> (i32, i32) {
    %c0_i32 = arith.constant 0 : i32
    %c0_i32_0 = arith.constant 0 : i32
    return %arg1, %c0_i32 : i32, i32
  }
  func.func @transform_1(%arg0: i32, %arg1: i32) -> (i32, i32) {
    %c0_i32 = arith.constant 0 : i32
    %c0_i32_0 = arith.constant 0 : i32
    %c0_i32_1 = arith.constant 0 : i32
    return %c0_i32, %c0_i32_0 : i32, i32
  }
  func.func @transform_2(%arg0: i32, %arg1: i32) -> (i32, i32) {
    %c0_i32 = arith.constant 0 : i32
    %c0_i32_0 = arith.constant 0 : i32
    %c0_i32_1 = arith.constant 0 : i32
    return %c0_i32, %c0_i32_0 : i32, i32
  }
  func.func @transform_3(%arg0: i32, %arg1: i32) -> (i32, i32) {
    %c0_i32 = arith.constant 0 : i32
    %c0_i32_0 = arith.constant 0 : i32
    %c0_i32_1 = arith.constant 0 : i32
    return %c0_i32, %c0_i32_0 : i32, i32
  }
  func.func @transform_4(%arg0: i32, %arg1: i32) -> (i32, i32) {
    %0 = arith.muli %arg1, %arg0 : i32
    %c0_i32 = arith.constant 0 : i32
    %c0_i32_0 = arith.constant 0 : i32
    return %0, %c0_i32 : i32, i32
  }
}

module attributes {stable_mosaic.version = 11 : i64} {
  func.func @head_kernel(%arg0: i32, %arg1: memref<8x512xbf16, #tpu.memory_space<vmem>>, %arg2: memref<512x128xbf16, #tpu.memory_space<vmem>>, %arg3: memref<1x128xf32, #tpu.memory_space<vmem>>, %arg4: memref<8x128xf32, #tpu.memory_space<vmem>>) attributes {dimension_semantics = [#tpu.dimension_semantics<parallel>], iteration_bounds = array<i64: 1>, scalar_prefetch = 0 : i64, scratch_operands = 0 : i64, tpu.core_type = #tpu.core_type<tc>, window_params = [{transform_indices = @transform_0, window_bounds = array<i64: 8, 512>}, {pipeline_mode = #tpu.pipeline_mode<synchronous>, transform_indices = @transform_1, window_bounds = array<i64: 512, 128>}, {pipeline_mode = #tpu.pipeline_mode<synchronous>, transform_indices = @transform_2, window_bounds = array<i64: 1, 128>}, {transform_indices = @transform_3, window_bounds = array<i64: 8, 128>}]} {
    %c0 = arith.constant 0 : index
    %c0_0 = arith.constant 0 : index
    %0 = vector.load %arg1[%c0, %c0_0] : memref<8x512xbf16, #tpu.memory_space<vmem>>, vector<8x512xbf16>
    %c0_1 = arith.constant 0 : index
    %c0_2 = arith.constant 0 : index
    %1 = vector.load %arg2[%c0_1, %c0_2] : memref<512x128xbf16, #tpu.memory_space<vmem>>, vector<512x128xbf16>
    %cst = arith.constant dense<0.000000e+00> : vector<8x128xf32>
    %2 = tpu.matmul %0, %1, %cst {dimension_numbers = #tpu.dot_dimension_numbers<[1], [0], [0], [1], [0, 0, 1, 1], [], []>} : vector<8x512xbf16>, vector<512x128xbf16>, vector<8x128xf32> -> vector<8x128xf32>
    %c0_3 = arith.constant 0 : index
    %c0_4 = arith.constant 0 : index
    %3 = vector.load %arg3[%c0_3, %c0_4] : memref<1x128xf32, #tpu.memory_space<vmem>>, vector<1x128xf32>
    %4 = vector.broadcast %3 : vector<1x128xf32> to vector<8x128xf32>
    %5 = arith.addf %2, %4 : vector<8x128xf32>
    %c0_5 = arith.constant 0 : index
    %c0_6 = arith.constant 0 : index
    %6 = vector.load %arg4[%c0_5, %c0_6] : memref<8x128xf32, #tpu.memory_space<vmem>>, vector<8x128xf32>
    tpu.vector_store %arg4[%c0_5, %c0_6], %5 {strides = array<i32>} : memref<8x128xf32, #tpu.memory_space<vmem>>, vector<8x128xf32>,
    return
  }
  func.func @transform_0(%arg0: i32) -> (i32, i32) {
    %c0_i32 = arith.constant 0 : i32
    %c0_i32_0 = arith.constant 0 : i32
    return %arg0, %c0_i32 : i32, i32
  }
  func.func @transform_1(%arg0: i32) -> (i32, i32) {
    %c0_i32 = arith.constant 0 : i32
    %c0_i32_0 = arith.constant 0 : i32
    %c0_i32_1 = arith.constant 0 : i32
    return %c0_i32, %c0_i32_0 : i32, i32
  }
  func.func @transform_2(%arg0: i32) -> (i32, i32) {
    %c0_i32 = arith.constant 0 : i32
    %c0_i32_0 = arith.constant 0 : i32
    %c0_i32_1 = arith.constant 0 : i32
    return %c0_i32, %c0_i32_0 : i32, i32
  }
  func.func @transform_3(%arg0: i32) -> (i32, i32) {
    %c0_i32 = arith.constant 0 : i32
    %c0_i32_0 = arith.constant 0 : i32
    return %arg0, %c0_i32 : i32, i32
  }
}

module attributes {stable_mosaic.version = 11 : i64} {
  func.func @conv_fused_kernel(%arg0: i32, %arg1: i32, %arg2: memref<16x288xbf16, #tpu.memory_space<vmem>>, %arg3: memref<288x128xbf16, #tpu.memory_space<vmem>>, %arg4: memref<1x128xf32, #tpu.memory_space<vmem>>, %arg5: memref<1x128xf32, #tpu.memory_space<vmem>>, %arg6: memref<16x128xbf16, #tpu.memory_space<vmem>>, %arg7: memref<1x128xf32, #tpu.memory_space<vmem>>, %arg8: memref<1x128xf32, #tpu.memory_space<vmem>>, %arg9: memref<1x128xf32, #tpu.memory_space<vmem>>, %arg10: memref<1x128xf32, #tpu.memory_space<vmem>>) attributes {dimension_semantics = [#tpu.dimension_semantics<arbitrary>, #tpu.dimension_semantics<arbitrary>], iteration_bounds = array<i64: 2, 1>, scalar_prefetch = 0 : i64, scratch_operands = 4 : i64, tpu.core_type = #tpu.core_type<tc>, window_params = [{transform_indices = @transform_0, window_bounds = array<i64: 16, 288>}, {pipeline_mode = #tpu.pipeline_mode<synchronous>, transform_indices = @transform_1, window_bounds = array<i64: 288, 128>}, {pipeline_mode = #tpu.pipeline_mode<synchronous>, transform_indices = @transform_2, window_bounds = array<i64: 1, 128>}, {pipeline_mode = #tpu.pipeline_mode<synchronous>, transform_indices = @transform_3, window_bounds = array<i64: 1, 128>}, {transform_indices = @transform_4, window_bounds = array<i64: 16, 128>}]} {
    %c0 = arith.constant 0 : index
    %c0_0 = arith.constant 0 : index
    %0 = vector.load %arg2[%c0, %c0_0] : memref<16x288xbf16, #tpu.memory_space<vmem>>, vector<16x288xbf16>
    %c0_1 = arith.constant 0 : index
    %c0_2 = arith.constant 0 : index
    %1 = vector.load %arg3[%c0_1, %c0_2] : memref<288x128xbf16, #tpu.memory_space<vmem>>, vector<288x128xbf16>
    %cst = arith.constant dense<0.000000e+00> : vector<16x128xf32>
    %2 = tpu.matmul %0, %1, %cst {dimension_numbers = #tpu.dot_dimension_numbers<[1], [0], [0], [1], [0, 0, 1, 1], [], []>} : vector<16x288xbf16>, vector<288x128xbf16>, vector<16x128xf32> -> vector<16x128xf32>
    %c0_i32 = arith.constant 0 : i32
    %3 = arith.cmpi eq, %arg0, %c0_i32 : i32
    %c0_i32_3 = arith.constant 0 : i32
    %4 = arith.cmpi eq, %arg1, %c0_i32_3 : i32
    %5 = arith.andi %3, %4 : i1
    %6 = arith.extui %5 : i1 to i32
    %c0_i32_4 = arith.constant 0 : i32
    %7 = arith.cmpi ne, %6, %c0_i32_4 : i32
    scf.if %7 {
      %cst_11 = arith.constant 0.000000e+00 : f32
      %19 = vector.broadcast %cst_11 : f32 to vector<1x128xf32>
      %c0_12 = arith.constant 0 : index
      %c0_13 = arith.constant 0 : index
      %20 = vector.load %arg7[%c0_12, %c0_13] : memref<1x128xf32, #tpu.memory_space<vmem>>, vector<1x128xf32>
      tpu.vector_store %arg7[%c0_12, %c0_13], %19 {strides = array<i32>} : memref<1x128xf32, #tpu.memory_space<vmem>>, vector<1x128xf32>,
      %cst_14 = arith.constant 0.000000e+00 : f32
      %21 = vector.broadcast %cst_14 : f32 to vector<1x128xf32>
      %c0_15 = arith.constant 0 : index
      %c0_16 = arith.constant 0 : index
      %22 = vector.load %arg8[%c0_15, %c0_16] : memref<1x128xf32, #tpu.memory_space<vmem>>, vector<1x128xf32>
      tpu.vector_store %arg8[%c0_15, %c0_16], %21 {strides = array<i32>} : memref<1x128xf32, #tpu.memory_space<vmem>>, vector<1x128xf32>,
    } else {
    }
    %c0_i32_5 = arith.constant 0 : i32
    %8 = arith.cmpi eq, %arg0, %c0_i32_5 : i32
    %9 = arith.extui %8 : i1 to i32
    %c0_i32_6 = arith.constant 0 : i32
    %10 = arith.cmpi ne, %9, %c0_i32_6 : i32
    scf.if %10 {
      %c0_11 = arith.constant 0 : index
      %c0_12 = arith.constant 0 : index
      %19 = vector.load %arg7[%c0_11, %c0_12] : memref<1x128xf32, #tpu.memory_space<vmem>>, vector<1x128xf32>
      %cst_13 = arith.constant dense<0.000000e+00> : vector<128xf32>
      %20 = vector.multi_reduction <add>, %2, %cst_13 [0] : vector<16x128xf32> to vector<128xf32>
      %21 = vector.shape_cast %20 : vector<128xf32> to vector<1x128xf32>
      %22 = arith.addf %19, %21 : vector<1x128xf32>
      %c0_14 = arith.constant 0 : index
      %c0_15 = arith.constant 0 : index
      %23 = vector.load %arg7[%c0_14, %c0_15] : memref<1x128xf32, #tpu.memory_space<vmem>>, vector<1x128xf32>
      tpu.vector_store %arg7[%c0_14, %c0_15], %22 {strides = array<i32>} : memref<1x128xf32, #tpu.memory_space<vmem>>, vector<1x128xf32>,
      %c0_16 = arith.constant 0 : index
      %c0_17 = arith.constant 0 : index
      %24 = vector.load %arg8[%c0_16, %c0_17] : memref<1x128xf32, #tpu.memory_space<vmem>>, vector<1x128xf32>
      %25 = arith.mulf %2, %2 : vector<16x128xf32>
      %cst_18 = arith.constant dense<0.000000e+00> : vector<128xf32>
      %26 = vector.multi_reduction <add>, %25, %cst_18 [0] : vector<16x128xf32> to vector<128xf32>
      %27 = vector.shape_cast %26 : vector<128xf32> to vector<1x128xf32>
      %28 = arith.addf %24, %27 : vector<1x128xf32>
      %c0_19 = arith.constant 0 : index
      %c0_20 = arith.constant 0 : index
      %29 = vector.load %arg8[%c0_19, %c0_20] : memref<1x128xf32, #tpu.memory_space<vmem>>, vector<1x128xf32>
      tpu.vector_store %arg8[%c0_19, %c0_20], %28 {strides = array<i32>} : memref<1x128xf32, #tpu.memory_space<vmem>>, vector<1x128xf32>,
    } else {
    }
    %c1_i32 = arith.constant 1 : i32
    %11 = arith.cmpi eq, %arg0, %c1_i32 : i32
    %c0_i32_7 = arith.constant 0 : i32
    %12 = arith.cmpi eq, %arg1, %c0_i32_7 : i32
    %13 = arith.andi %11, %12 : i1
    %14 = arith.extui %13 : i1 to i32
    %c0_i32_8 = arith.constant 0 : i32
    %15 = arith.cmpi ne, %14, %c0_i32_8 : i32
    scf.if %15 {
      %c0_11 = arith.constant 0 : index
      %c0_12 = arith.constant 0 : index
      %19 = vector.load %arg7[%c0_11, %c0_12] : memref<1x128xf32, #tpu.memory_space<vmem>>, vector<1x128xf32>
      %cst_13 = arith.constant 1.250000e-01 : f32
      %20 = vector.broadcast %cst_13 : f32 to vector<1x128xf32>
      %21 = arith.mulf %19, %20 : vector<1x128xf32>
      %c0_14 = arith.constant 0 : index
      %c0_15 = arith.constant 0 : index
      %22 = vector.load %arg8[%c0_14, %c0_15] : memref<1x128xf32, #tpu.memory_space<vmem>>, vector<1x128xf32>
      %cst_16 = arith.constant 1.250000e-01 : f32
      %23 = vector.broadcast %cst_16 : f32 to vector<1x128xf32>
      %24 = arith.mulf %22, %23 : vector<1x128xf32>
      %25 = arith.mulf %21, %21 : vector<1x128xf32>
      %26 = arith.subf %24, %25 : vector<1x128xf32>
      %cst_17 = arith.constant 0.000000e+00 : f32
      %27 = vector.broadcast %cst_17 : f32 to vector<1x128xf32>
      %28 = arith.maximumf %26, %27 : vector<1x128xf32>
      %c0_18 = arith.constant 0 : index
      %c0_19 = arith.constant 0 : index
      %29 = vector.load %arg4[%c0_18, %c0_19] : memref<1x128xf32, #tpu.memory_space<vmem>>, vector<1x128xf32>
      %cst_20 = arith.constant 9.99999974E-6 : f32
      %30 = vector.broadcast %cst_20 : f32 to vector<1x128xf32>
      %31 = arith.addf %28, %30 : vector<1x128xf32>
      %32 = math.rsqrt %31 : vector<1x128xf32>
      %33 = arith.mulf %29, %29 : vector<1x128xf32>
      %34 = arith.mulf %33, %28 : vector<1x128xf32>
      %35 = arith.mulf %32, %32 : vector<1x128xf32>
      %36 = arith.mulf %34, %35 : vector<1x128xf32>
      %cst_21 = arith.constant 9.99999974E-6 : f32
      %37 = vector.broadcast %cst_21 : f32 to vector<1x128xf32>
      %38 = arith.addf %36, %37 : vector<1x128xf32>
      %39 = math.rsqrt %38 : vector<1x128xf32>
      %40 = arith.mulf %29, %29 : vector<1x128xf32>
      %41 = arith.mulf %40, %32 : vector<1x128xf32>
      %42 = arith.mulf %41, %39 : vector<1x128xf32>
      %c0_22 = arith.constant 0 : index
      %c0_23 = arith.constant 0 : index
      %43 = vector.load %arg9[%c0_22, %c0_23] : memref<1x128xf32, #tpu.memory_space<vmem>>, vector<1x128xf32>
      tpu.vector_store %arg9[%c0_22, %c0_23], %42 {strides = array<i32>} : memref<1x128xf32, #tpu.memory_space<vmem>>, vector<1x128xf32>,
      %c0_24 = arith.constant 0 : index
      %c0_25 = arith.constant 0 : index
      %44 = vector.load %arg5[%c0_24, %c0_25] : memref<1x128xf32, #tpu.memory_space<vmem>>, vector<1x128xf32>
      %45 = arith.mulf %21, %42 : vector<1x128xf32>
      %46 = arith.subf %44, %45 : vector<1x128xf32>
      %c0_26 = arith.constant 0 : index
      %c0_27 = arith.constant 0 : index
      %47 = vector.load %arg10[%c0_26, %c0_27] : memref<1x128xf32, #tpu.memory_space<vmem>>, vector<1x128xf32>
      tpu.vector_store %arg10[%c0_26, %c0_27], %46 {strides = array<i32>} : memref<1x128xf32, #tpu.memory_space<vmem>>, vector<1x128xf32>,
    } else {
    }
    %c1_i32_9 = arith.constant 1 : i32
    %16 = arith.cmpi eq, %arg0, %c1_i32_9 : i32
    %17 = arith.extui %16 : i1 to i32
    %c0_i32_10 = arith.constant 0 : i32
    %18 = arith.cmpi ne, %17, %c0_i32_10 : i32
    scf.if %18 {
      %c0_11 = arith.constant 0 : index
      %c0_12 = arith.constant 0 : index
      %19 = vector.load %arg9[%c0_11, %c0_12] : memref<1x128xf32, #tpu.memory_space<vmem>>, vector<1x128xf32>
      %20 = vector.broadcast %19 : vector<1x128xf32> to vector<16x128xf32>
      %21 = arith.mulf %2, %20 : vector<16x128xf32>
      %c0_13 = arith.constant 0 : index
      %c0_14 = arith.constant 0 : index
      %22 = vector.load %arg10[%c0_13, %c0_14] : memref<1x128xf32, #tpu.memory_space<vmem>>, vector<1x128xf32>
      %23 = vector.broadcast %22 : vector<1x128xf32> to vector<16x128xf32>
      %24 = arith.addf %21, %23 : vector<16x128xf32>
      %cst_15 = arith.constant 0.000000e+00 : f32
      %25 = vector.broadcast %cst_15 : f32 to vector<16x128xf32>
      %26 = arith.maximumf %24, %25 : vector<16x128xf32>
      %27 = arith.truncf %26 : vector<16x128xf32> to vector<16x128xbf16>
      %c0_16 = arith.constant 0 : index
      %c0_17 = arith.constant 0 : index
      %28 = vector.load %arg6[%c0_16, %c0_17] : memref<16x128xbf16, #tpu.memory_space<vmem>>, vector<16x128xbf16>
      tpu.vector_store %arg6[%c0_16, %c0_17], %27 {strides = array<i32>} : memref<16x128xbf16, #tpu.memory_space<vmem>>, vector<16x128xbf16>,
    } else {
    }
    return
  }
  func.func @transform_0(%arg0: i32, %arg1: i32) -> (i32, i32) {
    %c0_i32 = arith.constant 0 : i32
    %c0_i32_0 = arith.constant 0 : i32
    return %arg1, %c0_i32 : i32, i32
  }
  func.func @transform_1(%arg0: i32, %arg1: i32) -> (i32, i32) {
    %c0_i32 = arith.constant 0 : i32
    %c0_i32_0 = arith.constant 0 : i32
    %c0_i32_1 = arith.constant 0 : i32
    return %c0_i32, %c0_i32_0 : i32, i32
  }
  func.func @transform_2(%arg0: i32, %arg1: i32) -> (i32, i32) {
    %c0_i32 = arith.constant 0 : i32
    %c0_i32_0 = arith.constant 0 : i32
    %c0_i32_1 = arith.constant 0 : i32
    return %c0_i32, %c0_i32_0 : i32, i32
  }
  func.func @transform_3(%arg0: i32, %arg1: i32) -> (i32, i32) {
    %c0_i32 = arith.constant 0 : i32
    %c0_i32_0 = arith.constant 0 : i32
    %c0_i32_1 = arith.constant 0 : i32
    return %c0_i32, %c0_i32_0 : i32, i32
  }
  func.func @transform_4(%arg0: i32, %arg1: i32) -> (i32, i32) {
    %0 = arith.muli %arg1, %arg0 : i32
    %c0_i32 = arith.constant 0 : i32
    %c0_i32_0 = arith.constant 0 : i32
    return %0, %c0_i32 : i32, i32
  }
}

</mosaic_0001>

<llo_original>
// kernel: dqn_forward.4
$region0: #{dqn_forward.4}
  #allocation0 [shape = 'u32[]', space=smem, size = 0x4, offset = 0x4, fixed_abs, tag = 'smem constant byte address 0x4 - core index']
  #allocation1 [shape = 'u32[144,128]{1,0:T(1,128)}', space=vmem, size = 0x12000, scoped, tag = 'internal scratch']
  #allocation2 [shape = 'f32[1,128]{1,0:T(1,128)}', space=vmem, size = 0x200, scoped, tag = 'scratch operand']
  #allocation3 [shape = 'f32[1,128]{1,0:T(1,128)}', space=vmem, size = 0x200, scoped, tag = 'scratch operand']
  #allocation4 [shape = 'f32[1,128]{1,0:T(1,128)}', space=vmem, size = 0x200, scoped, tag = 'scratch operand']
  #allocation5 [shape = 'f32[1,128]{1,0:T(1,128)}', space=vmem, size = 0x200, scoped, tag = 'scratch operand']
  %s0 = inlined_call_operand.vmem [shape: bf16[464,27], index: 0, kind: input, shape index: {}]
  %s1 = inlined_call_operand.vmem [shape: bf16[27,128], index: 1, kind: input, shape index: {}]
  %s2 = inlined_call_operand.vmem [shape: f32[1,128], index: 2, kind: input, shape index: {}]
  %s3 = inlined_call_operand.vmem [shape: f32[1,128], index: 3, kind: input, shape index: {}]
  %s4 = inlined_call_operand.vmem [shape: bf16[464,128], index: 4, kind: output, shape index: {}]
  %s5 = sld [smem:[#allocation0]]
  $region65: #{dqn_forward.4} parent=0
    _
  %s7 = ssub.s32 1, %s5
  %s8 = scalar_select 0, %s7, %s5
  loop: start=0, step=1, limit=4
  $region2: #{dqn_forward.4} parent=0 // loop_pre_header
    _
  $region3: #{dqn_forward.4} parent=0 // loop_header
    %s10 = sphi 0, %s14
    %p11 = scmp.ge.s32.totalorder %s10, 4
    %s17 = sphi 0, %s29
    %s18 = sphi 0, %s25
    %s19 = sphi 0, %s17
    %s20 = sphi 0, %s18
    %s21 = sphi 0, %s19
    %s22 = sphi 0, %s20
    %s32 = sphi 0, %s34
    %s35 = sphi 0, %s32
    %s36 = sphi 0, %s35
    %s52 = sphi 0, %s36
    %s56 = sphi 0, %s56
    %s58 = sphi 0, %s56
    %s59 = sphi 0, %s58
    %s73 = sphi 0, %s59
    %s77 = sphi 0, %s77
    %s79 = sphi 0, %s77
    %s80 = sphi 0, %s79
    %s94 = sphi 0, %s80
    %s98 = sphi 0, %s98
    %s100 = sphi 0, %s98
    %s101 = sphi 0, %s100
    %s115 = sphi 0, %s101
    %s123 = sphi 0, %s125
    %s126 = sphi 0, %s123
    %s127 = sphi 0, %s126
    %s143 = sphi 0, %s127
  $region4: #{dqn_forward.4} parent=0 // loop_header_branch
    %13 = sbr.rel (%p11) target = $region8
  $region5: #{dqn_forward.4} parent=0 // loop_body
    %s15 = ssub.s32 %s10, 1
    %s16 = ssub.s32 %s10, 2
    %s23 = sadd.s32 1, %s18
    %p24 = scmp.ge.s32.totalorder %s23, 1
    %s25 = scalar_select %p24, 0, %s23
    %s26 = sadd.s32 1, %s17
    %s27 = scalar_select %p24, %s26, %s17
    %p28 = scmp.ge.s32.totalorder %s27, 2
    %s29 = scalar_select %p28, 0, %s27
    %s30 = ssub.s32 %s18, %s25
    %p31 = scmp.eq.s32.totalorder %s30, 0
    %s33 = sadd.s32 %s32, 1
    %s34 = scalar_select %p31, %s32, %s33
    %p37 = pneg %p31
    %p38 = scmp.eq.s32.totalorder %s10, 1
    %p39 = por %p37, %p38
    %p40 = scmp.ne.s32.totalorder %s32, %s35
    %p41 = scmp.eq.s32.totalorder %s10, 0
    %p42 = por %p40, %p41
    %p43 = scmp.ne.s32.totalorder %s32, %s35
    %p44 = scmp.eq.s32.totalorder %s15, 1
    %p45 = por %p43, %p44
    %p46 = scmp.ne.s32.totalorder %s35, %s36
    %p47 = scmp.eq.s32.totalorder %s15, 0
    %p48 = por %p46, %p47
    %p49 = scmp.ne.s32.totalorder %s35, %s36
    %p50 = scmp.eq.s32.totalorder %s16, 1
    %p51 = por %p49, %p50
    %p53 = scmp.ne.s32.totalorder %s36, %s52
    %p54 = scmp.eq.s32.totalorder %s16, 0
    %p55 = por %p53, %p54
    %s57 = sadd.s32 %s56, 1
    %p60 = scmp.eq.s32.totalorder %s10, 1
    %p61 = scmp.ne.s32.totalorder %s56, %s58
    %p62 = scmp.eq.s32.totalorder %s10, 0
    %p63 = por %p61, %p62
    %p64 = scmp.ne.s32.totalorder %s56, %s58
    %p65 = scmp.eq.s32.totalorder %s15, 1
    %p66 = por %p64, %p65
    %p67 = scmp.ne.s32.totalorder %s58, %s59
    %p68 = scmp.eq.s32.totalorder %s15, 0
    %p69 = por %p67, %p68
    %p70 = scmp.ne.s32.totalorder %s58, %s59
    %p71 = scmp.eq.s32.totalorder %s16, 1
    %p72 = por %p70, %p71
    %p74 = scmp.ne.s32.totalorder %s59, %s73
    %p75 = scmp.eq.s32.totalorder %s16, 0
    %p76 = por %p74, %p75
    %s78 = sadd.s32 %s77, 1
    %p81 = scmp.eq.s32.totalorder %s10, 1
    %p82 = scmp.ne.s32.totalorder %s77, %s79
    %p83 = scmp.eq.s32.totalorder %s10, 0
    %p84 = por %p82, %p83
    %p85 = scmp.ne.s32.totalorder %s77, %s79
    %p86 = scmp.eq.s32.totalorder %s15, 1
    %p87 = por %p85, %p86
    %p88 = scmp.ne.s32.totalorder %s79, %s80
    %p89 = scmp.eq.s32.totalorder %s15, 0
    %p90 = por %p88, %p89
    %p91 = scmp.ne.s32.totalorder %s79, %s80
    %p92 = scmp.eq.s32.totalorder %s16, 1
    %p93 = por %p91, %p92
    %p95 = scmp.ne.s32.totalorder %s80, %s94
    %p96 = scmp.eq.s32.totalorder %s16, 0
    %p97 = por %p95, %p96
    %s99 = sadd.s32 %s98, 1
    %p102 = scmp.eq.s32.totalorder %s10, 1
    %p103 = scmp.ne.s32.totalorder %s98, %s100
    %p104 = scmp.eq.s32.totalorder %s10, 0
    %p105 = por %p103, %p104
    %p106 = scmp.ne.s32.totalorder %s98, %s100
    %p107 = scmp.eq.s32.totalorder %s15, 1
    %p108 = por %p106, %p107
    %p109 = scmp.ne.s32.totalorder %s100, %s101
    %p110 = scmp.eq.s32.totalorder %s15, 0
    %p111 = por %p109, %p110
    %p112 = scmp.ne.s32.totalorder %s100, %s101
    %p113 = scmp.eq.s32.totalorder %s16, 1
    %p114 = por %p112, %p113
    %p116 = scmp.ne.s32.totalorder %s101, %s115
    %p117 = scmp.eq.s32.totalorder %s16, 0
    %p118 = por %p116, %p117
    %s119 = smul.u32 %s18, %s17
    %s120 = smul.u32 %s25, %s29
    %s121 = ssub.s32 %s119, %s120
    %p122 = scmp.eq.s32.totalorder %s121, 0
    %s124 = sadd.s32 %s123, 1
    %s125 = scalar_select %p122, %s123, %s124
    %p128 = pneg %p122
    %p129 = scmp.eq.s32.totalorder %s10, 1
    %p130 = por %p128, %p129
    %p131 = scmp.ne.s32.totalorder %s123, %s126
    %p132 = scmp.eq.s32.totalorder %s10, 0
    %p133 = por %p131, %p132
    %p134 = scmp.ne.s32.totalorder %s123, %s126
    %p135 = scmp.eq.s32.totalorder %s15, 1
    %p136 = por %p134, %p135
    %p137 = scmp.ne.s32.totalorder %s126, %s127
    %p138 = scmp.eq.s32.totalorder %s15, 0
    %p139 = por %p137, %p138
    %p140 = scmp.ne.s32.totalorder %s126, %s127
    %p141 = scmp.eq.s32.totalorder %s16, 1
    %p142 = por %p140, %p141
    %p144 = scmp.ne.s32.totalorder %s127, %s143
    %p145 = scmp.eq.s32.totalorder %s16, 0
    %p146 = por %p144, %p145
    %p147 = scmp.le.s32.totalorder 1, %s10
    %p148 = scmp.lt.s32.totalorder %s10, 3
    %p149 = pnand %p147, %p148
    %p150 = pneg %p149
    // Predicated region
    $region9: #{dqn_forward.4} parent=5 // pred_check
      _
    $region10: #{dqn_forward.4} parent=5 // pred_check_branch
      %152 = sbr.rel (%p149) target = $region12
    $region11: #{dqn_forward.4} parent=5 // pred_region
      %s153 = ssub.s32 %s10, 1
      // Predicated region
      $region13: #{dqn_forward.4} parent=11 // pred_check
        %p154 = pneg %p48
      $region14: #{dqn_forward.4} parent=11 // pred_check_branch
        %156 = sbr.rel (%p154) target = $region16
      $region15: #{dqn_forward.4} parent=11 // pred_region
        %s157 = smul.u32 58, %s20
        %p158 = scmp.lt.s32.totalorder %s157, 57
        %s159 = scalar_select %p158, %s157, 57
        %s160 = smul.addr %s159, 4
        %s161 = scalar_lea.vmem %s0, %s160
        %s162 = smul.u32 58, %s20
      $region16: #{dqn_forward.4} parent=11 // pred_fallthru
        _
      // Predicated region
      $region17: #{dqn_forward.4} parent=11 // pred_check
        %p163 = pneg %p69
      $region18: #{dqn_forward.4} parent=11 // pred_check_branch
        %165 = sbr.rel (%p163) target = $region20
      $region19: #{dqn_forward.4} parent=11 // pred_region
        _
      $region20: #{dqn_forward.4} parent=11 // pred_fallthru
        _
      // Predicated region
      $region21: #{dqn_forward.4} parent=11 // pred_check
        %p166 = pneg %p90
      $region22: #{dqn_forward.4} parent=11 // pred_check_branch
        %168 = sbr.rel (%p166) target = $region24
      $region23: #{dqn_forward.4} parent=11 // pred_region
        _
      $region24: #{dqn_forward.4} parent=11 // pred_fallthru
        _
      // Predicated region
      $region25: #{dqn_forward.4} parent=11 // pred_check
        %p169 = pneg %p111
      $region26: #{dqn_forward.4} parent=11 // pred_check_branch
        %171 = sbr.rel (%p169) target = $region28
      $region27: #{dqn_forward.4} parent=11 // pred_region
        _
      $region28: #{dqn_forward.4} parent=11 // pred_fallthru
        _
    $region12: #{dqn_forward.4} parent=5 // pred_fallthru
      _
    %p172 = scmp.lt.s32.totalorder %s10, 2
    // Predicated region
    $region29: #{dqn_forward.4} parent=5 // pred_check
      %p173 = pneg %p172
    $region30: #{dqn_forward.4} parent=5 // pred_check_branch
      %175 = sbr.rel (%p173) target = $region32
    $region31: #{dqn_forward.4} parent=5 // pred_region
      _
    $region32: #{dqn_forward.4} parent=5 // pred_fallthru
      _
    %p176 = scmp.le.s32.totalorder 1, %s10
    %p177 = scmp.lt.s32.totalorder %s10, 3
    %p178 = pnand %p176, %p177
    %p179 = pneg %p178
    // Predicated region
    $region33: #{dqn_forward.4} parent=5 // pred_check
      _
    $region34: #{dqn_forward.4} parent=5 // pred_check_branch
      %181 = sbr.rel (%p178) target = $region36
    $region35: #{dqn_forward.4} parent=5 // pred_region
      %s182 = ssub.s32 %s10, 1
      %s183 = smul.u32 58, %s20
      %p184 = scmp.lt.s32.totalorder %s183, 57
      %s185 = scalar_select %p184, %s183, 57
      %s186 = smul.addr %s185, 4
      %s187 = scalar_lea.vmem %s0, %s186
      %p188 = pneg %p48
      %p189 = pneg %p45
      %p190 = pneg %p69
      %p191 = pneg %p66
      %p192 = pneg %p90
      %p193 = pneg %p87
      %p194 = pneg %p111
      %p195 = pneg %p108
      %p196 = pneg %p139
      %p197 = pneg %p136
      %s198 = smul.u32 %s20, %s19
      %s199 = smul.u32 58, %s198
      %p200 = scmp.lt.s32.totalorder %s199, 57
      %s201 = scalar_select %p200, %s199, 57
      %s202 = smul.addr %s201, 4
      %s203 = scalar_lea.vmem %s4, %s202
      %s204 = smul.u32 58, %s20
      %p205 = scmp.lt.s32.totalorder %s204, 57
      %s206 = scalar_select %p205, %s204, 57
      %s207 = smul.addr %s206, 4
      %s208 = scalar_lea.vmem %s0, %s207
      %s209 = smul.u32 58, %s20
      %s210 = smul.u32 %s20, %s19
      %s211 = smul.u32 58, %s210
      %p212 = scmp.lt.s32.totalorder %s211, 57
      %s213 = scalar_select %p212, %s211, 57
      %s214 = smul.addr %s213, 4
      %s215 = scalar_lea.vmem %s4, %s214
      %s216 = smul.u32 %s20, %s19
      %s217 = smul.u32 58, %s216
      %v219 = vld [vmem:[%s208] sm:$0xf]
      %v220 = vld [vmem:[%s208 + $0x4] sm:$0xf]
      %v221 = vld [vmem:[%s208 + $0x8] sm:$0xf]
      %v222 = vld [vmem:[%s208 + $0xc] sm:$0xf]
      %v223 = vld [vmem:[%s208 + $0x10] sm:$0xf]
      %v224 = vld [vmem:[%s208 + $0x14] sm:$0xf]
      %v225 = vld [vmem:[%s208 + $0x18] sm:$0xf]
      %v226 = vld [vmem:[%s208 + $0x1c] sm:$0xf]
      %v227 = vld [vmem:[%s208 + $0x20] sm:$0xf]
      %v228 = vld [vmem:[%s208 + $0x24] sm:$0xf]
      %v229 = vld [vmem:[%s208 + $0x28] sm:$0xf]
      %v230 = vld [vmem:[%s208 + $0x2c] sm:$0xf]
      %v231 = vld [vmem:[%s208 + $0x30] sm:$0xf]
      %v232 = vld [vmem:[%s208 + $0x34] sm:$0xf]
      %v233 = vld [vmem:[%s208 + $0x38] sm:$0xf]
      %v234 = vld [vmem:[%s208 + $0x3c] sm:$0xf]
      %v235 = vld [vmem:[%s208 + $0x40] sm:$0xf]
      %v236 = vld [vmem:[%s208 + $0x44] sm:$0xf]
      %v237 = vld [vmem:[%s208 + $0x48] sm:$0xf]
      %v238 = vld [vmem:[%s208 + $0x4c] sm:$0xf]
      %v239 = vld [vmem:[%s208 + $0x50] sm:$0xf]
      %v240 = vld [vmem:[%s208 + $0x54] sm:$0xf]
      %v241 = vld [vmem:[%s208 + $0x58] sm:$0xf]
      %v242 = vld [vmem:[%s208 + $0x5c] sm:$0xf]
      %v243 = vld [vmem:[%s208 + $0x60] sm:$0xf]
      %v244 = vld [vmem:[%s208 + $0x64] sm:$0xf]
      %v245 = vld [vmem:[%s208 + $0x68] sm:$0xf]
      %v246 = vld [vmem:[%s208 + $0x6c] sm:$0xf]
      %v247 = vld [vmem:[%s208 + $0x70] sm:$0xf]
      %v248 = vld [vmem:[%s208 + $0x74] sm:$0xf]
      %v249 = vld [vmem:[%s208 + $0x78] sm:$0xf]
      %v250 = vld [vmem:[%s208 + $0x7c] sm:$0xf]
      %v251 = vld [vmem:[%s208 + $0x80] sm:$0xf]
      %v252 = vld [vmem:[%s208 + $0x84] sm:$0xf]
      %v253 = vld [vmem:[%s208 + $0x88] sm:$0xf]
      %v254 = vld [vmem:[%s208 + $0x8c] sm:$0xf]
      %v255 = vld [vmem:[%s208 + $0x90] sm:$0xf]
      %v256 = vld [vmem:[%s208 + $0x94] sm:$0xf]
      %v257 = vld [vmem:[%s208 + $0x98] sm:$0xf]
      %v258 = vld [vmem:[%s208 + $0x9c] sm:$0xf]
      %v259 = vld [vmem:[%s208 + $0xa0] sm:$0xf]
      %v260 = vld [vmem:[%s208 + $0xa4] sm:$0xf]
      %v261 = vld [vmem:[%s208 + $0xa8] sm:$0xf]
      %v262 = vld [vmem:[%s208 + $0xac] sm:$0xf]
      %v263 = vld [vmem:[%s208 + $0xb0] sm:$0xf]
      %v264 = vld [vmem:[%s208 + $0xb4] sm:$0xf]
      %v265 = vld [vmem:[%s208 + $0xb8] sm:$0xf]
      %v266 = vld [vmem:[%s208 + $0xbc] sm:$0xf]
      %v267 = vld [vmem:[%s208 + $0xc0] sm:$0xf]
      %v268 = vld [vmem:[%s208 + $0xc4] sm:$0xf]
      %v269 = vld [vmem:[%s208 + $0xc8] sm:$0xf]
      %v270 = vld [vmem:[%s208 + $0xcc] sm:$0xf]
      %v271 = vld [vmem:[%s208 + $0xd0] sm:$0xf]
      %v272 = vld [vmem:[%s208 + $0xd4] sm:$0xf]
      %v273 = vld [vmem:[%s208 + $0xd8] sm:$0xf]
      %v274 = vld [vmem:[%s208 + $0xdc] sm:$0xf]
      %v275 = vld [vmem:[%s208 + $0xe0] sm:$0xf]
      %v276 = vld [vmem:[%s208 + $0xe4] sm:$0xf]
      %v277 = vld [vmem:[%s1] sm:$0xf]
      %v278 = vld [vmem:[%s1 + $0x4] sm:$0xf]
      %v279 = vld [vmem:[%s1 + $0x8] sm:$0xf]
      %v280 = vld [vmem:[%s1 + $0xc] sm:$0x3]
      %v339 = vunpack.c.l.b16 %v219
      %v340 = vunpack.c.l.b16 %v220
      %v341 = vunpack.c.l.b16 %v221
      %v342 = vunpack.c.l.b16 %v222
      %v343 = vunpack.c.l.b16 %v223
      %v344 = vunpack.c.l.b16 %v224
      %v345 = vunpack.c.l.b16 %v225
      %v346 = vunpack.c.l.b16 %v226
      %v347 = vunpack.c.l.b16 %v227
      %v348 = vunpack.c.l.b16 %v228
      %v349 = vunpack.c.l.b16 %v229
      %v350 = vunpack.c.l.b16 %v230
      %v351 = vunpack.c.l.b16 %v231
      %v352 = vunpack.c.l.b16 %v232
      %v353 = vunpack.c.l.b16 %v233
      %v354 = vunpack.c.l.b16 %v234
      %v355 = vunpack.c.l.b16 %v235
      %v356 = vunpack.c.l.b16 %v236
      %v357 = vunpack.c.l.b16 %v237
      %v358 = vunpack.c.l.b16 %v238
      %v359 = vunpack.c.l.b16 %v239
      %v360 = vunpack.c.l.b16 %v240
      %v361 = vunpack.c.l.b16 %v241
      %v362 = vunpack.c.l.b16 %v242
      %v363 = vunpack.c.l.b16 %v243
      %v364 = vunpack.c.l.b16 %v244
      %v365 = vunpack.c.l.b16 %v245
      %v366 = vunpack.c.l.b16 %v246
      %v367 = vunpack.c.l.b16 %v247
      %v368 = vunpack.c.l.b16 %v248
      %v369 = vunpack.c.l.b16 %v249
      %v370 = vunpack.c.l.b16 %v250
      %v371 = vunpack.c.l.b16 %v251
      %v372 = vunpack.c.l.b16 %v252
      %v373 = vunpack.c.l.b16 %v253
      %v374 = vunpack.c.l.b16 %v254
      %v375 = vunpack.c.l.b16 %v255
      %v376 = vunpack.c.l.b16 %v256
      %v377 = vunpack.c.l.b16 %v257
      %v378 = vunpack.c.l.b16 %v258
      %v379 = vunpack.c.l.b16 %v259
      %v380 = vunpack.c.l.b16 %v260
      %v381 = vunpack.c.l.b16 %v261
      %v382 = vunpack.c.l.b16 %v262
      %v383 = vunpack.c.l.b16 %v263
      %v384 = vunpack.c.l.b16 %v264
      %v385 = vunpack.c.l.b16 %v265
      %v386 = vunpack.c.l.b16 %v266
      %v387 = vunpack.c.l.b16 %v267
      %v388 = vunpack.c.l.b16 %v268
      %v389 = vunpack.c.l.b16 %v269
      %v390 = vunpack.c.l.b16 %v270
      %v391 = vunpack.c.l.b16 %v271
      %v392 = vunpack.c.l.b16 %v272
      %v393 = vunpack.c.l.b16 %v273
      %v394 = vunpack.c.l.b16 %v274
      %v395 = vunpack.c.l.b16 %v275
      %v396 = vunpack.c.l.b16 %v276
      %v397 = vpack.c.b16 %v340, %v339
      %v398 = vpack.c.b16 %v342, %v341
      %v399 = vpack.c.b16 %v344, %v343
      %v400 = vpack.c.b16 %v346, %v345
      %v401 = vpack.c.b16 %v348, %v347
      %v402 = vpack.c.b16 %v350, %v349
      %v403 = vpack.c.b16 %v352, %v351
      %v404 = vpack.c.b16 %v354, %v353
      %v405 = vpack.c.b16 %v356, %v355
      %v406 = vpack.c.b16 %v358, %v357
      %v407 = vpack.c.b16 %v360, %v359
      %v408 = vpack.c.b16 %v362, %v361
      %v409 = vpack.c.b16 %v364, %v363
      %v410 = vpack.c.b16 %v366, %v365
      %v411 = vpack.c.b16 %v368, %v367
      %v412 = vpack.c.b16 %v370, %v369
      %v413 = vpack.c.b16 %v372, %v371
      %v414 = vpack.c.b16 %v374, %v373
      %v415 = vpack.c.b16 %v376, %v375
      %v416 = vpack.c.b16 %v378, %v377
      %v417 = vpack.c.b16 %v380, %v379
      %v418 = vpack.c.b16 %v382, %v381
      %v419 = vpack.c.b16 %v384, %v383
      %v420 = vpack.c.b16 %v386, %v385
      %v421 = vpack.c.b16 %v388, %v387
      %v422 = vpack.c.b16 %v390, %v389
      %v423 = vpack.c.b16 %v392, %v391
      %v424 = vpack.c.b16 %v394, %v393
      %v425 = vpack.c.b16 %v396, %v395
      %v430 = vunpack.c.l.b16 %v277
      %v431 = vunpack.c.l.b16 %v278
      %v432 = vunpack.c.l.b16 %v279
      %v433 = vunpack.c.l.b16 %v280
      %v434 = vpack.c.b16 %v431, %v430
      %v435 = vpack.c.b16 %v433, %v432
      %vm437 = vcmask 220160
      %v439 = vsel %vm437, %v397, 0
      %v442 = vsel %vm437, %v398, 0
      %v445 = vsel %vm437, %v399, 0
      %v448 = vsel %vm437, %v400, 0
      %v451 = vsel %vm437, %v401, 0
      %v454 = vsel %vm437, %v402, 0
      %v457 = vsel %vm437, %v403, 0
      %v460 = vsel %vm437, %v404, 0
      %v463 = vsel %vm437, %v405, 0
      %v466 = vsel %vm437, %v406, 0
      %v469 = vsel %vm437, %v407, 0
      %v472 = vsel %vm437, %v408, 0
      %v475 = vsel %vm437, %v409, 0
      %v478 = vsel %vm437, %v410, 0
      %v481 = vsel %vm437, %v411, 0
      %v484 = vsel %vm437, %v412, 0
      %v487 = vsel %vm437, %v413, 0
      %v490 = vsel %vm437, %v414, 0
      %v493 = vsel %vm437, %v415, 0
      %v496 = vsel %vm437, %v416, 0
      %v499 = vsel %vm437, %v417, 0
      %v502 = vsel %vm437, %v418, 0
      %v505 = vsel %vm437, %v419, 0
      %v508 = vsel %vm437, %v420, 0
      %v511 = vsel %vm437, %v421, 0
      %v514 = vsel %vm437, %v422, 0
      %v517 = vsel %vm437, %v423, 0
      %v520 = vsel %vm437, %v424, 0
      %v523 = vsel %vm437, %v425, 0
      %vm525 = vcmask 1044480
      %vm526 = vcmask 1045504
      %v527 = vsel %vm525, 4294967295, 65535
      %v528 = vsel %vm526, %v527, 0
      %v530 = vand.u32 %v435, %v528
      %532 = vmatprep.subr.bf16.mxu0 0
      %533 = vmatpush1.bf16.msra.mxu0 %v434
      %534 = vmatprep.subr.bf16.mxu0 0
      %535 = vmatpush1.bf16.msra.mxu0 %v530
      %536 = vmatprep.subr.bf16.mxu0 0
      %537 = vmatpush1.bf16.msra.mxu0 0
      %538 = vmatprep.subr.bf16.mxu0 0
      %539 = vmatpush1.bf16.msra.mxu0 0
      %540 = vmatprep.subr.bf16.mxu0 0
      %541 = vmatpush1.bf16.msra.mxu0 0
      %542 = vmatprep.subr.bf16.mxu0 0
      %543 = vmatpush1.bf16.msra.mxu0 0
      %544 = vmatprep.subr.bf16.mxu0 0
      %545 = vmatpush1.bf16.msra.mxu0 0
      %546 = vmatprep.subr.bf16.mxu0 0
      %547 = vmatpush1.bf16.msra.mxu0 0
      %548 = vmatprep.subr.bf16.mxu0 0
      %549 = vmatpush1.bf16.msra.mxu0 0
      %550 = vmatprep.subr.bf16.mxu0 0
      %551 = vmatpush1.bf16.msra.mxu0 0
      %552 = vmatprep.subr.bf16.mxu0 0
      %553 = vmatpush1.bf16.msra.mxu0 0
      %554 = vmatprep.subr.bf16.mxu0 0
      %555 = vmatpush1.bf16.msra.mxu0 0
      %556 = vmatprep.subr.bf16.mxu0 0
      %557 = vmatpush1.bf16.msra.mxu0 0
      %558 = vmatprep.subr.bf16.mxu0 0
      %559 = vmatpush1.bf16.msra.mxu0 0
      %560 = vmatprep.subr.bf16.mxu0 0
      %561 = vmatpush1.bf16.msra.mxu0 0
      %562 = vmatprep.subr.bf16.mxu0 0
      %563 = vmatpush1.bf16.msra.mxu0 0
      %564 = vmatprep.mubr.bf16.mxu0 0
      %565 = vmatmul.mubr.bf16.gmra.mrb[0].mxu0 %v439
      %v566 = vpop.f32.mrb[0].mxu0
      %v567 = vadd.f32 0.0, %v566
      %v568 = vpop.f32.mrb[0].mxu0
      %v569 = vpop.f32.mrb[0].mxu0
      %v570 = vadd.f32 0.0, %v569
      %v571 = vpop.f32.mrb[0].mxu0
      %572 = vmatprep.mubr.bf16.mxu0 0
      %573 = vmatmul.mubr.bf16.gmra.mrb[0].mxu0 %v442
      %v574 = vpop.f32.mrb[0].mxu0
      %v575 = vadd.f32 0.0, %v574
      %v576 = vpop.f32.mrb[0].mxu0
      %v577 = vpop.f32.mrb[0].mxu0
      %v578 = vadd.f32 0.0, %v577
      %v579 = vpop.f32.mrb[0].mxu0
      %580 = vmatprep.mubr.bf16.mxu0 0
      %581 = vmatmul.mubr.bf16.gmra.mrb[0].mxu0 %v445
      %v582 = vpop.f32.mrb[0].mxu0
      %v583 = vadd.f32 0.0, %v582
      %v584 = vpop.f32.mrb[0].mxu0
      %v585 = vpop.f32.mrb[0].mxu0
      %v586 = vadd.f32 0.0, %v585
      %v587 = vpop.f32.mrb[0].mxu0
      %588 = vmatprep.mubr.bf16.mxu0 0
      %589 = vmatmul.mubr.bf16.gmra.mrb[0].mxu0 %v448
      %v590 = vpop.f32.mrb[0].mxu0
      %v591 = vadd.f32 0.0, %v590
      %v592 = vpop.f32.mrb[0].mxu0
      %v593 = vpop.f32.mrb[0].mxu0
      %v594 = vadd.f32 0.0, %v593
      %v595 = vpop.f32.mrb[0].mxu0
      %596 = vmatprep.mubr.bf16.mxu0 0
      %597 = vmatmul.mubr.bf16.gmra.mrb[0].mxu0 %v451
      %v598 = vpop.f32.mrb[0].mxu0
      %v599 = vadd.f32 0.0, %v598
      %v600 = vpop.f32.mrb[0].mxu0
      %v601 = vpop.f32.mrb[0].mxu0
      %v602 = vadd.f32 0.0, %v601
      %v603 = vpop.f32.mrb[0].mxu0
      %604 = vmatprep.mubr.bf16.mxu0 0
      %605 = vmatmul.mubr.bf16.gmra.mrb[0].mxu0 %v454
      %v606 = vpop.f32.mrb[0].mxu0
      %v607 = vadd.f32 0.0, %v606
      %v608 = vpop.f32.mrb[0].mxu0
      %v609 = vpop.f32.mrb[0].mxu0
      %v610 = vadd.f32 0.0, %v609
      %v611 = vpop.f32.mrb[0].mxu0
      %612 = vmatprep.mubr.bf16.mxu0 0
      %613 = vmatmul.mubr.bf16.gmra.mrb[0].mxu0 %v457
      %v614 = vpop.f32.mrb[0].mxu0
      %v615 = vadd.f32 0.0, %v614
      %v616 = vpop.f32.mrb[0].mxu0
      %v617 = vpop.f32.mrb[0].mxu0
      %v618 = vadd.f32 0.0, %v617
      %v619 = vpop.f32.mrb[0].mxu0
      %620 = vmatprep.mubr.bf16.mxu0 0
      %621 = vmatmul.mubr.bf16.gmra.mrb[0].mxu0 %v460
      %v622 = vpop.f32.mrb[0].mxu0
      %v623 = vadd.f32 0.0, %v622
      %v624 = vpop.f32.mrb[0].mxu0
      %v625 = vpop.f32.mrb[0].mxu0
      %v626 = vadd.f32 0.0, %v625
      %v627 = vpop.f32.mrb[0].mxu0
      %628 = vmatprep.mubr.bf16.mxu0 0
      %629 = vmatmul.mubr.bf16.gmra.mrb[0].mxu0 %v463
      %v630 = vpop.f32.mrb[0].mxu0
      %v631 = vadd.f32 0.0, %v630
      %v632 = vpop.f32.mrb[0].mxu0
      %v633 = vpop.f32.mrb[0].mxu0
      %v634 = vadd.f32 0.0, %v633
      %v635 = vpop.f32.mrb[0].mxu0
      %636 = vmatprep.mubr.bf16.mxu0 0
      %637 = vmatmul.mubr.bf16.gmra.mrb[0].mxu0 %v466
      %v638 = vpop.f32.mrb[0].mxu0
      %v639 = vadd.f32 0.0, %v638
      %v640 = vpop.f32.mrb[0].mxu0
      %v641 = vpop.f32.mrb[0].mxu0
      %v642 = vadd.f32 0.0, %v641
      %v643 = vpop.f32.mrb[0].mxu0
      %644 = vmatprep.mubr.bf16.mxu0 0
      %645 = vmatmul.mubr.bf16.gmra.mrb[0].mxu0 %v469
      %v646 = vpop.f32.mrb[0].mxu0
      %v647 = vadd.f32 0.0, %v646
      %v648 = vpop.f32.mrb[0].mxu0
      %v649 = vpop.f32.mrb[0].mxu0
      %v650 = vadd.f32 0.0, %v649
      %v651 = vpop.f32.mrb[0].mxu0
      %652 = vmatprep.mubr.bf16.mxu0 0
      %653 = vmatmul.mubr.bf16.gmra.mrb[0].mxu0 %v472
      %v654 = vpop.f32.mrb[0].mxu0
      %v655 = vadd.f32 0.0, %v654
      %v656 = vpop.f32.mrb[0].mxu0
      %v657 = vpop.f32.mrb[0].mxu0
      %v658 = vadd.f32 0.0, %v657
      %v659 = vpop.f32.mrb[0].mxu0
      %660 = vmatprep.mubr.bf16.mxu0 0
      %661 = vmatmul.mubr.bf16.gmra.mrb[0].mxu0 %v475
      %v662 = vpop.f32.mrb[0].mxu0
      %v663 = vadd.f32 0.0, %v662
      %v664 = vpop.f32.mrb[0].mxu0
      %v665 = vpop.f32.mrb[0].mxu0
      %v666 = vadd.f32 0.0, %v665
      %v667 = vpop.f32.mrb[0].mxu0
      %668 = vmatprep.mubr.bf16.mxu0 0
      %669 = vmatmul.mubr.bf16.gmra.mrb[0].mxu0 %v478
      %v670 = vpop.f32.mrb[0].mxu0
      %v671 = vadd.f32 0.0, %v670
      %v672 = vpop.f32.mrb[0].mxu0
      %v673 = vpop.f32.mrb[0].mxu0
      %v674 = vadd.f32 0.0, %v673
      %v675 = vpop.f32.mrb[0].mxu0
      %676 = vmatprep.mubr.bf16.mxu0 0
      %677 = vmatmul.mubr.bf16.gmra.mrb[0].mxu0 %v481
      %v678 = vpop.f32.mrb[0].mxu0
      %v679 = vadd.f32 0.0, %v678
      %v680 = vpop.f32.mrb[0].mxu0
      %v681 = vpop.f32.mrb[0].mxu0
      %v682 = vadd.f32 0.0, %v681
      %v683 = vpop.f32.mrb[0].mxu0
      %684 = vmatprep.mubr.bf16.mxu0 0
      %685 = vmatmul.mubr.bf16.gmra.mrb[0].mxu0 %v484
      %v686 = vpop.f32.mrb[0].mxu0
      %v687 = vadd.f32 0.0, %v686
      %v688 = vpop.f32.mrb[0].mxu0
      %v689 = vpop.f32.mrb[0].mxu0
      %v690 = vadd.f32 0.0, %v689
      %v691 = vpop.f32.mrb[0].mxu0
      %692 = vmatprep.mubr.bf16.mxu0 0
      %693 = vmatmul.mubr.bf16.gmra.mrb[0].mxu0 %v487
      %v694 = vpop.f32.mrb[0].mxu0
      %v695 = vadd.f32 0.0, %v694
      %v696 = vpop.f32.mrb[0].mxu0
      %v697 = vpop.f32.mrb[0].mxu0
      %v698 = vadd.f32 0.0, %v697
      %v699 = vpop.f32.mrb[0].mxu0
      %700 = vmatprep.mubr.bf16.mxu0 0
      %701 = vmatmul.mubr.bf16.gmra.mrb[0].mxu0 %v490
      %v702 = vpop.f32.mrb[0].mxu0
      %v703 = vadd.f32 0.0, %v702
      %v704 = vpop.f32.mrb[0].mxu0
      %v705 = vpop.f32.mrb[0].mxu0
      %v706 = vadd.f32 0.0, %v705
      %v707 = vpop.f32.mrb[0].mxu0
      %708 = vmatprep.mubr.bf16.mxu0 0
      %709 = vmatmul.mubr.bf16.gmra.mrb[0].mxu0 %v493
      %v710 = vpop.f32.mrb[0].mxu0
      %v711 = vadd.f32 0.0, %v710
      %v712 = vpop.f32.mrb[0].mxu0
      %v713 = vpop.f32.mrb[0].mxu0
      %v714 = vadd.f32 0.0, %v713
      %v715 = vpop.f32.mrb[0].mxu0
      %716 = vmatprep.mubr.bf16.mxu0 0
      %717 = vmatmul.mubr.bf16.gmra.mrb[0].mxu0 %v496
      %v718 = vpop.f32.mrb[0].mxu0
      %v719 = vadd.f32 0.0, %v718
      %v720 = vpop.f32.mrb[0].mxu0
      %v721 = vpop.f32.mrb[0].mxu0
      %v722 = vadd.f32 0.0, %v721
      %v723 = vpop.f32.mrb[0].mxu0
      %724 = vmatprep.mubr.bf16.mxu0 0
      %725 = vmatmul.mubr.bf16.gmra.mrb[0].mxu0 %v499
      %v726 = vpop.f32.mrb[0].mxu0
      %v727 = vadd.f32 0.0, %v726
      %v728 = vpop.f32.mrb[0].mxu0
      %v729 = vpop.f32.mrb[0].mxu0
      %v730 = vadd.f32 0.0, %v729
      %v731 = vpop.f32.mrb[0].mxu0
      %732 = vmatprep.mubr.bf16.mxu0 0
      %733 = vmatmul.mubr.bf16.gmra.mrb[0].mxu0 %v502
      %v734 = vpop.f32.mrb[0].mxu0
      %v735 = vadd.f32 0.0, %v734
      %v736 = vpop.f32.mrb[0].mxu0
      %v737 = vpop.f32.mrb[0].mxu0
      %v738 = vadd.f32 0.0, %v737
      %v739 = vpop.f32.mrb[0].mxu0
      %740 = vmatprep.mubr.bf16.mxu0 0
      %741 = vmatmul.mubr.bf16.gmra.mrb[0].mxu0 %v505
      %v742 = vpop.f32.mrb[0].mxu0
      %v743 = vadd.f32 0.0, %v742
      %v744 = vpop.f32.mrb[0].mxu0
      %v745 = vpop.f32.mrb[0].mxu0
      %v746 = vadd.f32 0.0, %v745
      %v747 = vpop.f32.mrb[0].mxu0
      %748 = vmatprep.mubr.bf16.mxu0 0
      %749 = vmatmul.mubr.bf16.gmra.mrb[0].mxu0 %v508
      %v750 = vpop.f32.mrb[0].mxu0
      %v751 = vadd.f32 0.0, %v750
      %v752 = vpop.f32.mrb[0].mxu0
      %v753 = vpop.f32.mrb[0].mxu0
      %v754 = vadd.f32 0.0, %v753
      %v755 = vpop.f32.mrb[0].mxu0
      %756 = vmatprep.mubr.bf16.mxu0 0
      %757 = vmatmul.mubr.bf16.gmra.mrb[0].mxu0 %v511
      %v758 = vpop.f32.mrb[0].mxu0
      %v759 = vadd.f32 0.0, %v758
      %v760 = vpop.f32.mrb[0].mxu0
      %v761 = vpop.f32.mrb[0].mxu0
      %v762 = vadd.f32 0.0, %v761
      %v763 = vpop.f32.mrb[0].mxu0
      %764 = vmatprep.mubr.bf16.mxu0 0
      %765 = vmatmul.mubr.bf16.gmra.mrb[0].mxu0 %v514
      %v766 = vpop.f32.mrb[0].mxu0
      %v767 = vadd.f32 0.0, %v766
      %v768 = vpop.f32.mrb[0].mxu0
      %v769 = vpop.f32.mrb[0].mxu0
      %v770 = vadd.f32 0.0, %v769
      %v771 = vpop.f32.mrb[0].mxu0
      %772 = vmatprep.mubr.bf16.mxu0 0
      %773 = vmatmul.mubr.bf16.gmra.mrb[0].mxu0 %v517
      %v774 = vpop.f32.mrb[0].mxu0
      %v775 = vadd.f32 0.0, %v774
      %v776 = vpop.f32.mrb[0].mxu0
      %v777 = vpop.f32.mrb[0].mxu0
      %v778 = vadd.f32 0.0, %v777
      %v779 = vpop.f32.mrb[0].mxu0
      %780 = vmatprep.mubr.bf16.mxu0 0
      %781 = vmatmul.mubr.bf16.gmra.mrb[0].mxu0 %v520
      %v782 = vpop.f32.mrb[0].mxu0
      %v783 = vadd.f32 0.0, %v782
      %v784 = vpop.f32.mrb[0].mxu0
      %v785 = vpop.f32.mrb[0].mxu0
      %v786 = vadd.f32 0.0, %v785
      %v787 = vpop.f32.mrb[0].mxu0
      %788 = vmatprep.mubr.bf16.mxu0 0
      %789 = vmatmul.mubr.bf16.gmra.mrb[0].mxu0 %v523
      %v790 = vpop.f32.mrb[0].mxu0
      %v791 = vadd.f32 0.0, %v790
      %v792 = vpop.f32.mrb[0].mxu0
      %v793 = vpop.f32.mrb[0].mxu0
      %v794 = vadd.f32 0.0, %v793
      %v795 = vpop.f32.mrb[0].mxu0
      %796 = vdwg.mxu0
      %p797 = scmp.eq.s32.totalorder %s19, 0
      %p798 = scmp.eq.s32.totalorder %s20, 0
      %p799 = pnand %p797, %p798
      %p800 = pneg %p799
      // Predicated region
      $region37: #{dqn_forward.4} parent=35 // pred_check
        _
      $region38: #{dqn_forward.4} parent=35 // pred_check_branch
        %802 = sbr.rel (%p799) target = $region40
      $region39: #{dqn_forward.4} parent=35 // pred_region
        %803 = vst [vmem:[#allocation2] sm:$0x1] 0.0
        %804 = vst [vmem:[#allocation3] sm:$0x1] 0.0
      $region40: #{dqn_forward.4} parent=35 // pred_fallthru
        _
      // Predicated region
      $region41: #{dqn_forward.4} parent=35 // pred_check
        %p805 = pneg %p797
      $region42: #{dqn_forward.4} parent=35 // pred_check_branch
        %807 = sbr.rel (%p805) target = $region44
      $region43: #{dqn_forward.4} parent=35 // pred_region
        %v808 = vld [vmem:[#allocation2] sm:$0x1]
        %v809 = vadd.f32 %v567, %v570
        %v810 = vadd.f32 %v809, %v575
        %v811 = vadd.f32 %v810, %v578
        %v812 = vadd.f32 %v811, %v583
        %v813 = vadd.f32 %v812, %v586
        %v814 = vadd.f32 %v813, %v591
        %v815 = vadd.f32 %v814, %v594
        %v816 = vadd.f32 %v815, %v599
        %v817 = vadd.f32 %v816, %v602
        %v818 = vadd.f32 %v817, %v607
        %v819 = vadd.f32 %v818, %v610
        %v820 = vadd.f32 %v819, %v615
        %v821 = vadd.f32 %v820, %v618
        %v822 = vadd.f32 %v821, %v623
        %v823 = vadd.f32 %v822, %v626
        %v824 = vadd.f32 %v823, %v631
        %v825 = vadd.f32 %v824, %v634
        %v826 = vadd.f32 %v825, %v639
        %v827 = vadd.f32 %v826, %v642
        %v828 = vadd.f32 %v827, %v647
        %v829 = vadd.f32 %v828, %v650
        %v830 = vadd.f32 %v829, %v655
        %v831 = vadd.f32 %v830, %v658
        %v832 = vadd.f32 %v831, %v663
        %v833 = vadd.f32 %v832, %v666
        %v834 = vadd.f32 %v833, %v671
        %v835 = vadd.f32 %v834, %v674
        %v836 = vadd.f32 %v835, %v679
        %v837 = vadd.f32 %v836, %v682
        %v838 = vadd.f32 %v837, %v687
        %v839 = vadd.f32 %v838, %v690
        %v840 = vadd.f32 %v839, %v695
        %v841 = vadd.f32 %v840, %v698
        %v842 = vadd.f32 %v841, %v703
        %v843 = vadd.f32 %v842, %v706
        %v844 = vadd.f32 %v843, %v711
        %v845 = vadd.f32 %v844, %v714
        %v846 = vadd.f32 %v845, %v719
        %v847 = vadd.f32 %v846, %v722
        %v848 = vadd.f32 %v847, %v727
        %v849 = vadd.f32 %v848, %v730
        %v850 = vadd.f32 %v849, %v735
        %v851 = vadd.f32 %v850, %v738
        %v852 = vadd.f32 %v851, %v743
        %v853 = vadd.f32 %v852, %v746
        %v854 = vadd.f32 %v853, %v751
        %v855 = vadd.f32 %v854, %v754
        %v856 = vadd.f32 %v855, %v759
        %v857 = vadd.f32 %v856, %v762
        %v858 = vadd.f32 %v857, %v767
        %v859 = vadd.f32 %v858, %v770
        %v860 = vadd.f32 %v859, %v775
        %v861 = vadd.f32 %v860, %v778
        %v862 = vadd.f32 %v861, %v783
        %v863 = vadd.f32 %v862, %v786
        %v864 = vadd.f32 %v863, %v791
        %v865 = vadd.f32 %v864, %v794
        %v866 = vrot.slane %v865, 4
        %v867 = vadd.f32 %v865, %v866
        %v868 = vrot.slane %v867, 2
        %v869 = vadd.f32 %v867, %v868
        %v870 = vrot.slane %v869, 1
        %v871 = vadd.f32 %v869, %v870
        %v872 = vadd.f32 %v808, %v871
        %873 = vst [vmem:[#allocation2] sm:$0x1] %v872
        %v874 = vld [vmem:[#allocation3] sm:$0x1]
        %v875 = vmul.f32 %v567, %v567
        %v876 = vmul.f32 %v570, %v570
        %v877 = vmul.f32 %v575, %v575
        %v878 = vmul.f32 %v578, %v578
        %v879 = vmul.f32 %v583, %v583
        %v880 = vmul.f32 %v586, %v586
        %v881 = vmul.f32 %v591, %v591
        %v882 = vmul.f32 %v594, %v594
        %v883 = vmul.f32 %v599, %v599
        %v884 = vmul.f32 %v602, %v602
        %v885 = vmul.f32 %v607, %v607
        %v886 = vmul.f32 %v610, %v610
        %v887 = vmul.f32 %v615, %v615
        %v888 = vmul.f32 %v618, %v618
        %v889 = vmul.f32 %v623, %v623
        %v890 = vmul.f32 %v626, %v626
        %v891 = vmul.f32 %v631, %v631
        %v892 = vmul.f32 %v634, %v634
        %v893 = vmul.f32 %v639, %v639
        %v894 = vmul.f32 %v642, %v642
        %v895 = vmul.f32 %v647, %v647
        %v896 = vmul.f32 %v650, %v650
        %v897 = vmul.f32 %v655, %v655
        %v898 = vmul.f32 %v658, %v658
        %v899 = vmul.f32 %v663, %v663
        %v900 = vmul.f32 %v666, %v666
        %v901 = vmul.f32 %v671, %v671
        %v902 = vmul.f32 %v674, %v674
        %v903 = vmul.f32 %v679, %v679
        %v904 = vmul.f32 %v682, %v682
        %v905 = vmul.f32 %v687, %v687
        %v906 = vmul.f32 %v690, %v690
        %v907 = vmul.f32 %v695, %v695
        %v908 = vmul.f32 %v698, %v698
        %v909 = vmul.f32 %v703, %v703
        %v910 = vmul.f32 %v706, %v706
        %v911 = vmul.f32 %v711, %v711
        %v912 = vmul.f32 %v714, %v714
        %v913 = vmul.f32 %v719, %v719
        %v914 = vmul.f32 %v722, %v722
        %v915 = vmul.f32 %v727, %v727
        %v916 = vmul.f32 %v730, %v730
        %v917 = vmul.f32 %v735, %v735
        %v918 = vmul.f32 %v738, %v738
        %v919 = vmul.f32 %v743, %v743
        %v920 = vmul.f32 %v746, %v746
        %v921 = vmul.f32 %v751, %v751
        %v922 = vmul.f32 %v754, %v754
        %v923 = vmul.f32 %v759, %v759
        %v924 = vmul.f32 %v762, %v762
        %v925 = vmul.f32 %v767, %v767
        %v926 = vmul.f32 %v770, %v770
        %v927 = vmul.f32 %v775, %v775
        %v928 = vmul.f32 %v778, %v778
        %v929 = vmul.f32 %v783, %v783
        %v930 = vmul.f32 %v786, %v786
        %v931 = vmul.f32 %v791, %v791
        %v932 = vmul.f32 %v794, %v794
        %v933 = vadd.f32 %v875, %v876
        %v934 = vadd.f32 %v933, %v877
        %v935 = vadd.f32 %v934, %v878
        %v936 = vadd.f32 %v935, %v879
        %v937 = vadd.f32 %v936, %v880
        %v938 = vadd.f32 %v937, %v881
        %v939 = vadd.f32 %v938, %v882
        %v940 = vadd.f32 %v939, %v883
        %v941 = vadd.f32 %v940, %v884
        %v942 = vadd.f32 %v941, %v885
        %v943 = vadd.f32 %v942, %v886
        %v944 = vadd.f32 %v943, %v887
        %v945 = vadd.f32 %v944, %v888
        %v946 = vadd.f32 %v945, %v889
        %v947 = vadd.f32 %v946, %v890
        %v948 = vadd.f32 %v947, %v891
        %v949 = vadd.f32 %v948, %v892
        %v950 = vadd.f32 %v949, %v893
        %v951 = vadd.f32 %v950, %v894
        %v952 = vadd.f32 %v951, %v895
        %v953 = vadd.f32 %v952, %v896
        %v954 = vadd.f32 %v953, %v897
        %v955 = vadd.f32 %v954, %v898
        %v956 = vadd.f32 %v955, %v899
        %v957 = vadd.f32 %v956, %v900
        %v958 = vadd.f32 %v957, %v901
        %v959 = vadd.f32 %v958, %v902
        %v960 = vadd.f32 %v959, %v903
        %v961 = vadd.f32 %v960, %v904
        %v962 = vadd.f32 %v961, %v905
        %v963 = vadd.f32 %v962, %v906
        %v964 = vadd.f32 %v963, %v907
        %v965 = vadd.f32 %v964, %v908
        %v966 = vadd.f32 %v965, %v909
        %v967 = vadd.f32 %v966, %v910
        %v968 = vadd.f32 %v967, %v911
        %v969 = vadd.f32 %v968, %v912
        %v970 = vadd.f32 %v969, %v913
        %v971 = vadd.f32 %v970, %v914
        %v972 = vadd.f32 %v971, %v915
        %v973 = vadd.f32 %v972, %v916
        %v974 = vadd.f32 %v973, %v917
        %v975 = vadd.f32 %v974, %v918
        %v976 = vadd.f32 %v975, %v919
        %v977 = vadd.f32 %v976, %v920
        %v978 = vadd.f32 %v977, %v921
        %v979 = vadd.f32 %v978, %v922
        %v980 = vadd.f32 %v979, %v923
        %v981 = vadd.f32 %v980, %v924
        %v982 = vadd.f32 %v981, %v925
        %v983 = vadd.f32 %v982, %v926
        %v984 = vadd.f32 %v983, %v927
        %v985 = vadd.f32 %v984, %v928
        %v986 = vadd.f32 %v985, %v929
        %v987 = vadd.f32 %v986, %v930
        %v988 = vadd.f32 %v987, %v931
        %v989 = vadd.f32 %v988, %v932
        %v990 = vrot.slane %v989, 4
        %v991 = vadd.f32 %v989, %v990
        %v992 = vrot.slane %v991, 2
        %v993 = vadd.f32 %v991, %v992
        %v994 = vrot.slane %v993, 1
        %v995 = vadd.f32 %v993, %v994
        %v996 = vadd.f32 %v874, %v995
        %997 = vst [vmem:[#allocation3] sm:$0x1] %v996
      $region44: #{dqn_forward.4} parent=35 // pred_fallthru
        _
      %p998 = scmp.eq.s32.totalorder %s19, 1
      %p999 = pnand %p998, %p798
      %p1000 = pneg %p999
      // Predicated region
      $region45: #{dqn_forward.4} parent=35 // pred_check
        _
      $region46: #{dqn_forward.4} parent=35 // pred_check_branch
        %1002 = sbr.rel (%p999) target = $region48
      $region47: #{dqn_forward.4} parent=35 // pred_region
        %v1003 = vld [vmem:[#allocation2] sm:$0x1]
        %v1004 = vmul.f32 %v1003, 0.0022222223
        %v1005 = vld [vmem:[#allocation3] sm:$0x1]
        %v1006 = vmul.f32 %v1005, 0.0022222223
        %v1007 = vmul.f32 %v1004, %v1004
        %v1008 = vsub.f32 %v1006, %v1007
        %v1009 = vmax.f32 %v1008, 0.0
        %v1010 = vld [vmem:[%s2] sm:$0x1]
        %v1011 = vadd.f32 %v1009, 1e-05
        %v1012 = vrsqrt.pop %v1011
        %v1013 = vmul.f32 %v1010, %v1010
        %v1014 = vmul.f32 %v1013, %v1009
        %v1015 = vmul.f32 %v1012, %v1012
        %v1016 = vmul.f32 %v1014, %v1015
        %v1017 = vadd.f32 %v1016, 1e-05
        %v1018 = vrsqrt.pop %v1017
        %v1019 = vmul.f32 %v1013, %v1012
        %v1020 = vmul.f32 %v1019, %v1018
        %1021 = vst [vmem:[#allocation4] sm:$0x1] %v1020
        %v1022 = vld [vmem:[%s3] sm:$0x1]
        %v1023 = vmul.f32 %v1004, %v1020
        %v1024 = vsub.f32 %v1022, %v1023
        %1025 = vst [vmem:[#allocation5] sm:$0x1] %v1024
      $region48: #{dqn_forward.4} parent=35 // pred_fallthru
        _
      // Predicated region
      $region49: #{dqn_forward.4} parent=35 // pred_check
        %p1026 = pneg %p998
      $region50: #{dqn_forward.4} parent=35 // pred_check_branch
        %1028 = sbr.rel (%p1026) target = $region52
      $region51: #{dqn_forward.4} parent=35 // pred_region
        %v1029 = vld [vmem:[#allocation4] sm:$0x1]
        %v1031 = vlaneseq
        %v1032 = vshrl.u32 %v1031, 7
        %v1033 = vsub.s32 0, %v1032
        %v1034 = vrot.slane %v1029, %v1033
        %v1036 = vmul.f32 %v567, %v1034
        %v1037 = vmul.f32 %v570, %v1034
        %v1038 = vmul.f32 %v575, %v1034
        %v1039 = vmul.f32 %v578, %v1034
        %v1040 = vmul.f32 %v583, %v1034
        %v1041 = vmul.f32 %v586, %v1034
        %v1042 = vmul.f32 %v591, %v1034
        %v1043 = vmul.f32 %v594, %v1034
        %v1044 = vmul.f32 %v599, %v1034
        %v1045 = vmul.f32 %v602, %v1034
        %v1046 = vmul.f32 %v607, %v1034
        %v1047 = vmul.f32 %v610, %v1034
        %v1048 = vmul.f32 %v615, %v1034
        %v1049 = vmul.f32 %v618, %v1034
        %v1050 = vmul.f32 %v623, %v1034
        %v1051 = vmul.f32 %v626, %v1034
        %v1052 = vmul.f32 %v631, %v1034
        %v1053 = vmul.f32 %v634, %v1034
        %v1054 = vmul.f32 %v639, %v1034
        %v1055 = vmul.f32 %v642, %v1034
        %v1056 = vmul.f32 %v647, %v1034
        %v1057 = vmul.f32 %v650, %v1034
        %v1058 = vmul.f32 %v655, %v1034
        %v1059 = vmul.f32 %v658, %v1034
        %v1060 = vmul.f32 %v663, %v1034
        %v1061 = vmul.f32 %v666, %v1034
        %v1062 = vmul.f32 %v671, %v1034
        %v1063 = vmul.f32 %v674, %v1034
        %v1064 = vmul.f32 %v679, %v1034
        %v1065 = vmul.f32 %v682, %v1034
        %v1066 = vmul.f32 %v687, %v1034
        %v1067 = vmul.f32 %v690, %v1034
        %v1068 = vmul.f32 %v695, %v1034
        %v1069 = vmul.f32 %v698, %v1034
        %v1070 = vmul.f32 %v703, %v1034
        %v1071 = vmul.f32 %v706, %v1034
        %v1072 = vmul.f32 %v711, %v1034
        %v1073 = vmul.f32 %v714, %v1034
        %v1074 = vmul.f32 %v719, %v1034
        %v1075 = vmul.f32 %v722, %v1034
        %v1076 = vmul.f32 %v727, %v1034
        %v1077 = vmul.f32 %v730, %v1034
        %v1078 = vmul.f32 %v735, %v1034
        %v1079 = vmul.f32 %v738, %v1034
        %v1080 = vmul.f32 %v743, %v1034
        %v1081 = vmul.f32 %v746, %v1034
        %v1082 = vmul.f32 %v751, %v1034
        %v1083 = vmul.f32 %v754, %v1034
        %v1084 = vmul.f32 %v759, %v1034
        %v1085 = vmul.f32 %v762, %v1034
        %v1086 = vmul.f32 %v767, %v1034
        %v1087 = vmul.f32 %v770, %v1034
        %v1088 = vmul.f32 %v775, %v1034
        %v1089 = vmul.f32 %v778, %v1034
        %v1090 = vmul.f32 %v783, %v1034
        %v1091 = vmul.f32 %v786, %v1034
        %v1092 = vmul.f32 %v791, %v1034
        %v1093 = vmul.f32 %v794, %v1034
        %v1094 = vld [vmem:[#allocation5] sm:$0x1]
        %v1096 = vlaneseq
        %v1097 = vshrl.u32 %v1096, 7
        %v1098 = vsub.s32 0, %v1097
        %v1099 = vrot.slane %v1094, %v1098
        %v1101 = vadd.f32 %v1036, %v1099
        %v1102 = vadd.f32 %v1037, %v1099
        %v1103 = vadd.f32 %v1038, %v1099
        %v1104 = vadd.f32 %v1039, %v1099
        %v1105 = vadd.f32 %v1040, %v1099
        %v1106 = vadd.f32 %v1041, %v1099
        %v1107 = vadd.f32 %v1042, %v1099
        %v1108 = vadd.f32 %v1043, %v1099
        %v1109 = vadd.f32 %v1044, %v1099
        %v1110 = vadd.f32 %v1045, %v1099
        %v1111 = vadd.f32 %v1046, %v1099
        %v1112 = vadd.f32 %v1047, %v1099
        %v1113 = vadd.f32 %v1048, %v1099
        %v1114 = vadd.f32 %v1049, %v1099
        %v1115 = vadd.f32 %v1050, %v1099
        %v1116 = vadd.f32 %v1051, %v1099
        %v1117 = vadd.f32 %v1052, %v1099
        %v1118 = vadd.f32 %v1053, %v1099
        %v1119 = vadd.f32 %v1054, %v1099
        %v1120 = vadd.f32 %v1055, %v1099
        %v1121 = vadd.f32 %v1056, %v1099
        %v1122 = vadd.f32 %v1057, %v1099
        %v1123 = vadd.f32 %v1058, %v1099
        %v1124 = vadd.f32 %v1059, %v1099
        %v1125 = vadd.f32 %v1060, %v1099
        %v1126 = vadd.f32 %v1061, %v1099
        %v1127 = vadd.f32 %v1062, %v1099
        %v1128 = vadd.f32 %v1063, %v1099
        %v1129 = vadd.f32 %v1064, %v1099
        %v1130 = vadd.f32 %v1065, %v1099
        %v1131 = vadd.f32 %v1066, %v1099
        %v1132 = vadd.f32 %v1067, %v1099
        %v1133 = vadd.f32 %v1068, %v1099
        %v1134 = vadd.f32 %v1069, %v1099
        %v1135 = vadd.f32 %v1070, %v1099
        %v1136 = vadd.f32 %v1071, %v1099
        %v1137 = vadd.f32 %v1072, %v1099
        %v1138 = vadd.f32 %v1073, %v1099
        %v1139 = vadd.f32 %v1074, %v1099
        %v1140 = vadd.f32 %v1075, %v1099
        %v1141 = vadd.f32 %v1076, %v1099
        %v1142 = vadd.f32 %v1077, %v1099
        %v1143 = vadd.f32 %v1078, %v1099
        %v1144 = vadd.f32 %v1079, %v1099
        %v1145 = vadd.f32 %v1080, %v1099
        %v1146 = vadd.f32 %v1081, %v1099
        %v1147 = vadd.f32 %v1082, %v1099
        %v1148 = vadd.f32 %v1083, %v1099
        %v1149 = vadd.f32 %v1084, %v1099
        %v1150 = vadd.f32 %v1085, %v1099
        %v1151 = vadd.f32 %v1086, %v1099
        %v1152 = vadd.f32 %v1087, %v1099
        %v1153 = vadd.f32 %v1088, %v1099
        %v1154 = vadd.f32 %v1089, %v1099
        %v1155 = vadd.f32 %v1090, %v1099
        %v1156 = vadd.f32 %v1091, %v1099
        %v1157 = vadd.f32 %v1092, %v1099
        %v1158 = vadd.f32 %v1093, %v1099
        %v1159 = vmax.f32 %v1101, 0.0
        %v1160 = vmax.f32 %v1102, 0.0
        %v1161 = vmax.f32 %v1103, 0.0
        %v1162 = vmax.f32 %v1104, 0.0
        %v1163 = vmax.f32 %v1105, 0.0
        %v1164 = vmax.f32 %v1106, 0.0
        %v1165 = vmax.f32 %v1107, 0.0
        %v1166 = vmax.f32 %v1108, 0.0
        %v1167 = vmax.f32 %v1109, 0.0
        %v1168 = vmax.f32 %v1110, 0.0
        %v1169 = vmax.f32 %v1111, 0.0
        %v1170 = vmax.f32 %v1112, 0.0
        %v1171 = vmax.f32 %v1113, 0.0
        %v1172 = vmax.f32 %v1114, 0.0
        %v1173 = vmax.f32 %v1115, 0.0
        %v1174 = vmax.f32 %v1116, 0.0
        %v1175 = vmax.f32 %v1117, 0.0
        %v1176 = vmax.f32 %v1118, 0.0
        %v1177 = vmax.f32 %v1119, 0.0
        %v1178 = vmax.f32 %v1120, 0.0
        %v1179 = vmax.f32 %v1121, 0.0
        %v1180 = vmax.f32 %v1122, 0.0
        %v1181 = vmax.f32 %v1123, 0.0
        %v1182 = vmax.f32 %v1124, 0.0
        %v1183 = vmax.f32 %v1125, 0.0
        %v1184 = vmax.f32 %v1126, 0.0
        %v1185 = vmax.f32 %v1127, 0.0
        %v1186 = vmax.f32 %v1128, 0.0
        %v1187 = vmax.f32 %v1129, 0.0
        %v1188 = vmax.f32 %v1130, 0.0
        %v1189 = vmax.f32 %v1131, 0.0
        %v1190 = vmax.f32 %v1132, 0.0
        %v1191 = vmax.f32 %v1133, 0.0
        %v1192 = vmax.f32 %v1134, 0.0
        %v1193 = vmax.f32 %v1135, 0.0
        %v1194 = vmax.f32 %v1136, 0.0
        %v1195 = vmax.f32 %v1137, 0.0
        %v1196 = vmax.f32 %v1138, 0.0
        %v1197 = vmax.f32 %v1139, 0.0
        %v1198 = vmax.f32 %v1140, 0.0
        %v1199 = vmax.f32 %v1141, 0.0
        %v1200 = vmax.f32 %v1142, 0.0
        %v1201 = vmax.f32 %v1143, 0.0
        %v1202 = vmax.f32 %v1144, 0.0
        %v1203 = vmax.f32 %v1145, 0.0
        %v1204 = vmax.f32 %v1146, 0.0
        %v1205 = vmax.f32 %v1147, 0.0
        %v1206 = vmax.f32 %v1148, 0.0
        %v1207 = vmax.f32 %v1149, 0.0
        %v1208 = vmax.f32 %v1150, 0.0
        %v1209 = vmax.f32 %v1151, 0.0
        %v1210 = vmax.f32 %v1152, 0.0
        %v1211 = vmax.f32 %v1153, 0.0
        %v1212 = vmax.f32 %v1154, 0.0
        %v1213 = vmax.f32 %v1155, 0.0
        %v1214 = vmax.f32 %v1156, 0.0
        %v1215 = vmax.f32 %v1157, 0.0
        %v1216 = vmax.f32 %v1158, 0.0
        %v1217 = vpack.c.bf16 %v1160, %v1159
        %v1218 = vpack.c.bf16 %v1162, %v1161
        %v1219 = vpack.c.bf16 %v1164, %v1163
        %v1220 = vpack.c.bf16 %v1166, %v1165
        %v1221 = vpack.c.bf16 %v1168, %v1167
        %v1222 = vpack.c.bf16 %v1170, %v1169
        %v1223 = vpack.c.bf16 %v1172, %v1171
        %v1224 = vpack.c.bf16 %v1174, %v1173
        %v1225 = vpack.c.bf16 %v1176, %v1175
        %v1226 = vpack.c.bf16 %v1178, %v1177
        %v1227 = vpack.c.bf16 %v1180, %v1179
        %v1228 = vpack.c.bf16 %v1182, %v1181
        %v1229 = vpack.c.bf16 %v1184, %v1183
        %v1230 = vpack.c.bf16 %v1186, %v1185
        %v1231 = vpack.c.bf16 %v1188, %v1187
        %v1232 = vpack.c.bf16 %v1190, %v1189
        %v1233 = vpack.c.bf16 %v1192, %v1191
        %v1234 = vpack.c.bf16 %v1194, %v1193
        %v1235 = vpack.c.bf16 %v1196, %v1195
        %v1236 = vpack.c.bf16 %v1198, %v1197
        %v1237 = vpack.c.bf16 %v1200, %v1199
        %v1238 = vpack.c.bf16 %v1202, %v1201
        %v1239 = vpack.c.bf16 %v1204, %v1203
        %v1240 = vpack.c.bf16 %v1206, %v1205
        %v1241 = vpack.c.bf16 %v1208, %v1207
        %v1242 = vpack.c.bf16 %v1210, %v1209
        %v1243 = vpack.c.bf16 %v1212, %v1211
        %v1244 = vpack.c.bf16 %v1214, %v1213
        %v1245 = vpack.c.bf16 %v1216, %v1215
        %v1275 = vunpack.c.l.b16 %v1217
        %v1276 = vunpack.c.h.b16 %v1217
        %v1277 = vunpack.c.l.b16 %v1218
        %v1278 = vunpack.c.h.b16 %v1218
        %v1279 = vunpack.c.l.b16 %v1219
        %v1280 = vunpack.c.h.b16 %v1219
        %v1281 = vunpack.c.l.b16 %v1220
        %v1282 = vunpack.c.h.b16 %v1220
        %v1283 = vunpack.c.l.b16 %v1221
        %v1284 = vunpack.c.h.b16 %v1221
        %v1285 = vunpack.c.l.b16 %v1222
        %v1286 = vunpack.c.h.b16 %v1222
        %v1287 = vunpack.c.l.b16 %v1223
        %v1288 = vunpack.c.h.b16 %v1223
        %v1289 = vunpack.c.l.b16 %v1224
        %v1290 = vunpack.c.h.b16 %v1224
        %v1291 = vunpack.c.l.b16 %v1225
        %v1292 = vunpack.c.h.b16 %v1225
        %v1293 = vunpack.c.l.b16 %v1226
        %v1294 = vunpack.c.h.b16 %v1226
        %v1295 = vunpack.c.l.b16 %v1227
        %v1296 = vunpack.c.h.b16 %v1227
        %v1297 = vunpack.c.l.b16 %v1228
        %v1298 = vunpack.c.h.b16 %v1228
        %v1299 = vunpack.c.l.b16 %v1229
        %v1300 = vunpack.c.h.b16 %v1229
        %v1301 = vunpack.c.l.b16 %v1230
        %v1302 = vunpack.c.h.b16 %v1230
        %v1303 = vunpack.c.l.b16 %v1231
        %v1304 = vunpack.c.h.b16 %v1231
        %v1305 = vunpack.c.l.b16 %v1232
        %v1306 = vunpack.c.h.b16 %v1232
        %v1307 = vunpack.c.l.b16 %v1233
        %v1308 = vunpack.c.h.b16 %v1233
        %v1309 = vunpack.c.l.b16 %v1234
        %v1310 = vunpack.c.h.b16 %v1234
        %v1311 = vunpack.c.l.b16 %v1235
        %v1312 = vunpack.c.h.b16 %v1235
        %v1313 = vunpack.c.l.b16 %v1236
        %v1314 = vunpack.c.h.b16 %v1236
        %v1315 = vunpack.c.l.b16 %v1237
        %v1316 = vunpack.c.h.b16 %v1237
        %v1317 = vunpack.c.l.b16 %v1238
        %v1318 = vunpack.c.h.b16 %v1238
        %v1319 = vunpack.c.l.b16 %v1239
        %v1320 = vunpack.c.h.b16 %v1239
        %v1321 = vunpack.c.l.b16 %v1240
        %v1322 = vunpack.c.h.b16 %v1240
        %v1323 = vunpack.c.l.b16 %v1241
        %v1324 = vunpack.c.h.b16 %v1241
        %v1325 = vunpack.c.l.b16 %v1242
        %v1326 = vunpack.c.h.b16 %v1242
        %v1327 = vunpack.c.l.b16 %v1243
        %v1328 = vunpack.c.h.b16 %v1243
        %v1329 = vunpack.c.l.b16 %v1244
        %v1330 = vunpack.c.h.b16 %v1244
        %v1331 = vunpack.c.l.b16 %v1245
        %v1332 = vunpack.c.h.b16 %v1245
        %v1333 = vpack.c.b16 %v1275, %v1275
        %v1334 = vpack.c.b16 %v1276, %v1276
        %v1335 = vpack.c.b16 %v1277, %v1277
        %v1336 = vpack.c.b16 %v1278, %v1278
        %v1337 = vpack.c.b16 %v1279, %v1279
        %v1338 = vpack.c.b16 %v1280, %v1280
        %v1339 = vpack.c.b16 %v1281, %v1281
        %v1340 = vpack.c.b16 %v1282, %v1282
        %v1341 = vpack.c.b16 %v1283, %v1283
        %v1342 = vpack.c.b16 %v1284, %v1284
        %v1343 = vpack.c.b16 %v1285, %v1285
        %v1344 = vpack.c.b16 %v1286, %v1286
        %v1345 = vpack.c.b16 %v1287, %v1287
        %v1346 = vpack.c.b16 %v1288, %v1288
        %v1347 = vpack.c.b16 %v1289, %v1289
        %v1348 = vpack.c.b16 %v1290, %v1290
        %v1349 = vpack.c.b16 %v1291, %v1291
        %v1350 = vpack.c.b16 %v1292, %v1292
        %v1351 = vpack.c.b16 %v1293, %v1293
        %v1352 = vpack.c.b16 %v1294, %v1294
        %v1353 = vpack.c.b16 %v1295, %v1295
        %v1354 = vpack.c.b16 %v1296, %v1296
        %v1355 = vpack.c.b16 %v1297, %v1297
        %v1356 = vpack.c.b16 %v1298, %v1298
        %v1357 = vpack.c.b16 %v1299, %v1299
        %v1358 = vpack.c.b16 %v1300, %v1300
        %v1359 = vpack.c.b16 %v1301, %v1301
        %v1360 = vpack.c.b16 %v1302, %v1302
        %v1361 = vpack.c.b16 %v1303, %v1303
        %v1362 = vpack.c.b16 %v1304, %v1304
        %v1363 = vpack.c.b16 %v1305, %v1305
        %v1364 = vpack.c.b16 %v1306, %v1306
        %v1365 = vpack.c.b16 %v1307, %v1307
        %v1366 = vpack.c.b16 %v1308, %v1308
        %v1367 = vpack.c.b16 %v1309, %v1309
        %v1368 = vpack.c.b16 %v1310, %v1310
        %v1369 = vpack.c.b16 %v1311, %v1311
        %v1370 = vpack.c.b16 %v1312, %v1312
        %v1371 = vpack.c.b16 %v1313, %v1313
        %v1372 = vpack.c.b16 %v1314, %v1314
        %v1373 = vpack.c.b16 %v1315, %v1315
        %v1374 = vpack.c.b16 %v1316, %v1316
        %v1375 = vpack.c.b16 %v1317, %v1317
        %v1376 = vpack.c.b16 %v1318, %v1318
        %v1377 = vpack.c.b16 %v1319, %v1319
        %v1378 = vpack.c.b16 %v1320, %v1320
        %v1379 = vpack.c.b16 %v1321, %v1321
        %v1380 = vpack.c.b16 %v1322, %v1322
        %v1381 = vpack.c.b16 %v1323, %v1323
        %v1382 = vpack.c.b16 %v1324, %v1324
        %v1383 = vpack.c.b16 %v1325, %v1325
        %v1384 = vpack.c.b16 %v1326, %v1326
        %v1385 = vpack.c.b16 %v1327, %v1327
        %v1386 = vpack.c.b16 %v1328, %v1328
        %v1387 = vpack.c.b16 %v1329, %v1329
        %v1388 = vpack.c.b16 %v1330, %v1330
        %v1389 = vpack.c.b16 %v1331, %v1331
        %v1390 = vpack.c.b16 %v1332, %v1332
        %1449 = vst [vmem:[%s215] sm:$0xf] %v1333
        %1450 = vst [vmem:[%s215 + $0x4] sm:$0xf] %v1334
        %1451 = vst [vmem:[%s215 + $0x8] sm:$0xf] %v1335
        %1452 = vst [vmem:[%s215 + $0xc] sm:$0xf] %v1336
        %1453 = vst [vmem:[%s215 + $0x10] sm:$0xf] %v1337
        %1454 = vst [vmem:[%s215 + $0x14] sm:$0xf] %v1338
        %1455 = vst [vmem:[%s215 + $0x18] sm:$0xf] %v1339
        %1456 = vst [vmem:[%s215 + $0x1c] sm:$0xf] %v1340
        %1457 = vst [vmem:[%s215 + $0x20] sm:$0xf] %v1341
        %1458 = vst [vmem:[%s215 + $0x24] sm:$0xf] %v1342
        %1459 = vst [vmem:[%s215 + $0x28] sm:$0xf] %v1343
        %1460 = vst [vmem:[%s215 + $0x2c] sm:$0xf] %v1344
        %1461 = vst [vmem:[%s215 + $0x30] sm:$0xf] %v1345
        %1462 = vst [vmem:[%s215 + $0x34] sm:$0xf] %v1346
        %1463 = vst [vmem:[%s215 + $0x38] sm:$0xf] %v1347
        %1464 = vst [vmem:[%s215 + $0x3c] sm:$0xf] %v1348
        %1465 = vst [vmem:[%s215 + $0x40] sm:$0xf] %v1349
        %1466 = vst [vmem:[%s215 + $0x44] sm:$0xf] %v1350
        %1467 = vst [vmem:[%s215 + $0x48] sm:$0xf] %v1351
        %1468 = vst [vmem:[%s215 + $0x4c] sm:$0xf] %v1352
        %1469 = vst [vmem:[%s215 + $0x50] sm:$0xf] %v1353
        %1470 = vst [vmem:[%s215 + $0x54] sm:$0xf] %v1354
        %1471 = vst [vmem:[%s215 + $0x58] sm:$0xf] %v1355
        %1472 = vst [vmem:[%s215 + $0x5c] sm:$0xf] %v1356
        %1473 = vst [vmem:[%s215 + $0x60] sm:$0xf] %v1357
        %1474 = vst [vmem:[%s215 + $0x64] sm:$0xf] %v1358
        %1475 = vst [vmem:[%s215 + $0x68] sm:$0xf] %v1359
        %1476 = vst [vmem:[%s215 + $0x6c] sm:$0xf] %v1360
        %1477 = vst [vmem:[%s215 + $0x70] sm:$0xf] %v1361
        %1478 = vst [vmem:[%s215 + $0x74] sm:$0xf] %v1362
        %1479 = vst [vmem:[%s215 + $0x78] sm:$0xf] %v1363
        %1480 = vst [vmem:[%s215 + $0x7c] sm:$0xf] %v1364
        %1481 = vst [vmem:[%s215 + $0x80] sm:$0xf] %v1365
        %1482 = vst [vmem:[%s215 + $0x84] sm:$0xf] %v1366
        %1483 = vst [vmem:[%s215 + $0x88] sm:$0xf] %v1367
        %1484 = vst [vmem:[%s215 + $0x8c] sm:$0xf] %v1368
        %1485 = vst [vmem:[%s215 + $0x90] sm:$0xf] %v1369
        %1486 = vst [vmem:[%s215 + $0x94] sm:$0xf] %v1370
        %1487 = vst [vmem:[%s215 + $0x98] sm:$0xf] %v1371
        %1488 = vst [vmem:[%s215 + $0x9c] sm:$0xf] %v1372
        %1489 = vst [vmem:[%s215 + $0xa0] sm:$0xf] %v1373
        %1490 = vst [vmem:[%s215 + $0xa4] sm:$0xf] %v1374
        %1491 = vst [vmem:[%s215 + $0xa8] sm:$0xf] %v1375
        %1492 = vst [vmem:[%s215 + $0xac] sm:$0xf] %v1376
        %1493 = vst [vmem:[%s215 + $0xb0] sm:$0xf] %v1377
        %1494 = vst [vmem:[%s215 + $0xb4] sm:$0xf] %v1378
        %1495 = vst [vmem:[%s215 + $0xb8] sm:$0xf] %v1379
        %1496 = vst [vmem:[%s215 + $0xbc] sm:$0xf] %v1380
        %1497 = vst [vmem:[%s215 + $0xc0] sm:$0xf] %v1381
        %1498 = vst [vmem:[%s215 + $0xc4] sm:$0xf] %v1382
        %1499 = vst [vmem:[%s215 + $0xc8] sm:$0xf] %v1383
        %1500 = vst [vmem:[%s215 + $0xcc] sm:$0xf] %v1384
        %1501 = vst [vmem:[%s215 + $0xd0] sm:$0xf] %v1385
        %1502 = vst [vmem:[%s215 + $0xd4] sm:$0xf] %v1386
        %1503 = vst [vmem:[%s215 + $0xd8] sm:$0xf] %v1387
        %1504 = vst [vmem:[%s215 + $0xdc] sm:$0xf] %v1388
        %1505 = vst [vmem:[%s215 + $0xe0] sm:$0xf] %v1389
        %1506 = vst [vmem:[%s215 + $0xe4] sm:$0xf] %v1390
      $region52: #{dqn_forward.4} parent=35 // pred_fallthru
        _
      %s1507 = smul.u32 %s20, %s19
      %s1508 = smul.u32 58, %s1507
      %p1509 = scmp.lt.s32.totalorder %s1508, 57
      %s1510 = scalar_select %p1509, %s1508, 57
      %s1511 = smul.addr %s1510, 4
      %s1512 = scalar_lea.vmem %s4, %s1511
      // Predicated region
      $region53: #{dqn_forward.4} parent=35 // pred_check
        %p1513 = pneg %p136
      $region54: #{dqn_forward.4} parent=35 // pred_check_branch
        %1515 = sbr.rel (%p1513) target = $region56
      $region55: #{dqn_forward.4} parent=35 // pred_region
        %s1516 = smul.u32 %s20, %s19
        %s1517 = smul.u32 58, %s1516
      $region56: #{dqn_forward.4} parent=35 // pred_fallthru
        _
    $region36: #{dqn_forward.4} parent=5 // pred_fallthru
      _
    %p1518 = scmp.le.s32.totalorder 2, %s10
    // Predicated region
    $region57: #{dqn_forward.4} parent=5 // pred_check
      %p1519 = pneg %p1518
    $region58: #{dqn_forward.4} parent=5 // pred_check_branch
      %1521 = sbr.rel (%p1519) target = $region60
    $region59: #{dqn_forward.4} parent=5 // pred_region
      %s1522 = ssub.s32 %s10, 2
      // Predicated region
      $region61: #{dqn_forward.4} parent=59 // pred_check
        %p1523 = pneg %p142
      $region62: #{dqn_forward.4} parent=59 // pred_check_branch
        %1525 = sbr.rel (%p1523) target = $region64
      $region63: #{dqn_forward.4} parent=59 // pred_region
        %s1526 = smul.u32 %s22, %s21
        %s1527 = smul.u32 58, %s1526
        %p1528 = scmp.lt.s32.totalorder %s1527, 57
        %s1529 = scalar_select %p1528, %s1527, 57
        %s1530 = smul.addr %s1529, 4
        %s1531 = scalar_lea.vmem %s4, %s1530
      $region64: #{dqn_forward.4} parent=59 // pred_fallthru
        _
    $region60: #{dqn_forward.4} parent=5 // pred_fallthru
      _
  $region6: #{dqn_forward.4} parent=0 // loop_footer
    %s14 = sadd.s32 1, %s10
  $region7: #{dqn_forward.4} parent=0 // loop_footer_branch
    %9 = sbr.rel target = $region3
  $region8: #{dqn_forward.4} parent=0 // loop_exit
    _

// kernel: dqn_forward.5
$region0: #{dqn_forward.5}
  #allocation0 [shape = 'u32[]', space=smem, size = 0x4, offset = 0x4, fixed_abs, tag = 'smem constant byte address 0x4 - core index']
  #allocation1 [shape = 'u32[144,128]{1,0:T(1,128)}', space=vmem, size = 0x12000, scoped, tag = 'internal scratch']
  #allocation2 [shape = 'f32[1,128]{1,0:T(1,128)}', space=vmem, size = 0x200, scoped, tag = 'scratch operand']
  #allocation3 [shape = 'f32[1,128]{1,0:T(1,128)}', space=vmem, size = 0x200, scoped, tag = 'scratch operand']
  #allocation4 [shape = 'f32[1,128]{1,0:T(1,128)}', space=vmem, size = 0x200, scoped, tag = 'scratch operand']
  #allocation5 [shape = 'f32[1,128]{1,0:T(1,128)}', space=vmem, size = 0x200, scoped, tag = 'scratch operand']
  %s0 = inlined_call_operand.vmem [shape: bf16[80,400], index: 0, kind: input, shape index: {}]
  %s1 = inlined_call_operand.vmem [shape: bf16[400,128], index: 1, kind: input, shape index: {}]
  %s2 = inlined_call_operand.vmem [shape: f32[1,128], index: 2, kind: input, shape index: {}]
  %s3 = inlined_call_operand.vmem [shape: f32[1,128], index: 3, kind: input, shape index: {}]
  %s4 = inlined_call_operand.vmem [shape: bf16[80,128], index: 4, kind: output, shape index: {}]
  %s5 = sld [smem:[#allocation0]]
  $region65: #{dqn_forward.5} parent=0
    _
  %s7 = ssub.s32 1, %s5
  %s8 = scalar_select 0, %s7, %s5
  loop: start=0, step=1, limit=4
  $region2: #{dqn_forward.5} parent=0 // loop_pre_header
    _
  $region3: #{dqn_forward.5} parent=0 // loop_header
    %s10 = sphi 0, %s14
    %p11 = scmp.ge.s32.totalorder %s10, 4
    %s17 = sphi 0, %s29
    %s18 = sphi 0, %s25
    %s19 = sphi 0, %s17
    %s20 = sphi 0, %s18
    %s21 = sphi 0, %s19
    %s22 = sphi 0, %s20
    %s32 = sphi 0, %s34
    %s35 = sphi 0, %s32
    %s36 = sphi 0, %s35
    %s52 = sphi 0, %s36
    %s56 = sphi 0, %s56
    %s58 = sphi 0, %s56
    %s59 = sphi 0, %s58
    %s73 = sphi 0, %s59
    %s77 = sphi 0, %s77
    %s79 = sphi 0, %s77
    %s80 = sphi 0, %s79
    %s94 = sphi 0, %s80
    %s98 = sphi 0, %s98
    %s100 = sphi 0, %s98
    %s101 = sphi 0, %s100
    %s115 = sphi 0, %s101
    %s123 = sphi 0, %s125
    %s126 = sphi 0, %s123
    %s127 = sphi 0, %s126
    %s143 = sphi 0, %s127
  $region4: #{dqn_forward.5} parent=0 // loop_header_branch
    %13 = sbr.rel (%p11) target = $region8
  $region5: #{dqn_forward.5} parent=0 // loop_body
    %s15 = ssub.s32 %s10, 1
    %s16 = ssub.s32 %s10, 2
    %s23 = sadd.s32 1, %s18
    %p24 = scmp.ge.s32.totalorder %s23, 1
    %s25 = scalar_select %p24, 0, %s23
    %s26 = sadd.s32 1, %s17
    %s27 = scalar_select %p24, %s26, %s17
    %p28 = scmp.ge.s32.totalorder %s27, 2
    %s29 = scalar_select %p28, 0, %s27
    %s30 = ssub.s32 %s18, %s25
    %p31 = scmp.eq.s32.totalorder %s30, 0
    %s33 = sadd.s32 %s32, 1
    %s34 = scalar_select %p31, %s32, %s33
    %p37 = pneg %p31
    %p38 = scmp.eq.s32.totalorder %s10, 1
    %p39 = por %p37, %p38
    %p40 = scmp.ne.s32.totalorder %s32, %s35
    %p41 = scmp.eq.s32.totalorder %s10, 0
    %p42 = por %p40, %p41
    %p43 = scmp.ne.s32.totalorder %s32, %s35
    %p44 = scmp.eq.s32.totalorder %s15, 1
    %p45 = por %p43, %p44
    %p46 = scmp.ne.s32.totalorder %s35, %s36
    %p47 = scmp.eq.s32.totalorder %s15, 0
    %p48 = por %p46, %p47
    %p49 = scmp.ne.s32.totalorder %s35, %s36
    %p50 = scmp.eq.s32.totalorder %s16, 1
    %p51 = por %p49, %p50
    %p53 = scmp.ne.s32.totalorder %s36, %s52
    %p54 = scmp.eq.s32.totalorder %s16, 0
    %p55 = por %p53, %p54
    %s57 = sadd.s32 %s56, 1
    %p60 = scmp.eq.s32.totalorder %s10, 1
    %p61 = scmp.ne.s32.totalorder %s56, %s58
    %p62 = scmp.eq.s32.totalorder %s10, 0
    %p63 = por %p61, %p62
    %p64 = scmp.ne.s32.totalorder %s56, %s58
    %p65 = scmp.eq.s32.totalorder %s15, 1
    %p66 = por %p64, %p65
    %p67 = scmp.ne.s32.totalorder %s58, %s59
    %p68 = scmp.eq.s32.totalorder %s15, 0
    %p69 = por %p67, %p68
    %p70 = scmp.ne.s32.totalorder %s58, %s59
    %p71 = scmp.eq.s32.totalorder %s16, 1
    %p72 = por %p70, %p71
    %p74 = scmp.ne.s32.totalorder %s59, %s73
    %p75 = scmp.eq.s32.totalorder %s16, 0
    %p76 = por %p74, %p75
    %s78 = sadd.s32 %s77, 1
    %p81 = scmp.eq.s32.totalorder %s10, 1
    %p82 = scmp.ne.s32.totalorder %s77, %s79
    %p83 = scmp.eq.s32.totalorder %s10, 0
    %p84 = por %p82, %p83
    %p85 = scmp.ne.s32.totalorder %s77, %s79
    %p86 = scmp.eq.s32.totalorder %s15, 1
    %p87 = por %p85, %p86
    %p88 = scmp.ne.s32.totalorder %s79, %s80
    %p89 = scmp.eq.s32.totalorder %s15, 0
    %p90 = por %p88, %p89
    %p91 = scmp.ne.s32.totalorder %s79, %s80
    %p92 = scmp.eq.s32.totalorder %s16, 1
    %p93 = por %p91, %p92
    %p95 = scmp.ne.s32.totalorder %s80, %s94
    %p96 = scmp.eq.s32.totalorder %s16, 0
    %p97 = por %p95, %p96
    %s99 = sadd.s32 %s98, 1
    %p102 = scmp.eq.s32.totalorder %s10, 1
    %p103 = scmp.ne.s32.totalorder %s98, %s100
    %p104 = scmp.eq.s32.totalorder %s10, 0
    %p105 = por %p103, %p104
    %p106 = scmp.ne.s32.totalorder %s98, %s100
    %p107 = scmp.eq.s32.totalorder %s15, 1
    %p108 = por %p106, %p107
    %p109 = scmp.ne.s32.totalorder %s100, %s101
    %p110 = scmp.eq.s32.totalorder %s15, 0
    %p111 = por %p109, %p110
    %p112 = scmp.ne.s32.totalorder %s100, %s101
    %p113 = scmp.eq.s32.totalorder %s16, 1
    %p114 = por %p112, %p113
    %p116 = scmp.ne.s32.totalorder %s101, %s115
    %p117 = scmp.eq.s32.totalorder %s16, 0
    %p118 = por %p116, %p117
    %s119 = smul.u32 %s18, %s17
    %s120 = smul.u32 %s25, %s29
    %s121 = ssub.s32 %s119, %s120
    %p122 = scmp.eq.s32.totalorder %s121, 0
    %s124 = sadd.s32 %s123, 1
    %s125 = scalar_select %p122, %s123, %s124
    %p128 = pneg %p122
    %p129 = scmp.eq.s32.totalorder %s10, 1
    %p130 = por %p128, %p129
    %p131 = scmp.ne.s32.totalorder %s123, %s126
    %p132 = scmp.eq.s32.totalorder %s10, 0
    %p133 = por %p131, %p132
    %p134 = scmp.ne.s32.totalorder %s123, %s126
    %p135 = scmp.eq.s32.totalorder %s15, 1
    %p136 = por %p134, %p135
    %p137 = scmp.ne.s32.totalorder %s126, %s127
    %p138 = scmp.eq.s32.totalorder %s15, 0
    %p139 = por %p137, %p138
    %p140 = scmp.ne.s32.totalorder %s126, %s127
    %p141 = scmp.eq.s32.totalorder %s16, 1
    %p142 = por %p140, %p141
    %p144 = scmp.ne.s32.totalorder %s127, %s143
    %p145 = scmp.eq.s32.totalorder %s16, 0
    %p146 = por %p144, %p145
    %p147 = scmp.le.s32.totalorder 1, %s10
    %p148 = scmp.lt.s32.totalorder %s10, 3
    %p149 = pnand %p147, %p148
    %p150 = pneg %p149
    // Predicated region
    $region9: #{dqn_forward.5} parent=5 // pred_check
      _
    $region10: #{dqn_forward.5} parent=5 // pred_check_branch
      %152 = sbr.rel (%p149) target = $region12
    $region11: #{dqn_forward.5} parent=5 // pred_region
      %s153 = ssub.s32 %s10, 1
      // Predicated region
      $region13: #{dqn_forward.5} parent=11 // pred_check
        %p154 = pneg %p48
      $region14: #{dqn_forward.5} parent=11 // pred_check_branch
        %156 = sbr.rel (%p154) target = $region16
      $region15: #{dqn_forward.5} parent=11 // pred_region
        %s157 = smul.u32 10, %s20
        %p158 = scmp.lt.s32.totalorder %s157, 9
        %s159 = scalar_select %p158, %s157, 9
        %s160 = smul.addr %s159, 4
        %s161 = smul.addr %s160, 4
        %s162 = scalar_lea.vmem %s0, %s161
        %s163 = smul.u32 10, %s20
      $region16: #{dqn_forward.5} parent=11 // pred_fallthru
        _
      // Predicated region
      $region17: #{dqn_forward.5} parent=11 // pred_check
        %p164 = pneg %p69
      $region18: #{dqn_forward.5} parent=11 // pred_check_branch
        %166 = sbr.rel (%p164) target = $region20
      $region19: #{dqn_forward.5} parent=11 // pred_region
        _
      $region20: #{dqn_forward.5} parent=11 // pred_fallthru
        _
      // Predicated region
      $region21: #{dqn_forward.5} parent=11 // pred_check
        %p167 = pneg %p90
      $region22: #{dqn_forward.5} parent=11 // pred_check_branch
        %169 = sbr.rel (%p167) target = $region24
      $region23: #{dqn_forward.5} parent=11 // pred_region
        _
      $region24: #{dqn_forward.5} parent=11 // pred_fallthru
        _
      // Predicated region
      $region25: #{dqn_forward.5} parent=11 // pred_check
        %p170 = pneg %p111
      $region26: #{dqn_forward.5} parent=11 // pred_check_branch
        %172 = sbr.rel (%p170) target = $region28
      $region27: #{dqn_forward.5} parent=11 // pred_region
        _
      $region28: #{dqn_forward.5} parent=11 // pred_fallthru
        _
    $region12: #{dqn_forward.5} parent=5 // pred_fallthru
      _
    %p173 = scmp.lt.s32.totalorder %s10, 2
    // Predicated region
    $region29: #{dqn_forward.5} parent=5 // pred_check
      %p174 = pneg %p173
    $region30: #{dqn_forward.5} parent=5 // pred_check_branch
      %176 = sbr.rel (%p174) target = $region32
    $region31: #{dqn_forward.5} parent=5 // pred_region
      _
    $region32: #{dqn_forward.5} parent=5 // pred_fallthru
      _
    %p177 = scmp.le.s32.totalorder 1, %s10
    %p178 = scmp.lt.s32.totalorder %s10, 3
    %p179 = pnand %p177, %p178
    %p180 = pneg %p179
    // Predicated region
    $region33: #{dqn_forward.5} parent=5 // pred_check
      _
    $region34: #{dqn_forward.5} parent=5 // pred_check_branch
      %182 = sbr.rel (%p179) target = $region36
    $region35: #{dqn_forward.5} parent=5 // pred_region
      %s183 = ssub.s32 %s10, 1
      %s184 = smul.u32 10, %s20
      %p185 = scmp.lt.s32.totalorder %s184, 9
      %s186 = scalar_select %p185, %s184, 9
      %s187 = smul.addr %s186, 4
      %s188 = smul.addr %s187, 4
      %s189 = scalar_lea.vmem %s0, %s188
      %p190 = pneg %p48
      %p191 = pneg %p45
      %p192 = pneg %p69
      %p193 = pneg %p66
      %p194 = pneg %p90
      %p195 = pneg %p87
      %p196 = pneg %p111
      %p197 = pneg %p108
      %p198 = pneg %p139
      %p199 = pneg %p136
      %s200 = smul.u32 %s20, %s19
      %s201 = smul.u32 10, %s200
      %p202 = scmp.lt.s32.totalorder %s201, 9
      %s203 = scalar_select %p202, %s201, 9
      %s204 = smul.addr %s203, 4
      %s205 = scalar_lea.vmem %s4, %s204
      %s206 = smul.u32 10, %s20
      %p207 = scmp.lt.s32.totalorder %s206, 9
      %s208 = scalar_select %p207, %s206, 9
      %s209 = smul.addr %s208, 4
      %s210 = smul.addr %s209, 4
      %s211 = scalar_lea.vmem %s0, %s210
      %s212 = smul.u32 10, %s20
      %s213 = smul.u32 %s20, %s19
      %s214 = smul.u32 10, %s213
      %p215 = scmp.lt.s32.totalorder %s214, 9
      %s216 = scalar_select %p215, %s214, 9
      %s217 = smul.addr %s216, 4
      %s218 = scalar_lea.vmem %s4, %s217
      %s219 = smul.u32 %s20, %s19
      %s220 = smul.u32 10, %s219
      %v222 = vld [vmem:[%s211] sm:$0xff]
      %v223 = vld [vmem:[%s211 + $0x8] sm:$0xff]
      %v224 = vld [vmem:[%s211 + $0x10] sm:$0xff]
      %v225 = vld [vmem:[%s211 + $0x18] sm:$0xff]
      %v226 = vld [vmem:[%s211 + $0x20] sm:$0xff]
      %v227 = vld [vmem:[%s211 + $0x28] sm:$0xff]
      %v228 = vld [vmem:[%s211 + $0x30] sm:$0xff]
      %v229 = vld [vmem:[%s211 + $0x38] sm:$0xff]
      %v230 = vld [vmem:[%s211 + $0x40] sm:$0xff]
      %v231 = vld [vmem:[%s211 + $0x48] sm:$0xff]
      %v232 = vld [vmem:[%s211 + $0x50] sm:$0xff]
      %v233 = vld [vmem:[%s211 + $0x58] sm:$0xff]
      %v234 = vld [vmem:[%s211 + $0x60] sm:$0xff]
      %v235 = vld [vmem:[%s211 + $0x68] sm:$0xff]
      %v236 = vld [vmem:[%s211 + $0x70] sm:$0xff]
      %v237 = vld [vmem:[%s211 + $0x78] sm:$0xff]
      %v238 = vld [vmem:[%s211 + $0x80] sm:$0xff]
      %v239 = vld [vmem:[%s211 + $0x88] sm:$0xff]
      %v240 = vld [vmem:[%s211 + $0x90] sm:$0xff]
      %v241 = vld [vmem:[%s211 + $0x98] sm:$0xff]
      %v242 = vld [vmem:[%s1] sm:$0xf]
      %v243 = vld [vmem:[%s1 + $0x4] sm:$0xf]
      %v244 = vld [vmem:[%s1 + $0x8] sm:$0xf]
      %v245 = vld [vmem:[%s1 + $0xc] sm:$0xf]
      %v246 = vld [vmem:[%s1 + $0x10] sm:$0xf]
      %v247 = vld [vmem:[%s1 + $0x14] sm:$0xf]
      %v248 = vld [vmem:[%s1 + $0x18] sm:$0xf]
      %v249 = vld [vmem:[%s1 + $0x1c] sm:$0xf]
      %v250 = vld [vmem:[%s1 + $0x20] sm:$0xf]
      %v251 = vld [vmem:[%s1 + $0x24] sm:$0xf]
      %v252 = vld [vmem:[%s1 + $0x28] sm:$0xf]
      %v253 = vld [vmem:[%s1 + $0x2c] sm:$0xf]
      %v254 = vld [vmem:[%s1 + $0x30] sm:$0xf]
      %v255 = vld [vmem:[%s1 + $0x34] sm:$0xf]
      %v256 = vld [vmem:[%s1 + $0x38] sm:$0xf]
      %v257 = vld [vmem:[%s1 + $0x3c] sm:$0xf]
      %v258 = vld [vmem:[%s1 + $0x40] sm:$0xf]
      %v259 = vld [vmem:[%s1 + $0x44] sm:$0xf]
      %v260 = vld [vmem:[%s1 + $0x48] sm:$0xf]
      %v261 = vld [vmem:[%s1 + $0x4c] sm:$0xf]
      %v262 = vld [vmem:[%s1 + $0x50] sm:$0xf]
      %v263 = vld [vmem:[%s1 + $0x54] sm:$0xf]
      %v264 = vld [vmem:[%s1 + $0x58] sm:$0xf]
      %v265 = vld [vmem:[%s1 + $0x5c] sm:$0xf]
      %v266 = vld [vmem:[%s1 + $0x60] sm:$0xf]
      %v267 = vld [vmem:[%s1 + $0x64] sm:$0xf]
      %v268 = vld [vmem:[%s1 + $0x68] sm:$0xf]
      %v269 = vld [vmem:[%s1 + $0x6c] sm:$0xf]
      %v270 = vld [vmem:[%s1 + $0x70] sm:$0xf]
      %v271 = vld [vmem:[%s1 + $0x74] sm:$0xf]
      %v272 = vld [vmem:[%s1 + $0x78] sm:$0xf]
      %v273 = vld [vmem:[%s1 + $0x7c] sm:$0xf]
      %v274 = vld [vmem:[%s1 + $0x80] sm:$0xf]
      %v275 = vld [vmem:[%s1 + $0x84] sm:$0xf]
      %v276 = vld [vmem:[%s1 + $0x88] sm:$0xf]
      %v277 = vld [vmem:[%s1 + $0x8c] sm:$0xf]
      %v278 = vld [vmem:[%s1 + $0x90] sm:$0xf]
      %v279 = vld [vmem:[%s1 + $0x94] sm:$0xf]
      %v280 = vld [vmem:[%s1 + $0x98] sm:$0xf]
      %v281 = vld [vmem:[%s1 + $0x9c] sm:$0xf]
      %v282 = vld [vmem:[%s1 + $0xa0] sm:$0xf]
      %v283 = vld [vmem:[%s1 + $0xa4] sm:$0xf]
      %v284 = vld [vmem:[%s1 + $0xa8] sm:$0xf]
      %v285 = vld [vmem:[%s1 + $0xac] sm:$0xf]
      %v286 = vld [vmem:[%s1 + $0xb0] sm:$0xf]
      %v287 = vld [vmem:[%s1 + $0xb4] sm:$0xf]
      %v288 = vld [vmem:[%s1 + $0xb8] sm:$0xf]
      %v289 = vld [vmem:[%s1 + $0xbc] sm:$0xf]
      %v290 = vld [vmem:[%s1 + $0xc0] sm:$0xf]
      %v291 = vld [vmem:[%s1 + $0xc4] sm:$0xf]
      %v312 = vunpack.c.l.b16 %v222
      %v313 = vunpack.c.h.b16 %v222
      %v314 = vunpack.c.l.b16 %v223
      %v315 = vunpack.c.h.b16 %v223
      %v316 = vunpack.c.l.b16 %v224
      %v317 = vunpack.c.h.b16 %v224
      %v318 = vunpack.c.l.b16 %v225
      %v319 = vunpack.c.h.b16 %v225
      %v320 = vunpack.c.l.b16 %v226
      %v321 = vunpack.c.h.b16 %v226
      %v322 = vunpack.c.l.b16 %v227
      %v323 = vunpack.c.h.b16 %v227
      %v324 = vunpack.c.l.b16 %v228
      %v325 = vunpack.c.h.b16 %v228
      %v326 = vunpack.c.l.b16 %v229
      %v327 = vunpack.c.h.b16 %v229
      %v328 = vunpack.c.l.b16 %v230
      %v329 = vunpack.c.h.b16 %v230
      %v330 = vunpack.c.l.b16 %v231
      %v331 = vunpack.c.h.b16 %v231
      %v332 = vunpack.c.l.b16 %v232
      %v333 = vunpack.c.h.b16 %v232
      %v334 = vunpack.c.l.b16 %v233
      %v335 = vunpack.c.h.b16 %v233
      %v336 = vunpack.c.l.b16 %v234
      %v337 = vunpack.c.h.b16 %v234
      %v338 = vunpack.c.l.b16 %v235
      %v339 = vunpack.c.h.b16 %v235
      %v340 = vunpack.c.l.b16 %v236
      %v341 = vunpack.c.h.b16 %v236
      %v342 = vunpack.c.l.b16 %v237
      %v343 = vunpack.c.h.b16 %v237
      %v344 = vunpack.c.l.b16 %v238
      %v345 = vunpack.c.h.b16 %v238
      %v346 = vunpack.c.l.b16 %v239
      %v347 = vunpack.c.h.b16 %v239
      %v348 = vunpack.c.l.b16 %v240
      %v349 = vunpack.c.h.b16 %v240
      %v350 = vunpack.c.l.b16 %v241
      %v351 = vunpack.c.h.b16 %v241
      %v352 = vpack.c.b16 %v316, %v312
      %v353 = vpack.c.b16 %v317, %v313
      %v354 = vpack.c.b16 %v318, %v314
      %v355 = vpack.c.b16 %v319, %v315
      %v356 = vpack.c.b16 %v324, %v320
      %v357 = vpack.c.b16 %v325, %v321
      %v358 = vpack.c.b16 %v326, %v322
      %v359 = vpack.c.b16 %v327, %v323
      %v360 = vpack.c.b16 %v332, %v328
      %v361 = vpack.c.b16 %v333, %v329
      %v362 = vpack.c.b16 %v334, %v330
      %v363 = vpack.c.b16 %v335, %v331
      %v364 = vpack.c.b16 %v340, %v336
      %v365 = vpack.c.b16 %v341, %v337
      %v366 = vpack.c.b16 %v342, %v338
      %v367 = vpack.c.b16 %v343, %v339
      %v368 = vpack.c.b16 %v348, %v344
      %v369 = vpack.c.b16 %v349, %v345
      %v370 = vpack.c.b16 %v350, %v346
      %v371 = vpack.c.b16 %v351, %v347
      %v437 = vunpack.c.l.b16 %v242
      %v438 = vunpack.c.l.b16 %v243
      %v439 = vunpack.c.l.b16 %v244
      %v440 = vunpack.c.l.b16 %v245
      %v441 = vunpack.c.l.b16 %v246
      %v442 = vunpack.c.l.b16 %v247
      %v443 = vunpack.c.l.b16 %v248
      %v444 = vunpack.c.l.b16 %v249
      %v445 = vunpack.c.l.b16 %v250
      %v446 = vunpack.c.l.b16 %v251
      %v447 = vunpack.c.l.b16 %v252
      %v448 = vunpack.c.l.b16 %v253
      %v449 = vunpack.c.l.b16 %v254
      %v450 = vunpack.c.l.b16 %v255
      %v451 = vunpack.c.l.b16 %v256
      %v452 = vunpack.c.l.b16 %v257
      %v453 = vunpack.c.l.b16 %v258
      %v454 = vunpack.c.l.b16 %v259
      %v455 = vunpack.c.l.b16 %v260
      %v456 = vunpack.c.l.b16 %v261
      %v457 = vunpack.c.l.b16 %v262
      %v458 = vunpack.c.l.b16 %v263
      %v459 = vunpack.c.l.b16 %v264
      %v460 = vunpack.c.l.b16 %v265
      %v461 = vunpack.c.l.b16 %v266
      %v462 = vunpack.c.l.b16 %v267
      %v463 = vunpack.c.l.b16 %v268
      %v464 = vunpack.c.l.b16 %v269
      %v465 = vunpack.c.l.b16 %v270
      %v466 = vunpack.c.l.b16 %v271
      %v467 = vunpack.c.l.b16 %v272
      %v468 = vunpack.c.l.b16 %v273
      %v469 = vunpack.c.l.b16 %v274
      %v470 = vunpack.c.l.b16 %v275
      %v471 = vunpack.c.l.b16 %v276
      %v472 = vunpack.c.l.b16 %v277
      %v473 = vunpack.c.l.b16 %v278
      %v474 = vunpack.c.l.b16 %v279
      %v475 = vunpack.c.l.b16 %v280
      %v476 = vunpack.c.l.b16 %v281
      %v477 = vunpack.c.l.b16 %v282
      %v478 = vunpack.c.l.b16 %v283
      %v479 = vunpack.c.l.b16 %v284
      %v480 = vunpack.c.l.b16 %v285
      %v481 = vunpack.c.l.b16 %v286
      %v482 = vunpack.c.l.b16 %v287
      %v483 = vunpack.c.l.b16 %v288
      %v484 = vunpack.c.l.b16 %v289
      %v485 = vunpack.c.l.b16 %v290
      %v486 = vunpack.c.l.b16 %v291
      %v487 = vpack.c.b16 %v438, %v437
      %v488 = vpack.c.b16 %v440, %v439
      %v489 = vpack.c.b16 %v442, %v441
      %v490 = vpack.c.b16 %v444, %v443
      %v491 = vpack.c.b16 %v446, %v445
      %v492 = vpack.c.b16 %v448, %v447
      %v493 = vpack.c.b16 %v450, %v449
      %v494 = vpack.c.b16 %v452, %v451
      %v495 = vpack.c.b16 %v454, %v453
      %v496 = vpack.c.b16 %v456, %v455
      %v497 = vpack.c.b16 %v458, %v457
      %v498 = vpack.c.b16 %v460, %v459
      %v499 = vpack.c.b16 %v462, %v461
      %v500 = vpack.c.b16 %v464, %v463
      %v501 = vpack.c.b16 %v466, %v465
      %v502 = vpack.c.b16 %v468, %v467
      %v503 = vpack.c.b16 %v470, %v469
      %v504 = vpack.c.b16 %v472, %v471
      %v505 = vpack.c.b16 %v474, %v473
      %v506 = vpack.c.b16 %v476, %v475
      %v507 = vpack.c.b16 %v478, %v477
      %v508 = vpack.c.b16 %v480, %v479
      %v509 = vpack.c.b16 %v482, %v481
      %v510 = vpack.c.b16 %v484, %v483
      %v511 = vpack.c.b16 %v486, %v485
      %vm537 = vcmask 130048
      %v539 = vsel %vm537, %v355, 0
      %v542 = vsel %vm537, %v359, 0
      %v545 = vsel %vm537, %v363, 0
      %v548 = vsel %vm537, %v367, 0
      %v551 = vsel %vm537, %v371, 0
      %553 = vmatprep.subr.bf16.mxu0 0
      %554 = vmatpush1.bf16.msra.mxu0 %v487
      %555 = vmatprep.subr.bf16.mxu0 0
      %556 = vmatpush1.bf16.msra.mxu0 %v488
      %557 = vmatprep.subr.bf16.mxu0 0
      %558 = vmatpush1.bf16.msra.mxu0 %v489
      %559 = vmatprep.subr.bf16.mxu0 0
      %560 = vmatpush1.bf16.msra.mxu0 %v490
      %561 = vmatprep.subr.bf16.mxu0 0
      %562 = vmatpush1.bf16.msra.mxu0 %v491
      %563 = vmatprep.subr.bf16.mxu0 0
      %564 = vmatpush1.bf16.msra.mxu0 %v492
      %565 = vmatprep.subr.bf16.mxu0 0
      %566 = vmatpush1.bf16.msra.mxu0 %v493
      %567 = vmatprep.subr.bf16.mxu0 0
      %568 = vmatpush1.bf16.msra.mxu0 %v494
      %569 = vmatprep.subr.bf16.mxu0 0
      %570 = vmatpush1.bf16.msra.mxu0 %v495
      %571 = vmatprep.subr.bf16.mxu0 0
      %572 = vmatpush1.bf16.msra.mxu0 %v496
      %573 = vmatprep.subr.bf16.mxu0 0
      %574 = vmatpush1.bf16.msra.mxu0 %v497
      %575 = vmatprep.subr.bf16.mxu0 0
      %576 = vmatpush1.bf16.msra.mxu0 %v498
      %577 = vmatprep.subr.bf16.mxu0 0
      %578 = vmatpush1.bf16.msra.mxu0 %v499
      %579 = vmatprep.subr.bf16.mxu0 0
      %580 = vmatpush1.bf16.msra.mxu0 %v500
      %581 = vmatprep.subr.bf16.mxu0 0
      %582 = vmatpush1.bf16.msra.mxu0 %v501
      %583 = vmatprep.subr.bf16.mxu0 0
      %584 = vmatpush1.bf16.msra.mxu0 %v502
      %585 = vmatprep.mubr.bf16.mxu0 %v353
      %586 = vmatmul.mubr.bf16.gmra.mrb[0].mxu0 %v352
      %v587 = vpop.f32.mrb[0].mxu0
      %v588 = vadd.f32 0.0, %v587
      %v589 = vpop.f32.mrb[0].mxu0
      %v590 = vpop.f32.mrb[0].mxu0
      %v591 = vadd.f32 0.0, %v590
      %v592 = vpop.f32.mrb[0].mxu0
      %593 = vmatprep.mubr.bf16.mxu0 %v357
      %594 = vmatmul.mubr.bf16.gmra.mrb[0].mxu0 %v356
      %v595 = vpop.f32.mrb[0].mxu0
      %v596 = vadd.f32 0.0, %v595
      %v597 = vpop.f32.mrb[0].mxu0
      %v598 = vpop.f32.mrb[0].mxu0
      %v599 = vadd.f32 0.0, %v598
      %v600 = vpop.f32.mrb[0].mxu0
      %601 = vmatprep.mubr.bf16.mxu0 %v361
      %602 = vmatmul.mubr.bf16.gmra.mrb[0].mxu0 %v360
      %v603 = vpop.f32.mrb[0].mxu0
      %v604 = vadd.f32 0.0, %v603
      %v605 = vpop.f32.mrb[0].mxu0
      %v606 = vpop.f32.mrb[0].mxu0
      %v607 = vadd.f32 0.0, %v606
      %v608 = vpop.f32.mrb[0].mxu0
      %609 = vmatprep.mubr.bf16.mxu0 %v365
      %610 = vmatmul.mubr.bf16.gmra.mrb[0].mxu0 %v364
      %v611 = vpop.f32.mrb[0].mxu0
      %v612 = vadd.f32 0.0, %v611
      %v613 = vpop.f32.mrb[0].mxu0
      %v614 = vpop.f32.mrb[0].mxu0
      %v615 = vadd.f32 0.0, %v614
      %v616 = vpop.f32.mrb[0].mxu0
      %617 = vmatprep.mubr.bf16.mxu0 %v369
      %618 = vmatmul.mubr.bf16.gmra.mrb[0].mxu0 %v368
      %v619 = vpop.f32.mrb[0].mxu0
      %v620 = vadd.f32 0.0, %v619
      %v621 = vpop.f32.mrb[0].mxu0
      %v622 = vpop.f32.mrb[0].mxu0
      %v623 = vadd.f32 0.0, %v622
      %v624 = vpop.f32.mrb[0].mxu0
      %625 = vdwg.mxu0
      %626 = vmatprep.subr.bf16.mxu0 0
      %627 = vmatpush1.bf16.msra.mxu0 %v503
      %628 = vmatprep.subr.bf16.mxu0 0
      %629 = vmatpush1.bf16.msra.mxu0 %v504
      %630 = vmatprep.subr.bf16.mxu0 0
      %631 = vmatpush1.bf16.msra.mxu0 %v505
      %632 = vmatprep.subr.bf16.mxu0 0
      %633 = vmatpush1.bf16.msra.mxu0 %v506
      %634 = vmatprep.subr.bf16.mxu0 0
      %635 = vmatpush1.bf16.msra.mxu0 %v507
      %636 = vmatprep.subr.bf16.mxu0 0
      %637 = vmatpush1.bf16.msra.mxu0 %v508
      %638 = vmatprep.subr.bf16.mxu0 0
      %639 = vmatpush1.bf16.msra.mxu0 %v509
      %640 = vmatprep.subr.bf16.mxu0 0
      %641 = vmatpush1.bf16.msra.mxu0 %v510
      %642 = vmatprep.subr.bf16.mxu0 0
      %643 = vmatpush1.bf16.msra.mxu0 %v511
      %644 = vmatprep.subr.bf16.mxu0 0
      %645 = vmatpush1.bf16.msra.mxu0 0
      %646 = vmatprep.subr.bf16.mxu0 0
      %647 = vmatpush1.bf16.msra.mxu0 0
      %648 = vmatprep.subr.bf16.mxu0 0
      %649 = vmatpush1.bf16.msra.mxu0 0
      %650 = vmatprep.subr.bf16.mxu0 0
      %651 = vmatpush1.bf16.msra.mxu0 0
      %652 = vmatprep.subr.bf16.mxu0 0
      %653 = vmatpush1.bf16.msra.mxu0 0
      %654 = vmatprep.subr.bf16.mxu0 0
      %655 = vmatpush1.bf16.msra.mxu0 0
      %656 = vmatprep.subr.bf16.mxu0 0
      %657 = vmatpush1.bf16.msra.mxu0 0
      %658 = vmatprep.mubr.bf16.mxu0 %v539
      %659 = vmatmul.mubr.bf16.gmra.mrb[0].mxu0 %v354
      %v660 = vpop.f32.mrb[0].mxu0
      %v661 = vadd.f32 %v588, %v660
      %v662 = vpop.f32.mrb[0].mxu0
      %v663 = vpop.f32.mrb[0].mxu0
      %v664 = vadd.f32 %v591, %v663
      %v665 = vpop.f32.mrb[0].mxu0
      %666 = vmatprep.mubr.bf16.mxu0 %v542
      %667 = vmatmul.mubr.bf16.gmra.mrb[0].mxu0 %v358
      %v668 = vpop.f32.mrb[0].mxu0
      %v669 = vadd.f32 %v596, %v668
      %v670 = vpop.f32.mrb[0].mxu0
      %v671 = vpop.f32.mrb[0].mxu0
      %v672 = vadd.f32 %v599, %v671
      %v673 = vpop.f32.mrb[0].mxu0
      %674 = vmatprep.mubr.bf16.mxu0 %v545
      %675 = vmatmul.mubr.bf16.gmra.mrb[0].mxu0 %v362
      %v676 = vpop.f32.mrb[0].mxu0
      %v677 = vadd.f32 %v604, %v676
      %v678 = vpop.f32.mrb[0].mxu0
      %v679 = vpop.f32.mrb[0].mxu0
      %v680 = vadd.f32 %v607, %v679
      %v681 = vpop.f32.mrb[0].mxu0
      %682 = vmatprep.mubr.bf16.mxu0 %v548
      %683 = vmatmul.mubr.bf16.gmra.mrb[0].mxu0 %v366
      %v684 = vpop.f32.mrb[0].mxu0
      %v685 = vadd.f32 %v612, %v684
      %v686 = vpop.f32.mrb[0].mxu0
      %v687 = vpop.f32.mrb[0].mxu0
      %v688 = vadd.f32 %v615, %v687
      %v689 = vpop.f32.mrb[0].mxu0
      %690 = vmatprep.mubr.bf16.mxu0 %v551
      %691 = vmatmul.mubr.bf16.gmra.mrb[0].mxu0 %v370
      %v692 = vpop.f32.mrb[0].mxu0
      %v693 = vadd.f32 %v620, %v692
      %v694 = vpop.f32.mrb[0].mxu0
      %v695 = vpop.f32.mrb[0].mxu0
      %v696 = vadd.f32 %v623, %v695
      %v697 = vpop.f32.mrb[0].mxu0
      %698 = vdwg.mxu0
      %p699 = scmp.eq.s32.totalorder %s19, 0
      %p700 = scmp.eq.s32.totalorder %s20, 0
      %p701 = pnand %p699, %p700
      %p702 = pneg %p701
      // Predicated region
      $region37: #{dqn_forward.5} parent=35 // pred_check
        _
      $region38: #{dqn_forward.5} parent=35 // pred_check_branch
        %704 = sbr.rel (%p701) target = $region40
      $region39: #{dqn_forward.5} parent=35 // pred_region
        %705 = vst [vmem:[#allocation2] sm:$0x1] 0.0
        %706 = vst [vmem:[#allocation3] sm:$0x1] 0.0
      $region40: #{dqn_forward.5} parent=35 // pred_fallthru
        _
      // Predicated region
      $region41: #{dqn_forward.5} parent=35 // pred_check
        %p707 = pneg %p699
      $region42: #{dqn_forward.5} parent=35 // pred_check_branch
        %709 = sbr.rel (%p707) target = $region44
      $region43: #{dqn_forward.5} parent=35 // pred_region
        %v710 = vld [vmem:[#allocation2] sm:$0x1]
        %v711 = vadd.f32 %v661, %v664
        %v712 = vadd.f32 %v711, %v669
        %v713 = vadd.f32 %v712, %v672
        %v714 = vadd.f32 %v713, %v677
        %v715 = vadd.f32 %v714, %v680
        %v716 = vadd.f32 %v715, %v685
        %v717 = vadd.f32 %v716, %v688
        %v718 = vadd.f32 %v717, %v693
        %v719 = vadd.f32 %v718, %v696
        %v720 = vrot.slane %v719, 4
        %v721 = vadd.f32 %v719, %v720
        %v722 = vrot.slane %v721, 2
        %v723 = vadd.f32 %v721, %v722
        %v724 = vrot.slane %v723, 1
        %v725 = vadd.f32 %v723, %v724
        %v726 = vadd.f32 %v710, %v725
        %727 = vst [vmem:[#allocation2] sm:$0x1] %v726
        %v728 = vld [vmem:[#allocation3] sm:$0x1]
        %v729 = vmul.f32 %v661, %v661
        %v730 = vmul.f32 %v664, %v664
        %v731 = vmul.f32 %v669, %v669
        %v732 = vmul.f32 %v672, %v672
        %v733 = vmul.f32 %v677, %v677
        %v734 = vmul.f32 %v680, %v680
        %v735 = vmul.f32 %v685, %v685
        %v736 = vmul.f32 %v688, %v688
        %v737 = vmul.f32 %v693, %v693
        %v738 = vmul.f32 %v696, %v696
        %v739 = vadd.f32 %v729, %v730
        %v740 = vadd.f32 %v739, %v731
        %v741 = vadd.f32 %v740, %v732
        %v742 = vadd.f32 %v741, %v733
        %v743 = vadd.f32 %v742, %v734
        %v744 = vadd.f32 %v743, %v735
        %v745 = vadd.f32 %v744, %v736
        %v746 = vadd.f32 %v745, %v737
        %v747 = vadd.f32 %v746, %v738
        %v748 = vrot.slane %v747, 4
        %v749 = vadd.f32 %v747, %v748
        %v750 = vrot.slane %v749, 2
        %v751 = vadd.f32 %v749, %v750
        %v752 = vrot.slane %v751, 1
        %v753 = vadd.f32 %v751, %v752
        %v754 = vadd.f32 %v728, %v753
        %755 = vst [vmem:[#allocation3] sm:$0x1] %v754
      $region44: #{dqn_forward.5} parent=35 // pred_fallthru
        _
      %p756 = scmp.eq.s32.totalorder %s19, 1
      %p757 = pnand %p756, %p700
      %p758 = pneg %p757
      // Predicated region
      $region45: #{dqn_forward.5} parent=35 // pred_check
        _
      $region46: #{dqn_forward.5} parent=35 // pred_check_branch
        %760 = sbr.rel (%p757) target = $region48
      $region47: #{dqn_forward.5} parent=35 // pred_region
        %v761 = vld [vmem:[#allocation2] sm:$0x1]
        %v762 = vmul.f32 %v761, 0.013888889
        %v763 = vld [vmem:[#allocation3] sm:$0x1]
        %v764 = vmul.f32 %v763, 0.013888889
        %v765 = vmul.f32 %v762, %v762
        %v766 = vsub.f32 %v764, %v765
        %v767 = vmax.f32 %v766, 0.0
        %v768 = vld [vmem:[%s2] sm:$0x1]
        %v769 = vadd.f32 %v767, 1e-05
        %v770 = vrsqrt.pop %v769
        %v771 = vmul.f32 %v768, %v768
        %v772 = vmul.f32 %v771, %v767
        %v773 = vmul.f32 %v770, %v770
        %v774 = vmul.f32 %v772, %v773
        %v775 = vadd.f32 %v774, 1e-05
        %v776 = vrsqrt.pop %v775
        %v777 = vmul.f32 %v771, %v770
        %v778 = vmul.f32 %v777, %v776
        %779 = vst [vmem:[#allocation4] sm:$0x1] %v778
        %v780 = vld [vmem:[%s3] sm:$0x1]
        %v781 = vmul.f32 %v762, %v778
        %v782 = vsub.f32 %v780, %v781
        %783 = vst [vmem:[#allocation5] sm:$0x1] %v782
      $region48: #{dqn_forward.5} parent=35 // pred_fallthru
        _
      // Predicated region
      $region49: #{dqn_forward.5} parent=35 // pred_check
        %p784 = pneg %p756
      $region50: #{dqn_forward.5} parent=35 // pred_check_branch
        %786 = sbr.rel (%p784) target = $region52
      $region51: #{dqn_forward.5} parent=35 // pred_region
        %v787 = vld [vmem:[#allocation4] sm:$0x1]
        %v789 = vlaneseq
        %v790 = vshrl.u32 %v789, 7
        %v791 = vsub.s32 0, %v790
        %v792 = vrot.slane %v787, %v791
        %v794 = vmul.f32 %v661, %v792
        %v795 = vmul.f32 %v664, %v792
        %v796 = vmul.f32 %v669, %v792
        %v797 = vmul.f32 %v672, %v792
        %v798 = vmul.f32 %v677, %v792
        %v799 = vmul.f32 %v680, %v792
        %v800 = vmul.f32 %v685, %v792
        %v801 = vmul.f32 %v688, %v792
        %v802 = vmul.f32 %v693, %v792
        %v803 = vmul.f32 %v696, %v792
        %v804 = vld [vmem:[#allocation5] sm:$0x1]
        %v806 = vlaneseq
        %v807 = vshrl.u32 %v806, 7
        %v808 = vsub.s32 0, %v807
        %v809 = vrot.slane %v804, %v808
        %v811 = vadd.f32 %v794, %v809
        %v812 = vadd.f32 %v795, %v809
        %v813 = vadd.f32 %v796, %v809
        %v814 = vadd.f32 %v797, %v809
        %v815 = vadd.f32 %v798, %v809
        %v816 = vadd.f32 %v799, %v809
        %v817 = vadd.f32 %v800, %v809
        %v818 = vadd.f32 %v801, %v809
        %v819 = vadd.f32 %v802, %v809
        %v820 = vadd.f32 %v803, %v809
        %v821 = vmax.f32 %v811, 0.0
        %v822 = vmax.f32 %v812, 0.0
        %v823 = vmax.f32 %v813, 0.0
        %v824 = vmax.f32 %v814, 0.0
        %v825 = vmax.f32 %v815, 0.0
        %v826 = vmax.f32 %v816, 0.0
        %v827 = vmax.f32 %v817, 0.0
        %v828 = vmax.f32 %v818, 0.0
        %v829 = vmax.f32 %v819, 0.0
        %v830 = vmax.f32 %v820, 0.0
        %v831 = vpack.c.bf16 %v822, %v821
        %v832 = vpack.c.bf16 %v824, %v823
        %v833 = vpack.c.bf16 %v826, %v825
        %v834 = vpack.c.bf16 %v828, %v827
        %v835 = vpack.c.bf16 %v830, %v829
        %v841 = vunpack.c.l.b16 %v831
        %v842 = vunpack.c.h.b16 %v831
        %v843 = vunpack.c.l.b16 %v832
        %v844 = vunpack.c.h.b16 %v832
        %v845 = vunpack.c.l.b16 %v833
        %v846 = vunpack.c.h.b16 %v833
        %v847 = vunpack.c.l.b16 %v834
        %v848 = vunpack.c.h.b16 %v834
        %v849 = vunpack.c.l.b16 %v835
        %v850 = vunpack.c.h.b16 %v835
        %v851 = vpack.c.b16 %v841, %v841
        %v852 = vpack.c.b16 %v842, %v842
        %v853 = vpack.c.b16 %v843, %v843
        %v854 = vpack.c.b16 %v844, %v844
        %v855 = vpack.c.b16 %v845, %v845
        %v856 = vpack.c.b16 %v846, %v846
        %v857 = vpack.c.b16 %v847, %v847
        %v858 = vpack.c.b16 %v848, %v848
        %v859 = vpack.c.b16 %v849, %v849
        %v860 = vpack.c.b16 %v850, %v850
        %871 = vst [vmem:[%s218] sm:$0xf] %v851
        %872 = vst [vmem:[%s218 + $0x4] sm:$0xf] %v852
        %873 = vst [vmem:[%s218 + $0x8] sm:$0xf] %v853
        %874 = vst [vmem:[%s218 + $0xc] sm:$0xf] %v854
        %875 = vst [vmem:[%s218 + $0x10] sm:$0xf] %v855
        %876 = vst [vmem:[%s218 + $0x14] sm:$0xf] %v856
        %877 = vst [vmem:[%s218 + $0x18] sm:$0xf] %v857
        %878 = vst [vmem:[%s218 + $0x1c] sm:$0xf] %v858
        %879 = vst [vmem:[%s218 + $0x20] sm:$0xf] %v859
        %880 = vst [vmem:[%s218 + $0x24] sm:$0xf] %v860
      $region52: #{dqn_forward.5} parent=35 // pred_fallthru
        _
      %s881 = smul.u32 %s20, %s19
      %s882 = smul.u32 10, %s881
      %p883 = scmp.lt.s32.totalorder %s882, 9
      %s884 = scalar_select %p883, %s882, 9
      %s885 = smul.addr %s884, 4
      %s886 = scalar_lea.vmem %s4, %s885
      // Predicated region
      $region53: #{dqn_forward.5} parent=35 // pred_check
        %p887 = pneg %p136
      $region54: #{dqn_forward.5} parent=35 // pred_check_branch
        %889 = sbr.rel (%p887) target = $region56
      $region55: #{dqn_forward.5} parent=35 // pred_region
        %s890 = smul.u32 %s20, %s19
        %s891 = smul.u32 10, %s890
      $region56: #{dqn_forward.5} parent=35 // pred_fallthru
        _
    $region36: #{dqn_forward.5} parent=5 // pred_fallthru
      _
    %p892 = scmp.le.s32.totalorder 2, %s10
    // Predicated region
    $region57: #{dqn_forward.5} parent=5 // pred_check
      %p893 = pneg %p892
    $region58: #{dqn_forward.5} parent=5 // pred_check_branch
      %895 = sbr.rel (%p893) target = $region60
    $region59: #{dqn_forward.5} parent=5 // pred_region
      %s896 = ssub.s32 %s10, 2
      // Predicated region
      $region61: #{dqn_forward.5} parent=59 // pred_check
        %p897 = pneg %p142
      $region62: #{dqn_forward.5} parent=59 // pred_check_branch
        %899 = sbr.rel (%p897) target = $region64
      $region63: #{dqn_forward.5} parent=59 // pred_region
        %s900 = smul.u32 %s22, %s21
        %s901 = smul.u32 10, %s900
        %p902 = scmp.lt.s32.totalorder %s901, 9
        %s903 = scalar_select %p902, %s901, 9
        %s904 = smul.addr %s903, 4
        %s905 = scalar_lea.vmem %s4, %s904
      $region64: #{dqn_forward.5} parent=59 // pred_fallthru
        _
    $region60: #{dqn_forward.5} parent=5 // pred_fallthru
      _
  $region6: #{dqn_forward.5} parent=0 // loop_footer
    %s14 = sadd.s32 1, %s10
  $region7: #{dqn_forward.5} parent=0 // loop_footer_branch
    %9 = sbr.rel target = $region3
  $region8: #{dqn_forward.5} parent=0 // loop_exit
    _

// kernel: dqn_forward.7
$region0: #{dqn_forward.7}
  #allocation0 [shape = 'u32[]', space=smem, size = 0x4, offset = 0x4, fixed_abs, tag = 'smem constant byte address 0x4 - core index']
  #allocation1 [shape = 'u32[144,128]{1,0:T(1,128)}', space=vmem, size = 0x12000, scoped, tag = 'internal scratch']
  %s0 = inlined_call_operand.vmem [shape: bf16[8,512], index: 0, kind: input, shape index: {}]
  %s1 = inlined_call_operand.vmem [shape: bf16[512,128], index: 1, kind: input, shape index: {}]
  %s2 = inlined_call_operand.vmem [shape: f32[1,128], index: 2, kind: input, shape index: {}]
  %s3 = inlined_call_operand.vmem [shape: f32[8,128], index: 3, kind: output, shape index: {}]
  %s4 = sld [smem:[#allocation0]]
  $region22: #{dqn_forward.7} parent=0
    _
  %s6 = ssub.s32 1, %s4
  %s7 = scalar_select 0, %s6, %s4
  // Predicated region
  $region2: #{dqn_forward.7} parent=0 // pred_check
    _
  $region3: #{dqn_forward.7} parent=0 // pred_check_branch
    %9 = sbr.rel (0) target = $region5
  $region4: #{dqn_forward.7} parent=0 // pred_region
    _
  $region5: #{dqn_forward.7} parent=0 // pred_fallthru
    _
  // Predicated region
  $region6: #{dqn_forward.7} parent=0 // pred_check
    _
  $region7: #{dqn_forward.7} parent=0 // pred_check_branch
    %11 = sbr.rel (0) target = $region9
  $region8: #{dqn_forward.7} parent=0 // pred_region
    _
  $region9: #{dqn_forward.7} parent=0 // pred_fallthru
    _
  // Predicated region
  $region10: #{dqn_forward.7} parent=0 // pred_check
    _
  $region11: #{dqn_forward.7} parent=0 // pred_check_branch
    %13 = sbr.rel (0) target = $region13
  $region12: #{dqn_forward.7} parent=0 // pred_region
    _
  $region13: #{dqn_forward.7} parent=0 // pred_fallthru
    _
  %v15 = vld [vmem:[%s0] sm:$0xff]
  %v16 = vld [vmem:[%s0 + $0x8] sm:$0xff]
  %v17 = vld [vmem:[%s1] sm:$0xf]
  %v18 = vld [vmem:[%s1 + $0x4] sm:$0xf]
  %v19 = vld [vmem:[%s1 + $0x8] sm:$0xf]
  %v20 = vld [vmem:[%s1 + $0xc] sm:$0xf]
  %v21 = vld [vmem:[%s1 + $0x10] sm:$0xf]
  %v22 = vld [vmem:[%s1 + $0x14] sm:$0xf]
  %v23 = vld [vmem:[%s1 + $0x18] sm:$0xf]
  %v24 = vld [vmem:[%s1 + $0x1c] sm:$0xf]
  %v25 = vld [vmem:[%s1 + $0x20] sm:$0xf]
  %v26 = vld [vmem:[%s1 + $0x24] sm:$0xf]
  %v27 = vld [vmem:[%s1 + $0x28] sm:$0xf]
  %v28 = vld [vmem:[%s1 + $0x2c] sm:$0xf]
  %v29 = vld [vmem:[%s1 + $0x30] sm:$0xf]
  %v30 = vld [vmem:[%s1 + $0x34] sm:$0xf]
  %v31 = vld [vmem:[%s1 + $0x38] sm:$0xf]
  %v32 = vld [vmem:[%s1 + $0x3c] sm:$0xf]
  %v33 = vld [vmem:[%s1 + $0x40] sm:$0xf]
  %v34 = vld [vmem:[%s1 + $0x44] sm:$0xf]
  %v35 = vld [vmem:[%s1 + $0x48] sm:$0xf]
  %v36 = vld [vmem:[%s1 + $0x4c] sm:$0xf]
  %v37 = vld [vmem:[%s1 + $0x50] sm:$0xf]
  %v38 = vld [vmem:[%s1 + $0x54] sm:$0xf]
  %v39 = vld [vmem:[%s1 + $0x58] sm:$0xf]
  %v40 = vld [vmem:[%s1 + $0x5c] sm:$0xf]
  %v41 = vld [vmem:[%s1 + $0x60] sm:$0xf]
  %v42 = vld [vmem:[%s1 + $0x64] sm:$0xf]
  %v43 = vld [vmem:[%s1 + $0x68] sm:$0xf]
  %v44 = vld [vmem:[%s1 + $0x6c] sm:$0xf]
  %v45 = vld [vmem:[%s1 + $0x70] sm:$0xf]
  %v46 = vld [vmem:[%s1 + $0x74] sm:$0xf]
  %v47 = vld [vmem:[%s1 + $0x78] sm:$0xf]
  %v48 = vld [vmem:[%s1 + $0x7c] sm:$0xf]
  %v49 = vld [vmem:[%s1 + $0x80] sm:$0xf]
  %v50 = vld [vmem:[%s1 + $0x84] sm:$0xf]
  %v51 = vld [vmem:[%s1 + $0x88] sm:$0xf]
  %v52 = vld [vmem:[%s1 + $0x8c] sm:$0xf]
  %v53 = vld [vmem:[%s1 + $0x90] sm:$0xf]
  %v54 = vld [vmem:[%s1 + $0x94] sm:$0xf]
  %v55 = vld [vmem:[%s1 + $0x98] sm:$0xf]
  %v56 = vld [vmem:[%s1 + $0x9c] sm:$0xf]
  %v57 = vld [vmem:[%s1 + $0xa0] sm:$0xf]
  %v58 = vld [vmem:[%s1 + $0xa4] sm:$0xf]
  %v59 = vld [vmem:[%s1 + $0xa8] sm:$0xf]
  %v60 = vld [vmem:[%s1 + $0xac] sm:$0xf]
  %v61 = vld [vmem:[%s1 + $0xb0] sm:$0xf]
  %v62 = vld [vmem:[%s1 + $0xb4] sm:$0xf]
  %v63 = vld [vmem:[%s1 + $0xb8] sm:$0xf]
  %v64 = vld [vmem:[%s1 + $0xbc] sm:$0xf]
  %v65 = vld [vmem:[%s1 + $0xc0] sm:$0xf]
  %v66 = vld [vmem:[%s1 + $0xc4] sm:$0xf]
  %v67 = vld [vmem:[%s1 + $0xc8] sm:$0xf]
  %v68 = vld [vmem:[%s1 + $0xcc] sm:$0xf]
  %v69 = vld [vmem:[%s1 + $0xd0] sm:$0xf]
  %v70 = vld [vmem:[%s1 + $0xd4] sm:$0xf]
  %v71 = vld [vmem:[%s1 + $0xd8] sm:$0xf]
  %v72 = vld [vmem:[%s1 + $0xdc] sm:$0xf]
  %v73 = vld [vmem:[%s1 + $0xe0] sm:$0xf]
  %v74 = vld [vmem:[%s1 + $0xe4] sm:$0xf]
  %v75 = vld [vmem:[%s1 + $0xe8] sm:$0xf]
  %v76 = vld [vmem:[%s1 + $0xec] sm:$0xf]
  %v77 = vld [vmem:[%s1 + $0xf0] sm:$0xf]
  %v78 = vld [vmem:[%s1 + $0xf4] sm:$0xf]
  %v79 = vld [vmem:[%s1 + $0xf8] sm:$0xf]
  %v80 = vld [vmem:[%s1 + $0xfc] sm:$0xf]
  %v81 = vld [vmem:[%s2] sm:$0x1]
  %v83 = vlaneseq
  %v84 = vshrl.u32 %v83, 7
  %v85 = vsub.s32 0, %v84
  %v86 = vrot.slane %v81, %v85
  %v90 = vunpack.c.l.b16 %v15
  %v91 = vunpack.c.h.b16 %v15
  %v92 = vunpack.c.l.b16 %v16
  %v93 = vunpack.c.h.b16 %v16
  %v94 = vpack.c.b16 %v90, %v90
  %v95 = vpack.c.b16 %v91, %v91
  %v96 = vpack.c.b16 %v92, %v92
  %v97 = vpack.c.b16 %v93, %v93
  %v166 = vunpack.c.l.b16 %v17
  %v167 = vunpack.c.l.b16 %v18
  %v168 = vunpack.c.l.b16 %v19
  %v169 = vunpack.c.l.b16 %v20
  %v170 = vunpack.c.l.b16 %v21
  %v171 = vunpack.c.l.b16 %v22
  %v172 = vunpack.c.l.b16 %v23
  %v173 = vunpack.c.l.b16 %v24
  %v174 = vunpack.c.l.b16 %v25
  %v175 = vunpack.c.l.b16 %v26
  %v176 = vunpack.c.l.b16 %v27
  %v177 = vunpack.c.l.b16 %v28
  %v178 = vunpack.c.l.b16 %v29
  %v179 = vunpack.c.l.b16 %v30
  %v180 = vunpack.c.l.b16 %v31
  %v181 = vunpack.c.l.b16 %v32
  %v182 = vunpack.c.l.b16 %v33
  %v183 = vunpack.c.l.b16 %v34
  %v184 = vunpack.c.l.b16 %v35
  %v185 = vunpack.c.l.b16 %v36
  %v186 = vunpack.c.l.b16 %v37
  %v187 = vunpack.c.l.b16 %v38
  %v188 = vunpack.c.l.b16 %v39
  %v189 = vunpack.c.l.b16 %v40
  %v190 = vunpack.c.l.b16 %v41
  %v191 = vunpack.c.l.b16 %v42
  %v192 = vunpack.c.l.b16 %v43
  %v193 = vunpack.c.l.b16 %v44
  %v194 = vunpack.c.l.b16 %v45
  %v195 = vunpack.c.l.b16 %v46
  %v196 = vunpack.c.l.b16 %v47
  %v197 = vunpack.c.l.b16 %v48
  %v198 = vunpack.c.l.b16 %v49
  %v199 = vunpack.c.l.b16 %v50
  %v200 = vunpack.c.l.b16 %v51
  %v201 = vunpack.c.l.b16 %v52
  %v202 = vunpack.c.l.b16 %v53
  %v203 = vunpack.c.l.b16 %v54
  %v204 = vunpack.c.l.b16 %v55
  %v205 = vunpack.c.l.b16 %v56
  %v206 = vunpack.c.l.b16 %v57
  %v207 = vunpack.c.l.b16 %v58
  %v208 = vunpack.c.l.b16 %v59
  %v209 = vunpack.c.l.b16 %v60
  %v210 = vunpack.c.l.b16 %v61
  %v211 = vunpack.c.l.b16 %v62
  %v212 = vunpack.c.l.b16 %v63
  %v213 = vunpack.c.l.b16 %v64
  %v214 = vunpack.c.l.b16 %v65
  %v215 = vunpack.c.l.b16 %v66
  %v216 = vunpack.c.l.b16 %v67
  %v217 = vunpack.c.l.b16 %v68
  %v218 = vunpack.c.l.b16 %v69
  %v219 = vunpack.c.l.b16 %v70
  %v220 = vunpack.c.l.b16 %v71
  %v221 = vunpack.c.l.b16 %v72
  %v222 = vunpack.c.l.b16 %v73
  %v223 = vunpack.c.l.b16 %v74
  %v224 = vunpack.c.l.b16 %v75
  %v225 = vunpack.c.l.b16 %v76
  %v226 = vunpack.c.l.b16 %v77
  %v227 = vunpack.c.l.b16 %v78
  %v228 = vunpack.c.l.b16 %v79
  %v229 = vunpack.c.l.b16 %v80
  %v230 = vpack.c.b16 %v167, %v166
  %v231 = vpack.c.b16 %v169, %v168
  %v232 = vpack.c.b16 %v171, %v170
  %v233 = vpack.c.b16 %v173, %v172
  %v234 = vpack.c.b16 %v175, %v174
  %v235 = vpack.c.b16 %v177, %v176
  %v236 = vpack.c.b16 %v179, %v178
  %v237 = vpack.c.b16 %v181, %v180
  %v238 = vpack.c.b16 %v183, %v182
  %v239 = vpack.c.b16 %v185, %v184
  %v240 = vpack.c.b16 %v187, %v186
  %v241 = vpack.c.b16 %v189, %v188
  %v242 = vpack.c.b16 %v191, %v190
  %v243 = vpack.c.b16 %v193, %v192
  %v244 = vpack.c.b16 %v195, %v194
  %v245 = vpack.c.b16 %v197, %v196
  %v246 = vpack.c.b16 %v199, %v198
  %v247 = vpack.c.b16 %v201, %v200
  %v248 = vpack.c.b16 %v203, %v202
  %v249 = vpack.c.b16 %v205, %v204
  %v250 = vpack.c.b16 %v207, %v206
  %v251 = vpack.c.b16 %v209, %v208
  %v252 = vpack.c.b16 %v211, %v210
  %v253 = vpack.c.b16 %v213, %v212
  %v254 = vpack.c.b16 %v215, %v214
  %v255 = vpack.c.b16 %v217, %v216
  %v256 = vpack.c.b16 %v219, %v218
  %v257 = vpack.c.b16 %v221, %v220
  %v258 = vpack.c.b16 %v223, %v222
  %v259 = vpack.c.b16 %v225, %v224
  %v260 = vpack.c.b16 %v227, %v226
  %v261 = vpack.c.b16 %v229, %v228
  %294 = vmatprep.subr.bf16.mxu0 0
  %295 = vmatpush1.bf16.msra.mxu0 %v230
  %296 = vmatprep.subr.bf16.mxu0 0
  %297 = vmatpush1.bf16.msra.mxu0 %v231
  %298 = vmatprep.subr.bf16.mxu0 0
  %299 = vmatpush1.bf16.msra.mxu0 %v232
  %300 = vmatprep.subr.bf16.mxu0 0
  %301 = vmatpush1.bf16.msra.mxu0 %v233
  %302 = vmatprep.subr.bf16.mxu0 0
  %303 = vmatpush1.bf16.msra.mxu0 %v234
  %304 = vmatprep.subr.bf16.mxu0 0
  %305 = vmatpush1.bf16.msra.mxu0 %v235
  %306 = vmatprep.subr.bf16.mxu0 0
  %307 = vmatpush1.bf16.msra.mxu0 %v236
  %308 = vmatprep.subr.bf16.mxu0 0
  %309 = vmatpush1.bf16.msra.mxu0 %v237
  %310 = vmatprep.subr.bf16.mxu0 0
  %311 = vmatpush1.bf16.msra.mxu0 %v238
  %312 = vmatprep.subr.bf16.mxu0 0
  %313 = vmatpush1.bf16.msra.mxu0 %v239
  %314 = vmatprep.subr.bf16.mxu0 0
  %315 = vmatpush1.bf16.msra.mxu0 %v240
  %316 = vmatprep.subr.bf16.mxu0 0
  %317 = vmatpush1.bf16.msra.mxu0 %v241
  %318 = vmatprep.subr.bf16.mxu0 0
  %319 = vmatpush1.bf16.msra.mxu0 %v242
  %320 = vmatprep.subr.bf16.mxu0 0
  %321 = vmatpush1.bf16.msra.mxu0 %v243
  %322 = vmatprep.subr.bf16.mxu0 0
  %323 = vmatpush1.bf16.msra.mxu0 %v244
  %324 = vmatprep.subr.bf16.mxu0 0
  %325 = vmatpush1.bf16.msra.mxu0 %v245
  %326 = vmatprep.mubr.bf16.mxu0 %v95
  %327 = vmatmul.mubr.bf16.gmra.mrb[0].mxu0 %v94
  %v328 = vpop.f32.mrb[0].mxu0
  %v329 = vadd.f32 %v86, %v328
  %v330 = vpop.f32.mrb[0].mxu0
  %v331 = vpop.f32.mrb[0].mxu0
  %v332 = vpop.f32.mrb[0].mxu0
  %333 = vdwg.mxu0
  %334 = vmatprep.subr.bf16.mxu0 0
  %335 = vmatpush1.bf16.msra.mxu0 %v246
  %336 = vmatprep.subr.bf16.mxu0 0
  %337 = vmatpush1.bf16.msra.mxu0 %v247
  %338 = vmatprep.subr.bf16.mxu0 0
  %339 = vmatpush1.bf16.msra.mxu0 %v248
  %340 = vmatprep.subr.bf16.mxu0 0
  %341 = vmatpush1.bf16.msra.mxu0 %v249
  %342 = vmatprep.subr.bf16.mxu0 0
  %343 = vmatpush1.bf16.msra.mxu0 %v250
  %344 = vmatprep.subr.bf16.mxu0 0
  %345 = vmatpush1.bf16.msra.mxu0 %v251
  %346 = vmatprep.subr.bf16.mxu0 0
  %347 = vmatpush1.bf16.msra.mxu0 %v252
  %348 = vmatprep.subr.bf16.mxu0 0
  %349 = vmatpush1.bf16.msra.mxu0 %v253
  %350 = vmatprep.subr.bf16.mxu0 0
  %351 = vmatpush1.bf16.msra.mxu0 %v254
  %352 = vmatprep.subr.bf16.mxu0 0
  %353 = vmatpush1.bf16.msra.mxu0 %v255
  %354 = vmatprep.subr.bf16.mxu0 0
  %355 = vmatpush1.bf16.msra.mxu0 %v256
  %356 = vmatprep.subr.bf16.mxu0 0
  %357 = vmatpush1.bf16.msra.mxu0 %v257
  %358 = vmatprep.subr.bf16.mxu0 0
  %359 = vmatpush1.bf16.msra.mxu0 %v258
  %360 = vmatprep.subr.bf16.mxu0 0
  %361 = vmatpush1.bf16.msra.mxu0 %v259
  %362 = vmatprep.subr.bf16.mxu0 0
  %363 = vmatpush1.bf16.msra.mxu0 %v260
  %364 = vmatprep.subr.bf16.mxu0 0
  %365 = vmatpush1.bf16.msra.mxu0 %v261
  %366 = vmatprep.mubr.bf16.mxu0 %v97
  %367 = vmatmul.mubr.bf16.gmra.mrb[0].mxu0 %v96
  %v368 = vpop.f32.mrb[0].mxu0
  %v369 = vadd.f32 %v329, %v368
  %v370 = vpop.f32.mrb[0].mxu0
  %v371 = vpop.f32.mrb[0].mxu0
  %v372 = vpop.f32.mrb[0].mxu0
  %373 = vdwg.mxu0
  %374 = vst [vmem:[%s3] sm:$0xff] %v369
  // Predicated region
  $region14: #{dqn_forward.7} parent=0 // pred_check
    _
  $region15: #{dqn_forward.7} parent=0 // pred_check_branch
    %376 = sbr.rel (0) target = $region17
  $region16: #{dqn_forward.7} parent=0 // pred_region
    _
  $region17: #{dqn_forward.7} parent=0 // pred_fallthru
    _
  // Predicated region
  $region18: #{dqn_forward.7} parent=0 // pred_check
    _
  $region19: #{dqn_forward.7} parent=0 // pred_check_branch
    %378 = sbr.rel (0) target = $region21
  $region20: #{dqn_forward.7} parent=0 // pred_region
    _
  $region21: #{dqn_forward.7} parent=0 // pred_fallthru
    _

// kernel: dqn_forward.6
$region0: #{dqn_forward.6}
  #allocation0 [shape = 'u32[]', space=smem, size = 0x4, offset = 0x4, fixed_abs, tag = 'smem constant byte address 0x4 - core index']
  #allocation1 [shape = 'u32[144,128]{1,0:T(1,128)}', space=vmem, size = 0x12000, scoped, tag = 'internal scratch']
  #allocation2 [shape = 'f32[1,128]{1,0:T(1,128)}', space=vmem, size = 0x200, scoped, tag = 'scratch operand']
  #allocation3 [shape = 'f32[1,128]{1,0:T(1,128)}', space=vmem, size = 0x200, scoped, tag = 'scratch operand']
  #allocation4 [shape = 'f32[1,128]{1,0:T(1,128)}', space=vmem, size = 0x200, scoped, tag = 'scratch operand']
  #allocation5 [shape = 'f32[1,128]{1,0:T(1,128)}', space=vmem, size = 0x200, scoped, tag = 'scratch operand']
  %s0 = inlined_call_operand.vmem [shape: bf16[16,288], index: 0, kind: input, shape index: {}]
  %s1 = inlined_call_operand.vmem [shape: bf16[288,128], index: 1, kind: input, shape index: {}]
  %s2 = inlined_call_operand.vmem [shape: f32[1,128], index: 2, kind: input, shape index: {}]
  %s3 = inlined_call_operand.vmem [shape: f32[1,128], index: 3, kind: input, shape index: {}]
  %s4 = inlined_call_operand.vmem [shape: bf16[16,128], index: 4, kind: output, shape index: {}]
  %s5 = sld [smem:[#allocation0]]
  $region65: #{dqn_forward.6} parent=0
    _
  %s7 = ssub.s32 1, %s5
  %s8 = scalar_select 0, %s7, %s5
  loop: start=0, step=1, limit=4
  $region2: #{dqn_forward.6} parent=0 // loop_pre_header
    _
  $region3: #{dqn_forward.6} parent=0 // loop_header
    %s10 = sphi 0, %s14
    %p11 = scmp.ge.s32.totalorder %s10, 4
    %s17 = sphi 0, %s29
    %s18 = sphi 0, %s25
    %s19 = sphi 0, %s17
    %s20 = sphi 0, %s18
    %s21 = sphi 0, %s19
    %s22 = sphi 0, %s20
    %s32 = sphi 0, %s34
    %s35 = sphi 0, %s32
    %s36 = sphi 0, %s35
    %s52 = sphi 0, %s36
    %s56 = sphi 0, %s56
    %s58 = sphi 0, %s56
    %s59 = sphi 0, %s58
    %s73 = sphi 0, %s59
    %s77 = sphi 0, %s77
    %s79 = sphi 0, %s77
    %s80 = sphi 0, %s79
    %s94 = sphi 0, %s80
    %s98 = sphi 0, %s98
    %s100 = sphi 0, %s98
    %s101 = sphi 0, %s100
    %s115 = sphi 0, %s101
    %s123 = sphi 0, %s125
    %s126 = sphi 0, %s123
    %s127 = sphi 0, %s126
    %s143 = sphi 0, %s127
  $region4: #{dqn_forward.6} parent=0 // loop_header_branch
    %13 = sbr.rel (%p11) target = $region8
  $region5: #{dqn_forward.6} parent=0 // loop_body
    %s15 = ssub.s32 %s10, 1
    %s16 = ssub.s32 %s10, 2
    %s23 = sadd.s32 1, %s18
    %p24 = scmp.ge.s32.totalorder %s23, 1
    %s25 = scalar_select %p24, 0, %s23
    %s26 = sadd.s32 1, %s17
    %s27 = scalar_select %p24, %s26, %s17
    %p28 = scmp.ge.s32.totalorder %s27, 2
    %s29 = scalar_select %p28, 0, %s27
    %s30 = ssub.s32 %s18, %s25
    %p31 = scmp.eq.s32.totalorder %s30, 0
    %s33 = sadd.s32 %s32, 1
    %s34 = scalar_select %p31, %s32, %s33
    %p37 = pneg %p31
    %p38 = scmp.eq.s32.totalorder %s10, 1
    %p39 = por %p37, %p38
    %p40 = scmp.ne.s32.totalorder %s32, %s35
    %p41 = scmp.eq.s32.totalorder %s10, 0
    %p42 = por %p40, %p41
    %p43 = scmp.ne.s32.totalorder %s32, %s35
    %p44 = scmp.eq.s32.totalorder %s15, 1
    %p45 = por %p43, %p44
    %p46 = scmp.ne.s32.totalorder %s35, %s36
    %p47 = scmp.eq.s32.totalorder %s15, 0
    %p48 = por %p46, %p47
    %p49 = scmp.ne.s32.totalorder %s35, %s36
    %p50 = scmp.eq.s32.totalorder %s16, 1
    %p51 = por %p49, %p50
    %p53 = scmp.ne.s32.totalorder %s36, %s52
    %p54 = scmp.eq.s32.totalorder %s16, 0
    %p55 = por %p53, %p54
    %s57 = sadd.s32 %s56, 1
    %p60 = scmp.eq.s32.totalorder %s10, 1
    %p61 = scmp.ne.s32.totalorder %s56, %s58
    %p62 = scmp.eq.s32.totalorder %s10, 0
    %p63 = por %p61, %p62
    %p64 = scmp.ne.s32.totalorder %s56, %s58
    %p65 = scmp.eq.s32.totalorder %s15, 1
    %p66 = por %p64, %p65
    %p67 = scmp.ne.s32.totalorder %s58, %s59
    %p68 = scmp.eq.s32.totalorder %s15, 0
    %p69 = por %p67, %p68
    %p70 = scmp.ne.s32.totalorder %s58, %s59
    %p71 = scmp.eq.s32.totalorder %s16, 1
    %p72 = por %p70, %p71
    %p74 = scmp.ne.s32.totalorder %s59, %s73
    %p75 = scmp.eq.s32.totalorder %s16, 0
    %p76 = por %p74, %p75
    %s78 = sadd.s32 %s77, 1
    %p81 = scmp.eq.s32.totalorder %s10, 1
    %p82 = scmp.ne.s32.totalorder %s77, %s79
    %p83 = scmp.eq.s32.totalorder %s10, 0
    %p84 = por %p82, %p83
    %p85 = scmp.ne.s32.totalorder %s77, %s79
    %p86 = scmp.eq.s32.totalorder %s15, 1
    %p87 = por %p85, %p86
    %p88 = scmp.ne.s32.totalorder %s79, %s80
    %p89 = scmp.eq.s32.totalorder %s15, 0
    %p90 = por %p88, %p89
    %p91 = scmp.ne.s32.totalorder %s79, %s80
    %p92 = scmp.eq.s32.totalorder %s16, 1
    %p93 = por %p91, %p92
    %p95 = scmp.ne.s32.totalorder %s80, %s94
    %p96 = scmp.eq.s32.totalorder %s16, 0
    %p97 = por %p95, %p96
    %s99 = sadd.s32 %s98, 1
    %p102 = scmp.eq.s32.totalorder %s10, 1
    %p103 = scmp.ne.s32.totalorder %s98, %s100
    %p104 = scmp.eq.s32.totalorder %s10, 0
    %p105 = por %p103, %p104
    %p106 = scmp.ne.s32.totalorder %s98, %s100
    %p107 = scmp.eq.s32.totalorder %s15, 1
    %p108 = por %p106, %p107
    %p109 = scmp.ne.s32.totalorder %s100, %s101
    %p110 = scmp.eq.s32.totalorder %s15, 0
    %p111 = por %p109, %p110
    %p112 = scmp.ne.s32.totalorder %s100, %s101
    %p113 = scmp.eq.s32.totalorder %s16, 1
    %p114 = por %p112, %p113
    %p116 = scmp.ne.s32.totalorder %s101, %s115
    %p117 = scmp.eq.s32.totalorder %s16, 0
    %p118 = por %p116, %p117
    %s119 = smul.u32 %s18, %s17
    %s120 = smul.u32 %s25, %s29
    %s121 = ssub.s32 %s119, %s120
    %p122 = scmp.eq.s32.totalorder %s121, 0
    %s124 = sadd.s32 %s123, 1
    %s125 = scalar_select %p122, %s123, %s124
    %p128 = pneg %p122
    %p129 = scmp.eq.s32.totalorder %s10, 1
    %p130 = por %p128, %p129
    %p131 = scmp.ne.s32.totalorder %s123, %s126
    %p132 = scmp.eq.s32.totalorder %s10, 0
    %p133 = por %p131, %p132
    %p134 = scmp.ne.s32.totalorder %s123, %s126
    %p135 = scmp.eq.s32.totalorder %s15, 1
    %p136 = por %p134, %p135
    %p137 = scmp.ne.s32.totalorder %s126, %s127
    %p138 = scmp.eq.s32.totalorder %s15, 0
    %p139 = por %p137, %p138
    %p140 = scmp.ne.s32.totalorder %s126, %s127
    %p141 = scmp.eq.s32.totalorder %s16, 1
    %p142 = por %p140, %p141
    %p144 = scmp.ne.s32.totalorder %s127, %s143
    %p145 = scmp.eq.s32.totalorder %s16, 0
    %p146 = por %p144, %p145
    %p147 = scmp.le.s32.totalorder 1, %s10
    %p148 = scmp.lt.s32.totalorder %s10, 3
    %p149 = pnand %p147, %p148
    %p150 = pneg %p149
    // Predicated region
    $region9: #{dqn_forward.6} parent=5 // pred_check
      _
    $region10: #{dqn_forward.6} parent=5 // pred_check_branch
      %152 = sbr.rel (%p149) target = $region12
    $region11: #{dqn_forward.6} parent=5 // pred_region
      %s153 = ssub.s32 %s10, 1
      // Predicated region
      $region13: #{dqn_forward.6} parent=11 // pred_check
        %p154 = pneg %p48
      $region14: #{dqn_forward.6} parent=11 // pred_check_branch
        %156 = sbr.rel (%p154) target = $region16
      $region15: #{dqn_forward.6} parent=11 // pred_region
        %s157 = smul.u32 2, %s20
        %p158 = scmp.lt.s32.totalorder %s157, 1
        %s159 = scalar_select %p158, %s157, 1
        %s160 = smul.addr %s159, 3
        %s161 = smul.addr %s160, 4
        %s162 = scalar_lea.vmem %s0, %s161
        %s163 = smul.u32 2, %s20
      $region16: #{dqn_forward.6} parent=11 // pred_fallthru
        _
      // Predicated region
      $region17: #{dqn_forward.6} parent=11 // pred_check
        %p164 = pneg %p69
      $region18: #{dqn_forward.6} parent=11 // pred_check_branch
        %166 = sbr.rel (%p164) target = $region20
      $region19: #{dqn_forward.6} parent=11 // pred_region
        _
      $region20: #{dqn_forward.6} parent=11 // pred_fallthru
        _
      // Predicated region
      $region21: #{dqn_forward.6} parent=11 // pred_check
        %p167 = pneg %p90
      $region22: #{dqn_forward.6} parent=11 // pred_check_branch
        %169 = sbr.rel (%p167) target = $region24
      $region23: #{dqn_forward.6} parent=11 // pred_region
        _
      $region24: #{dqn_forward.6} parent=11 // pred_fallthru
        _
      // Predicated region
      $region25: #{dqn_forward.6} parent=11 // pred_check
        %p170 = pneg %p111
      $region26: #{dqn_forward.6} parent=11 // pred_check_branch
        %172 = sbr.rel (%p170) target = $region28
      $region27: #{dqn_forward.6} parent=11 // pred_region
        _
      $region28: #{dqn_forward.6} parent=11 // pred_fallthru
        _
    $region12: #{dqn_forward.6} parent=5 // pred_fallthru
      _
    %p173 = scmp.lt.s32.totalorder %s10, 2
    // Predicated region
    $region29: #{dqn_forward.6} parent=5 // pred_check
      %p174 = pneg %p173
    $region30: #{dqn_forward.6} parent=5 // pred_check_branch
      %176 = sbr.rel (%p174) target = $region32
    $region31: #{dqn_forward.6} parent=5 // pred_region
      _
    $region32: #{dqn_forward.6} parent=5 // pred_fallthru
      _
    %p177 = scmp.le.s32.totalorder 1, %s10
    %p178 = scmp.lt.s32.totalorder %s10, 3
    %p179 = pnand %p177, %p178
    %p180 = pneg %p179
    // Predicated region
    $region33: #{dqn_forward.6} parent=5 // pred_check
      _
    $region34: #{dqn_forward.6} parent=5 // pred_check_branch
      %182 = sbr.rel (%p179) target = $region36
    $region35: #{dqn_forward.6} parent=5 // pred_region
      %s183 = ssub.s32 %s10, 1
      %s184 = smul.u32 2, %s20
      %p185 = scmp.lt.s32.totalorder %s184, 1
      %s186 = scalar_select %p185, %s184, 1
      %s187 = smul.addr %s186, 3
      %s188 = smul.addr %s187, 4
      %s189 = scalar_lea.vmem %s0, %s188
      %p190 = pneg %p48
      %p191 = pneg %p45
      %p192 = pneg %p69
      %p193 = pneg %p66
      %p194 = pneg %p90
      %p195 = pneg %p87
      %p196 = pneg %p111
      %p197 = pneg %p108
      %p198 = pneg %p139
      %p199 = pneg %p136
      %s200 = smul.u32 %s20, %s19
      %s201 = smul.u32 2, %s200
      %p202 = scmp.lt.s32.totalorder %s201, 1
      %s203 = scalar_select %p202, %s201, 1
      %s204 = smul.addr %s203, 4
      %s205 = scalar_lea.vmem %s4, %s204
      %s206 = smul.u32 2, %s20
      %p207 = scmp.lt.s32.totalorder %s206, 1
      %s208 = scalar_select %p207, %s206, 1
      %s209 = smul.addr %s208, 3
      %s210 = smul.addr %s209, 4
      %s211 = scalar_lea.vmem %s0, %s210
      %s212 = smul.u32 2, %s20
      %s213 = smul.u32 %s20, %s19
      %s214 = smul.u32 2, %s213
      %p215 = scmp.lt.s32.totalorder %s214, 1
      %s216 = scalar_select %p215, %s214, 1
      %s217 = smul.addr %s216, 4
      %s218 = scalar_lea.vmem %s4, %s217
      %s219 = smul.u32 %s20, %s19
      %s220 = smul.u32 2, %s219
      %v222 = vld [vmem:[%s211] sm:$0xff]
      %v223 = vld [vmem:[%s211 + $0x8] sm:$0xf]
      %v224 = vld [vmem:[%s211 + $0xc] sm:$0xff]
      %v225 = vld [vmem:[%s211 + $0x14] sm:$0xf]
      %v226 = vld [vmem:[%s1] sm:$0xf]
      %v227 = vld [vmem:[%s1 + $0x4] sm:$0xf]
      %v228 = vld [vmem:[%s1 + $0x8] sm:$0xf]
      %v229 = vld [vmem:[%s1 + $0xc] sm:$0xf]
      %v230 = vld [vmem:[%s1 + $0x10] sm:$0xf]
      %v231 = vld [vmem:[%s1 + $0x14] sm:$0xf]
      %v232 = vld [vmem:[%s1 + $0x18] sm:$0xf]
      %v233 = vld [vmem:[%s1 + $0x1c] sm:$0xf]
      %v234 = vld [vmem:[%s1 + $0x20] sm:$0xf]
      %v235 = vld [vmem:[%s1 + $0x24] sm:$0xf]
      %v236 = vld [vmem:[%s1 + $0x28] sm:$0xf]
      %v237 = vld [vmem:[%s1 + $0x2c] sm:$0xf]
      %v238 = vld [vmem:[%s1 + $0x30] sm:$0xf]
      %v239 = vld [vmem:[%s1 + $0x34] sm:$0xf]
      %v240 = vld [vmem:[%s1 + $0x38] sm:$0xf]
      %v241 = vld [vmem:[%s1 + $0x3c] sm:$0xf]
      %v242 = vld [vmem:[%s1 + $0x40] sm:$0xf]
      %v243 = vld [vmem:[%s1 + $0x44] sm:$0xf]
      %v244 = vld [vmem:[%s1 + $0x48] sm:$0xf]
      %v245 = vld [vmem:[%s1 + $0x4c] sm:$0xf]
      %v246 = vld [vmem:[%s1 + $0x50] sm:$0xf]
      %v247 = vld [vmem:[%s1 + $0x54] sm:$0xf]
      %v248 = vld [vmem:[%s1 + $0x58] sm:$0xf]
      %v249 = vld [vmem:[%s1 + $0x5c] sm:$0xf]
      %v250 = vld [vmem:[%s1 + $0x60] sm:$0xf]
      %v251 = vld [vmem:[%s1 + $0x64] sm:$0xf]
      %v252 = vld [vmem:[%s1 + $0x68] sm:$0xf]
      %v253 = vld [vmem:[%s1 + $0x6c] sm:$0xf]
      %v254 = vld [vmem:[%s1 + $0x70] sm:$0xf]
      %v255 = vld [vmem:[%s1 + $0x74] sm:$0xf]
      %v256 = vld [vmem:[%s1 + $0x78] sm:$0xf]
      %v257 = vld [vmem:[%s1 + $0x7c] sm:$0xf]
      %v258 = vld [vmem:[%s1 + $0x80] sm:$0xf]
      %v259 = vld [vmem:[%s1 + $0x84] sm:$0xf]
      %v260 = vld [vmem:[%s1 + $0x88] sm:$0xf]
      %v261 = vld [vmem:[%s1 + $0x8c] sm:$0xf]
      %v266 = vunpack.c.l.b16 %v222
      %v267 = vunpack.c.h.b16 %v222
      %v268 = vunpack.c.l.b16 %v223
      %v269 = vunpack.c.l.b16 %v224
      %v270 = vunpack.c.h.b16 %v224
      %v271 = vunpack.c.l.b16 %v225
      %v272 = vpack.c.b16 %v269, %v266
      %v273 = vpack.c.b16 %v270, %v267
      %v274 = vpack.c.b16 %v271, %v268
      %v313 = vunpack.c.l.b16 %v226
      %v314 = vunpack.c.l.b16 %v227
      %v315 = vunpack.c.l.b16 %v228
      %v316 = vunpack.c.l.b16 %v229
      %v317 = vunpack.c.l.b16 %v230
      %v318 = vunpack.c.l.b16 %v231
      %v319 = vunpack.c.l.b16 %v232
      %v320 = vunpack.c.l.b16 %v233
      %v321 = vunpack.c.l.b16 %v234
      %v322 = vunpack.c.l.b16 %v235
      %v323 = vunpack.c.l.b16 %v236
      %v324 = vunpack.c.l.b16 %v237
      %v325 = vunpack.c.l.b16 %v238
      %v326 = vunpack.c.l.b16 %v239
      %v327 = vunpack.c.l.b16 %v240
      %v328 = vunpack.c.l.b16 %v241
      %v329 = vunpack.c.l.b16 %v242
      %v330 = vunpack.c.l.b16 %v243
      %v331 = vunpack.c.l.b16 %v244
      %v332 = vunpack.c.l.b16 %v245
      %v333 = vunpack.c.l.b16 %v246
      %v334 = vunpack.c.l.b16 %v247
      %v335 = vunpack.c.l.b16 %v248
      %v336 = vunpack.c.l.b16 %v249
      %v337 = vunpack.c.l.b16 %v250
      %v338 = vunpack.c.l.b16 %v251
      %v339 = vunpack.c.l.b16 %v252
      %v340 = vunpack.c.l.b16 %v253
      %v341 = vunpack.c.l.b16 %v254
      %v342 = vunpack.c.l.b16 %v255
      %v343 = vunpack.c.l.b16 %v256
      %v344 = vunpack.c.l.b16 %v257
      %v345 = vunpack.c.l.b16 %v258
      %v346 = vunpack.c.l.b16 %v259
      %v347 = vunpack.c.l.b16 %v260
      %v348 = vunpack.c.l.b16 %v261
      %v349 = vpack.c.b16 %v314, %v313
      %v350 = vpack.c.b16 %v316, %v315
      %v351 = vpack.c.b16 %v318, %v317
      %v352 = vpack.c.b16 %v320, %v319
      %v353 = vpack.c.b16 %v322, %v321
      %v354 = vpack.c.b16 %v324, %v323
      %v355 = vpack.c.b16 %v326, %v325
      %v356 = vpack.c.b16 %v328, %v327
      %v357 = vpack.c.b16 %v330, %v329
      %v358 = vpack.c.b16 %v332, %v331
      %v359 = vpack.c.b16 %v334, %v333
      %v360 = vpack.c.b16 %v336, %v335
      %v361 = vpack.c.b16 %v338, %v337
      %v362 = vpack.c.b16 %v340, %v339
      %v363 = vpack.c.b16 %v342, %v341
      %v364 = vpack.c.b16 %v344, %v343
      %v365 = vpack.c.b16 %v346, %v345
      %v366 = vpack.c.b16 %v348, %v347
      %vm385 = vcmask 261120
      %v387 = vsel %vm385, %v274, 0
      %389 = vmatprep.subr.bf16.mxu0 0
      %390 = vmatpush1.bf16.msra.mxu0 %v349
      %391 = vmatprep.subr.bf16.mxu0 0
      %392 = vmatpush1.bf16.msra.mxu0 %v350
      %393 = vmatprep.subr.bf16.mxu0 0
      %394 = vmatpush1.bf16.msra.mxu0 %v351
      %395 = vmatprep.subr.bf16.mxu0 0
      %396 = vmatpush1.bf16.msra.mxu0 %v352
      %397 = vmatprep.subr.bf16.mxu0 0
      %398 = vmatpush1.bf16.msra.mxu0 %v353
      %399 = vmatprep.subr.bf16.mxu0 0
      %400 = vmatpush1.bf16.msra.mxu0 %v354
      %401 = vmatprep.subr.bf16.mxu0 0
      %402 = vmatpush1.bf16.msra.mxu0 %v355
      %403 = vmatprep.subr.bf16.mxu0 0
      %404 = vmatpush1.bf16.msra.mxu0 %v356
      %405 = vmatprep.subr.bf16.mxu0 0
      %406 = vmatpush1.bf16.msra.mxu0 %v357
      %407 = vmatprep.subr.bf16.mxu0 0
      %408 = vmatpush1.bf16.msra.mxu0 %v358
      %409 = vmatprep.subr.bf16.mxu0 0
      %410 = vmatpush1.bf16.msra.mxu0 %v359
      %411 = vmatprep.subr.bf16.mxu0 0
      %412 = vmatpush1.bf16.msra.mxu0 %v360
      %413 = vmatprep.subr.bf16.mxu0 0
      %414 = vmatpush1.bf16.msra.mxu0 %v361
      %415 = vmatprep.subr.bf16.mxu0 0
      %416 = vmatpush1.bf16.msra.mxu0 %v362
      %417 = vmatprep.subr.bf16.mxu0 0
      %418 = vmatpush1.bf16.msra.mxu0 %v363
      %419 = vmatprep.subr.bf16.mxu0 0
      %420 = vmatpush1.bf16.msra.mxu0 %v364
      %421 = vmatprep.mubr.bf16.mxu0 %v273
      %422 = vmatmul.mubr.bf16.gmra.mrb[0].mxu0 %v272
      %v423 = vpop.f32.mrb[0].mxu0
      %v424 = vadd.f32 0.0, %v423
      %v425 = vpop.f32.mrb[0].mxu0
      %v426 = vpop.f32.mrb[0].mxu0
      %v427 = vadd.f32 0.0, %v426
      %v428 = vpop.f32.mrb[0].mxu0
      %429 = vdwg.mxu0
      %430 = vmatprep.subr.bf16.mxu0 0
      %431 = vmatpush1.bf16.msra.mxu0 %v365
      %432 = vmatprep.subr.bf16.mxu0 0
      %433 = vmatpush1.bf16.msra.mxu0 %v366
      %434 = vmatprep.subr.bf16.mxu0 0
      %435 = vmatpush1.bf16.msra.mxu0 0
      %436 = vmatprep.subr.bf16.mxu0 0
      %437 = vmatpush1.bf16.msra.mxu0 0
      %438 = vmatprep.subr.bf16.mxu0 0
      %439 = vmatpush1.bf16.msra.mxu0 0
      %440 = vmatprep.subr.bf16.mxu0 0
      %441 = vmatpush1.bf16.msra.mxu0 0
      %442 = vmatprep.subr.bf16.mxu0 0
      %443 = vmatpush1.bf16.msra.mxu0 0
      %444 = vmatprep.subr.bf16.mxu0 0
      %445 = vmatpush1.bf16.msra.mxu0 0
      %446 = vmatprep.subr.bf16.mxu0 0
      %447 = vmatpush1.bf16.msra.mxu0 0
      %448 = vmatprep.subr.bf16.mxu0 0
      %449 = vmatpush1.bf16.msra.mxu0 0
      %450 = vmatprep.subr.bf16.mxu0 0
      %451 = vmatpush1.bf16.msra.mxu0 0
      %452 = vmatprep.subr.bf16.mxu0 0
      %453 = vmatpush1.bf16.msra.mxu0 0
      %454 = vmatprep.subr.bf16.mxu0 0
      %455 = vmatpush1.bf16.msra.mxu0 0
      %456 = vmatprep.subr.bf16.mxu0 0
      %457 = vmatpush1.bf16.msra.mxu0 0
      %458 = vmatprep.subr.bf16.mxu0 0
      %459 = vmatpush1.bf16.msra.mxu0 0
      %460 = vmatprep.subr.bf16.mxu0 0
      %461 = vmatpush1.bf16.msra.mxu0 0
      %462 = vmatprep.mubr.bf16.mxu0 0
      %463 = vmatmul.mubr.bf16.gmra.mrb[0].mxu0 %v387
      %v464 = vpop.f32.mrb[0].mxu0
      %v465 = vadd.f32 %v424, %v464
      %v466 = vpop.f32.mrb[0].mxu0
      %v467 = vpop.f32.mrb[0].mxu0
      %v468 = vadd.f32 %v427, %v467
      %v469 = vpop.f32.mrb[0].mxu0
      %470 = vdwg.mxu0
      %p471 = scmp.eq.s32.totalorder %s19, 0
      %p472 = scmp.eq.s32.totalorder %s20, 0
      %p473 = pnand %p471, %p472
      %p474 = pneg %p473
      // Predicated region
      $region37: #{dqn_forward.6} parent=35 // pred_check
        _
      $region38: #{dqn_forward.6} parent=35 // pred_check_branch
        %476 = sbr.rel (%p473) target = $region40
      $region39: #{dqn_forward.6} parent=35 // pred_region
        %477 = vst [vmem:[#allocation2] sm:$0x1] 0.0
        %478 = vst [vmem:[#allocation3] sm:$0x1] 0.0
      $region40: #{dqn_forward.6} parent=35 // pred_fallthru
        _
      // Predicated region
      $region41: #{dqn_forward.6} parent=35 // pred_check
        %p479 = pneg %p471
      $region42: #{dqn_forward.6} parent=35 // pred_check_branch
        %481 = sbr.rel (%p479) target = $region44
      $region43: #{dqn_forward.6} parent=35 // pred_region
        %v482 = vld [vmem:[#allocation2] sm:$0x1]
        %v483 = vadd.f32 %v465, %v468
        %v484 = vrot.slane %v483, 4
        %v485 = vadd.f32 %v483, %v484
        %v486 = vrot.slane %v485, 2
        %v487 = vadd.f32 %v485, %v486
        %v488 = vrot.slane %v487, 1
        %v489 = vadd.f32 %v487, %v488
        %v490 = vadd.f32 %v482, %v489
        %491 = vst [vmem:[#allocation2] sm:$0x1] %v490
        %v492 = vld [vmem:[#allocation3] sm:$0x1]
        %v493 = vmul.f32 %v465, %v465
        %v494 = vmul.f32 %v468, %v468
        %v495 = vadd.f32 %v493, %v494
        %v496 = vrot.slane %v495, 4
        %v497 = vadd.f32 %v495, %v496
        %v498 = vrot.slane %v497, 2
        %v499 = vadd.f32 %v497, %v498
        %v500 = vrot.slane %v499, 1
        %v501 = vadd.f32 %v499, %v500
        %v502 = vadd.f32 %v492, %v501
        %503 = vst [vmem:[#allocation3] sm:$0x1] %v502
      $region44: #{dqn_forward.6} parent=35 // pred_fallthru
        _
      %p504 = scmp.eq.s32.totalorder %s19, 1
      %p505 = pnand %p504, %p472
      %p506 = pneg %p505
      // Predicated region
      $region45: #{dqn_forward.6} parent=35 // pred_check
        _
      $region46: #{dqn_forward.6} parent=35 // pred_check_branch
        %508 = sbr.rel (%p505) target = $region48
      $region47: #{dqn_forward.6} parent=35 // pred_region
        %v509 = vld [vmem:[#allocation2] sm:$0x1]
        %v510 = vmul.f32 %v509, 0.125
        %v511 = vld [vmem:[#allocation3] sm:$0x1]
        %v512 = vmul.f32 %v511, 0.125
        %v513 = vmul.f32 %v510, %v510
        %v514 = vsub.f32 %v512, %v513
        %v515 = vmax.f32 %v514, 0.0
        %v516 = vld [vmem:[%s2] sm:$0x1]
        %v517 = vadd.f32 %v515, 1e-05
        %v518 = vrsqrt.pop %v517
        %v519 = vmul.f32 %v516, %v516
        %v520 = vmul.f32 %v519, %v515
        %v521 = vmul.f32 %v518, %v518
        %v522 = vmul.f32 %v520, %v521
        %v523 = vadd.f32 %v522, 1e-05
        %v524 = vrsqrt.pop %v523
        %v525 = vmul.f32 %v519, %v518
        %v526 = vmul.f32 %v525, %v524
        %527 = vst [vmem:[#allocation4] sm:$0x1] %v526
        %v528 = vld [vmem:[%s3] sm:$0x1]
        %v529 = vmul.f32 %v510, %v526
        %v530 = vsub.f32 %v528, %v529
        %531 = vst [vmem:[#allocation5] sm:$0x1] %v530
      $region48: #{dqn_forward.6} parent=35 // pred_fallthru
        _
      // Predicated region
      $region49: #{dqn_forward.6} parent=35 // pred_check
        %p532 = pneg %p504
      $region50: #{dqn_forward.6} parent=35 // pred_check_branch
        %534 = sbr.rel (%p532) target = $region52
      $region51: #{dqn_forward.6} parent=35 // pred_region
        %v535 = vld [vmem:[#allocation4] sm:$0x1]
        %v537 = vlaneseq
        %v538 = vshrl.u32 %v537, 7
        %v539 = vsub.s32 0, %v538
        %v540 = vrot.slane %v535, %v539
        %v542 = vmul.f32 %v465, %v540
        %v543 = vmul.f32 %v468, %v540
        %v544 = vld [vmem:[#allocation5] sm:$0x1]
        %v546 = vlaneseq
        %v547 = vshrl.u32 %v546, 7
        %v548 = vsub.s32 0, %v547
        %v549 = vrot.slane %v544, %v548
        %v551 = vadd.f32 %v542, %v549
        %v552 = vadd.f32 %v543, %v549
        %v553 = vmax.f32 %v551, 0.0
        %v554 = vmax.f32 %v552, 0.0
        %v555 = vpack.c.bf16 %v554, %v553
        %v557 = vunpack.c.l.b16 %v555
        %v558 = vunpack.c.h.b16 %v555
        %v559 = vpack.c.b16 %v557, %v557
        %v560 = vpack.c.b16 %v558, %v558
        %563 = vst [vmem:[%s218] sm:$0xf] %v559
        %564 = vst [vmem:[%s218 + $0x4] sm:$0xf] %v560
      $region52: #{dqn_forward.6} parent=35 // pred_fallthru
        _
      %s565 = smul.u32 %s20, %s19
      %s566 = smul.u32 2, %s565
      %p567 = scmp.lt.s32.totalorder %s566, 1
      %s568 = scalar_select %p567, %s566, 1
      %s569 = smul.addr %s568, 4
      %s570 = scalar_lea.vmem %s4, %s569
      // Predicated region
      $region53: #{dqn_forward.6} parent=35 // pred_check
        %p571 = pneg %p136
      $region54: #{dqn_forward.6} parent=35 // pred_check_branch
        %573 = sbr.rel (%p571) target = $region56
      $region55: #{dqn_forward.6} parent=35 // pred_region
        %s574 = smul.u32 %s20, %s19
        %s575 = smul.u32 2, %s574
      $region56: #{dqn_forward.6} parent=35 // pred_fallthru
        _
    $region36: #{dqn_forward.6} parent=5 // pred_fallthru
      _
    %p576 = scmp.le.s32.totalorder 2, %s10
    // Predicated region
    $region57: #{dqn_forward.6} parent=5 // pred_check
      %p577 = pneg %p576
    $region58: #{dqn_forward.6} parent=5 // pred_check_branch
      %579 = sbr.rel (%p577) target = $region60
    $region59: #{dqn_forward.6} parent=5 // pred_region
      %s580 = ssub.s32 %s10, 2
      // Predicated region
      $region61: #{dqn_forward.6} parent=59 // pred_check
        %p581 = pneg %p142
      $region62: #{dqn_forward.6} parent=59 // pred_check_branch
        %583 = sbr.rel (%p581) target = $region64
      $region63: #{dqn_forward.6} parent=59 // pred_region
        %s584 = smul.u32 %s22, %s21
        %s585 = smul.u32 2, %s584
        %p586 = scmp.lt.s32.totalorder %s585, 1
        %s587 = scalar_select %p586, %s585, 1
        %s588 = smul.addr %s587, 4
        %s589 = scalar_lea.vmem %s4, %s588
      $region64: #{dqn_forward.6} parent=59 // pred_fallthru
        _
    $region60: #{dqn_forward.6} parent=5 // pred_fallthru
      _
  $region6: #{dqn_forward.6} parent=0 // loop_footer
    %s14 = sadd.s32 1, %s10
  $region7: #{dqn_forward.6} parent=0 // loop_footer_branch
    %9 = sbr.rel target = $region3
  $region8: #{dqn_forward.6} parent=0 // loop_exit
    _

</llo_original>
